<compile_context>
chip_gen: v7x
topology: tpu7x:2x2x1
jax: 0.10.0
libtpu: 0.0.40
codegen_flags: <defaults>
</compile_context>

<pallas_src>
import functools
import math

import jax
import jax.numpy as jnp
from jax.experimental import pallas as pl
from jax.experimental.pallas import tpu as pltpu

MATMUL_DTYPE = jnp.bfloat16          # MXU operand dtype; set to jnp.float32 to disable bf16
_VMEM_LIMIT = 64 * 1024 * 1024       # explicit scoped VMEM cap (<= physical on v5e/v6e/v7x)


# ----------------------------------------------------------------------------
# small in-kernel helpers
# ----------------------------------------------------------------------------
def _mm(x, w):
    """MXU matmul: bf16 operands, f32 accumulation."""
    return jnp.dot(x.astype(MATMUL_DTYPE), w.astype(MATMUL_DTYPE),
                   preferred_element_type=jnp.float32)


def _elu1(x):
    """ELU(alpha=1) followed by +1 (UKT covariance positivity trick)."""
    return jnp.where(x > 0, x, jnp.exp(x) - 1.0) + 1.0


def _layernorm(z, g, b):
    mu = jnp.mean(z, axis=-1, keepdims=True)
    var = jnp.mean((z - mu) ** 2, axis=-1, keepdims=True)
    return (z - mu) * jax.lax.rsqrt(var + 1e-5) * g + b


# ----------------------------------------------------------------------------
# Single fused kernel: whole TransformerLayer4UKT for one batch row.
# ----------------------------------------------------------------------------
def _ukt_layer_kernel(gam_ref,
                      xqm_ref, xqc_ref, xkm_ref, xkc_ref, xvm_ref, xvc_ref,
                      wqkv_m_ref, bqkv_m_ref, wqkv_c_ref, bqkv_c_ref,
                      wo_m_ref, bo_m_ref, wo_c_ref, bo_c_ref,
                      ln1_g_ref, ln1_b_ref,
                      w1m_ref, b1m_ref, w2m_ref, b2m_ref,
                      w1c_ref, b1c_ref, w2c_ref, b2c_ref,
                      ln2_g_ref, ln2_b_ref,
                      out_m_ref, out_c_ref, *,
                      num_head, d_k, mask_int, zero_pad, apply_pos):
    f32 = jnp.float32
    x_qm = xqm_ref[0]                      # (S, D) residual / projection inputs
    x_qc = xqc_ref[0]
    x_km = xkm_ref[0]
    x_kc = xkc_ref[0]
    x_vm = xvm_ref[0]
    x_vc = xvc_ref[0]
    S = x_qm.shape[0]
    inv_sqrt_dk = 1.0 / math.sqrt(d_k)
    neg_inf = -1e32

    # ---- q/k/v projections: mean branch linear, cov branch ELU(linear)+1 ----
    q_m = _mm(x_qm, wqkv_m_ref[0]) + bqkv_m_ref[0]
    k_m = _mm(x_km, wqkv_m_ref[1]) + bqkv_m_ref[1]
    v_m = _mm(x_vm, wqkv_m_ref[2]) + bqkv_m_ref[2]
    q_c = _elu1(_mm(x_qc, wqkv_c_ref[0]) + bqkv_c_ref[0])
    k_c = _elu1(_mm(x_kc, wqkv_c_ref[1]) + bqkv_c_ref[1])
    v_c = _elu1(_mm(x_vc, wqkv_c_ref[2]) + bqkv_c_ref[2])

    # ---- grid-step tensors shared by all heads (pure iota, no HBM traffic) ----
    r_idx = jax.lax.broadcasted_iota(jnp.int32, (S, S), 0)
    c_idx = jax.lax.broadcasted_iota(jnp.int32, (S, S), 1)
    allowed = c_idx < r_idx + mask_int          # causal mask: col < row + mask
    mask_f = allowed.astype(f32)
    position_effect = jnp.abs(c_idx - r_idx).astype(f32)
    upper = (r_idx <= c_idx).astype(f32)        # cumsum-as-matmul matrix
    ones_col = jnp.ones((S, 1), f32)

    attn_m_parts = []
    attn_c_parts = []
    for h in range(num_head):
        lo = h * d_k
        qm = q_m[:, lo:lo + d_k]
        km = k_m[:, lo:lo + d_k]
        vm = v_m[:, lo:lo + d_k]
        qc = q_c[:, lo:lo + d_k]
        kc = k_c[:, lo:lo + d_k]
        vc = v_c[:, lo:lo + d_k]

        # W2^2 distance via ONE matmul of contraction depth 2*d_k + 2:
        #   dist[i,j] = qconst_i + kconst_j - 2*(qm_i.km_j + sqrt(qc_i).sqrt(kc_j))
        sq_qc = jnp.sqrt(jnp.maximum(qc, 1e-24))
        sq_kc = jnp.sqrt(jnp.maximum(kc, 1e-24))
        qconst = jnp.sum(qm * qm + qc, axis=-1, keepdims=True)     # (S, 1)
        kconst = jnp.sum(km * km + kc, axis=-1, keepdims=True)     # (S, 1)
        a_cat = jnp.concatenate([-2.0 * qm, -2.0 * sq_qc, qconst, ones_col], axis=-1)
        b_cat = jnp.concatenate([km, sq_kc, ones_col, kconst], axis=-1)
        dist = jax.lax.dot_general(a_cat, b_cat, (((1,), (1,)), ((), ())),
                                   preferred_element_type=f32)
        scores = -dist * inv_sqrt_dk

        # detached distance-decay prior (AKT/UKT "gamma" positional effect)
        s1 = jnp.where(allowed, scores, neg_inf)
        s1 = s1 - jnp.max(s1, axis=-1, keepdims=True)
        e1 = jnp.exp(s1)
        p1 = e1 * pl.reciprocal(jnp.sum(e1, axis=-1, keepdims=True), approx=True)
        p1 = p1 * mask_f
        distcum = jnp.dot(p1, upper, preferred_element_type=f32)
        disttotal = jnp.sum(p1, axis=-1, keepdims=True)
        dist_scores = jnp.sqrt(jnp.maximum((disttotal - distcum) * position_effect, 0.0))
        neg_gamma = gam_ref[h]                  # -softplus(gamma_h), SMEM scalar
        total_effect = jnp.clip(jnp.exp(dist_scores * neg_gamma), 1e-5, 1e5)

        # final attention
        scores = jnp.where(allowed, scores * total_effect, neg_inf)
        scores = scores - jnp.max(scores, axis=-1, keepdims=True)
        e2 = jnp.exp(scores)
        attn = e2 * pl.reciprocal(jnp.sum(e2, axis=-1, keepdims=True), approx=True)
        if zero_pad:                            # zero out the first query row
            attn = jnp.where(r_idx == 0, 0.0, attn)

        attn_m_parts.append(_mm(attn, vm))
        attn_c_parts.append(_mm(attn * attn, vc))

    # heads back to lane-dense (S, D) slabs (== transpose+view of the reference)
    attn_m = jnp.concatenate(attn_m_parts, axis=-1)
    attn_c = jnp.concatenate(attn_c_parts, axis=-1)

    # ---- output projection + residual + LayerNorm1 (both branches) ----
    g1 = ln1_g_ref[...]
    b1 = ln1_b_ref[...]
    q2m = _mm(attn_m, wo_m_ref[...]) + bo_m_ref[...]
    q2c = _mm(attn_c, wo_c_ref[...]) + bo_c_ref[...]
    y_m = _layernorm(x_qm + q2m, g1, b1)
    y_c = _layernorm(_elu1(x_qc + q2c), g1, b1)

    # ---- FFN + LayerNorm2 (original module discards the residual here) ----
    if apply_pos:
        g2 = ln2_g_ref[...]
        b2 = ln2_b_ref[...]
        hm = jnp.maximum(_mm(y_m, w1m_ref[...]) + b1m_ref[...], 0.0)
        f_m = _mm(hm, w2m_ref[...]) + b2m_ref[...]
        hc = jnp.maximum(_mm(y_c, w1c_ref[...]) + b1c_ref[...], 0.0)
        f_c = _mm(hc, w2c_ref[...]) + b2c_ref[...]
        y_m = _layernorm(f_m, g2, b2)
        y_c = _layernorm(_elu1(f_c), g2, b2)

    out_m_ref[0] = y_m
    out_c_ref[0] = y_c


# ----------------------------------------------------------------------------
# TransformerLayer4UKT forward (single pallas_call)
# ----------------------------------------------------------------------------
def transformer_layer_ukt(p, mask_int, q_mean, q_cov, k_mean, k_cov, v_mean, v_cov,
                          apply_pos=True, num_head=4):
    B, S, D = q_mean.shape
    F = p["Wm1"].shape[1]
    d_k = D // num_head
    zero_pad = (mask_int == 0)
    cast_w = lambda w: w.astype(MATMUL_DTYPE)

    # stacked q/k/v projection weights (one resident (3,D,D) slab per branch)
    w_mean = cast_w(jnp.stack([p["Wq_m"], p["Wk_m"], p["Wv_m"]]))       # (3, D, D)
    b_mean = jnp.stack([p["bq_m"], p["bk_m"], p["bv_m"]])[:, None, :]   # (3, 1, D)
    w_cov = cast_w(jnp.stack([p["Wq_c"], p["Wk_c"], p["Wv_c"]]))
    b_cov = jnp.stack([p["bq_c"], p["bk_c"], p["bv_c"]])[:, None, :]
    neg_gammas = -jax.nn.softplus(p["gammas"])                          # (H,)

    # BlockSpecs: batch-row blocks for activations, constant (resident) blocks for weights.
    x_spec = pl.BlockSpec((1, S, D), lambda b, g: (b, 0, 0))
    w3 = pl.BlockSpec((3, D, D), lambda b, g: (0, 0, 0))
    b3 = pl.BlockSpec((3, 1, D), lambda b, g: (0, 0, 0))
    wd = pl.BlockSpec((D, D), lambda b, g: (0, 0))
    vd = pl.BlockSpec((1, D), lambda b, g: (0, 0))
    w1 = pl.BlockSpec((D, F), lambda b, g: (0, 0))
    vf = pl.BlockSpec((1, F), lambda b, g: (0, 0))
    w2 = pl.BlockSpec((F, D), lambda b, g: (0, 0))

    grid_spec = pltpu.PrefetchScalarGridSpec(
        num_scalar_prefetch=1,
        grid=(B,),
        in_specs=[x_spec] * 6
                 + [w3, b3, w3, b3]            # qkv weights/biases (mean, cov)
                 + [wd, vd, wd, vd]            # output projections (mean, cov)
                 + [vd, vd]                    # layer_norm1 gain/bias
                 + [w1, vf, w2, vd,            # FFN mean branch
                    w1, vf, w2, vd]            # FFN cov branch
                 + [vd, vd],                   # layer_norm2 gain/bias
        out_specs=(x_spec, x_spec),
    )

    kernel = functools.partial(_ukt_layer_kernel, num_head=num_head, d_k=d_k,
                               mask_int=mask_int, zero_pad=zero_pad,
                               apply_pos=apply_pos)

    out_m, out_c = pl.pallas_call(
        kernel,
        grid_spec=grid_spec,
        out_shape=(jax.ShapeDtypeStruct((B, S, D), jnp.float32),
                   jax.ShapeDtypeStruct((B, S, D), jnp.float32)),
        compiler_params=pltpu.CompilerParams(
            dimension_semantics=("parallel",), vmem_limit_bytes=_VMEM_LIMIT),
    )(neg_gammas,
      q_mean, q_cov, k_mean, k_cov, v_mean, v_cov,
      w_mean, b_mean, w_cov, b_cov,
      cast_w(p["Wo_m"]), p["bo_m"].reshape(1, D),
      cast_w(p["Wo_c"]), p["bo_c"].reshape(1, D),
      p["ln1_g"].reshape(1, D), p["ln1_b"].reshape(1, D),
      cast_w(p["Wm1"]), p["bm1"].reshape(1, F),
      cast_w(p["Wm2"]), p["bm2"].reshape(1, D),
      cast_w(p["Wc1"]), p["bc1"].reshape(1, F),
      cast_w(p["Wc2"]), p["bc2"].reshape(1, D),
      p["ln2_g"].reshape(1, D), p["ln2_b"].reshape(1, D))
    return out_m, out_c


# ----------------------------------------------------------------------------
# Deterministic parameter construction
# ----------------------------------------------------------------------------
def init_params(key, dim_model, dim_ff, num_head):
    keys = jax.random.split(key, 16)

    def lin(k, fan_in, fan_out):
        kw, kb = jax.random.split(k)
        w = jax.random.normal(kw, (fan_in, fan_out), jnp.float32) / math.sqrt(fan_in)
        b = jax.random.normal(kb, (fan_out,), jnp.float32) * 0.01
        return w, b

    p = {}
    for idx, nm in enumerate(["q_m", "q_c", "k_m", "k_c", "v_m", "v_c", "o_m", "o_c"]):
        w, b = lin(keys[idx], dim_model, dim_model)
        p["W" + nm] = w
        p["b" + nm] = b
    p["Wm1"], p["bm1"] = lin(keys[8], dim_model, dim_ff)
    p["Wm2"], p["bm2"] = lin(keys[9], dim_ff, dim_model)
    p["Wc1"], p["bc1"] = lin(keys[10], dim_model, dim_ff)
    p["Wc2"], p["bc2"] = lin(keys[11], dim_ff, dim_model)
    p["ln1_g"] = jnp.ones((dim_model,), jnp.float32)
    p["ln1_b"] = jnp.zeros((dim_model,), jnp.float32)
    p["ln2_g"] = jnp.ones((dim_model,), jnp.float32)
    p["ln2_b"] = jnp.zeros((dim_model,), jnp.float32)
    p["gammas"] = jax.random.normal(keys[12], (num_head,), jnp.float32) * 0.1
    return p


if __name__ == "__main__":
    B, S, D, F, H = 2, 8, 32, 64, 4

    key = jax.random.PRNGKey(0)
    pkey, dkey = jax.random.split(key)
    params = init_params(pkey, D, F, H)

    ks = jax.random.split(dkey, 6)
    q_mean = jax.random.normal(ks[0], (B, S, D), jnp.float32)
    q_cov = jax.random.normal(ks[1], (B, S, D), jnp.float32)
    k_mean = jax.random.normal(ks[2], (B, S, D), jnp.float32)
    k_cov = jax.random.normal(ks[3], (B, S, D), jnp.float32)
    v_mean = jax.random.normal(ks[4], (B, S, D), jnp.float32)
    v_cov = jax.random.normal(ks[5], (B, S, D), jnp.float32)

    out_mean, out_cov = transformer_layer_ukt(
        params, 0, q_mean, q_cov, k_mean, k_cov, v_mean, v_cov,
        apply_pos=True, num_head=H)
    jax.block_until_ready((out_mean, out_cov))

    assert out_mean.shape == (B, S, D) and out_cov.shape == (B, S, D)
    assert bool(jnp.all(jnp.isfinite(out_mean))) and bool(jnp.all(jnp.isfinite(out_cov)))
    print("KERNEL_OK")
</pallas_src>

<mosaic_0001>
module attributes {stable_mosaic.version = 11 : i64} {
  func.func @_ukt_layer_kernel(%arg0: i32, %arg1: memref<4xf32, #tpu.memory_space<smem>>, %arg2: memref<1x8x32xf32, #tpu.memory_space<vmem>>, %arg3: memref<1x8x32xf32, #tpu.memory_space<vmem>>, %arg4: memref<1x8x32xf32, #tpu.memory_space<vmem>>, %arg5: memref<1x8x32xf32, #tpu.memory_space<vmem>>, %arg6: memref<1x8x32xf32, #tpu.memory_space<vmem>>, %arg7: memref<1x8x32xf32, #tpu.memory_space<vmem>>, %arg8: memref<3x32x32xbf16, #tpu.memory_space<vmem>>, %arg9: memref<3x1x32xf32, #tpu.memory_space<vmem>>, %arg10: memref<3x32x32xbf16, #tpu.memory_space<vmem>>, %arg11: memref<3x1x32xf32, #tpu.memory_space<vmem>>, %arg12: memref<32x32xbf16, #tpu.memory_space<vmem>>, %arg13: memref<1x32xf32, #tpu.memory_space<vmem>>, %arg14: memref<32x32xbf16, #tpu.memory_space<vmem>>, %arg15: memref<1x32xf32, #tpu.memory_space<vmem>>, %arg16: memref<1x32xf32, #tpu.memory_space<vmem>>, %arg17: memref<1x32xf32, #tpu.memory_space<vmem>>, %arg18: memref<32x64xbf16, #tpu.memory_space<vmem>>, %arg19: memref<1x64xf32, #tpu.memory_space<vmem>>, %arg20: memref<64x32xbf16, #tpu.memory_space<vmem>>, %arg21: memref<1x32xf32, #tpu.memory_space<vmem>>, %arg22: memref<32x64xbf16, #tpu.memory_space<vmem>>, %arg23: memref<1x64xf32, #tpu.memory_space<vmem>>, %arg24: memref<64x32xbf16, #tpu.memory_space<vmem>>, %arg25: memref<1x32xf32, #tpu.memory_space<vmem>>, %arg26: memref<1x32xf32, #tpu.memory_space<vmem>>, %arg27: memref<1x32xf32, #tpu.memory_space<vmem>>, %arg28: memref<1x8x32xf32, #tpu.memory_space<vmem>>, %arg29: memref<1x8x32xf32, #tpu.memory_space<vmem>>) attributes {dimension_semantics = [#tpu.dimension_semantics<parallel>], iteration_bounds = array<i64: 2>, scalar_prefetch = 1 : i64, scratch_operands = 0 : i64, tpu.core_type = #tpu.core_type<tc>, window_params = [{transform_indices = @transform_0, window_bounds = array<i64: 1, 8, 32>}, {transform_indices = @transform_1, window_bounds = array<i64: 1, 8, 32>}, {transform_indices = @transform_2, window_bounds = array<i64: 1, 8, 32>}, {transform_indices = @transform_3, window_bounds = array<i64: 1, 8, 32>}, {transform_indices = @transform_4, window_bounds = array<i64: 1, 8, 32>}, {transform_indices = @transform_5, window_bounds = array<i64: 1, 8, 32>}, {pipeline_mode = #tpu.pipeline_mode<synchronous>, transform_indices = @transform_6, window_bounds = array<i64: 3, 32, 32>}, {pipeline_mode = #tpu.pipeline_mode<synchronous>, transform_indices = @transform_7, window_bounds = array<i64: 3, 1, 32>}, {pipeline_mode = #tpu.pipeline_mode<synchronous>, transform_indices = @transform_8, window_bounds = array<i64: 3, 32, 32>}, {pipeline_mode = #tpu.pipeline_mode<synchronous>, transform_indices = @transform_9, window_bounds = array<i64: 3, 1, 32>}, {pipeline_mode = #tpu.pipeline_mode<synchronous>, transform_indices = @transform_10, window_bounds = array<i64: 32, 32>}, {pipeline_mode = #tpu.pipeline_mode<synchronous>, transform_indices = @transform_11, window_bounds = array<i64: 1, 32>}, {pipeline_mode = #tpu.pipeline_mode<synchronous>, transform_indices = @transform_12, window_bounds = array<i64: 32, 32>}, {pipeline_mode = #tpu.pipeline_mode<synchronous>, transform_indices = @transform_13, window_bounds = array<i64: 1, 32>}, {pipeline_mode = #tpu.pipeline_mode<synchronous>, transform_indices = @transform_14, window_bounds = array<i64: 1, 32>}, {pipeline_mode = #tpu.pipeline_mode<synchronous>, transform_indices = @transform_15, window_bounds = array<i64: 1, 32>}, {pipeline_mode = #tpu.pipeline_mode<synchronous>, transform_indices = @transform_16, window_bounds = array<i64: 32, 64>}, {pipeline_mode = #tpu.pipeline_mode<synchronous>, transform_indices = @transform_17, window_bounds = array<i64: 1, 64>}, {pipeline_mode = #tpu.pipeline_mode<synchronous>, transform_indices = @transform_18, window_bounds = array<i64: 64, 32>}, {pipeline_mode = #tpu.pipeline_mode<synchronous>, transform_indices = @transform_19, window_bounds = array<i64: 1, 32>}, {pipeline_mode = #tpu.pipeline_mode<synchronous>, transform_indices = @transform_20, window_bounds = array<i64: 32, 64>}, {pipeline_mode = #tpu.pipeline_mode<synchronous>, transform_indices = @transform_21, window_bounds = array<i64: 1, 64>}, {pipeline_mode = #tpu.pipeline_mode<synchronous>, transform_indices = @transform_22, window_bounds = array<i64: 64, 32>}, {pipeline_mode = #tpu.pipeline_mode<synchronous>, transform_indices = @transform_23, window_bounds = array<i64: 1, 32>}, {pipeline_mode = #tpu.pipeline_mode<synchronous>, transform_indices = @transform_24, window_bounds = array<i64: 1, 32>}, {pipeline_mode = #tpu.pipeline_mode<synchronous>, transform_indices = @transform_25, window_bounds = array<i64: 1, 32>}, {transform_indices = @transform_26, window_bounds = array<i64: 1, 8, 32>}, {transform_indices = @transform_27, window_bounds = array<i64: 1, 8, 32>}]} {
    %c0 = arith.constant 0 : index
    %c0_0 = arith.constant 0 : index
    %c0_1 = arith.constant 0 : index
    %0 = vector.load %arg2[%c0, %c0_0, %c0_1] : memref<1x8x32xf32, #tpu.memory_space<vmem>>, vector<1x8x32xf32>
    %1 = vector.shape_cast %0 : vector<1x8x32xf32> to vector<8x32xf32>
    %c0_2 = arith.constant 0 : index
    %c0_3 = arith.constant 0 : index
    %c0_4 = arith.constant 0 : index
    %2 = vector.load %arg3[%c0_2, %c0_3, %c0_4] : memref<1x8x32xf32, #tpu.memory_space<vmem>>, vector<1x8x32xf32>
    %3 = vector.shape_cast %2 : vector<1x8x32xf32> to vector<8x32xf32>
    %c0_5 = arith.constant 0 : index
    %c0_6 = arith.constant 0 : index
    %c0_7 = arith.constant 0 : index
    %4 = vector.load %arg4[%c0_5, %c0_6, %c0_7] : memref<1x8x32xf32, #tpu.memory_space<vmem>>, vector<1x8x32xf32>
    %5 = vector.shape_cast %4 : vector<1x8x32xf32> to vector<8x32xf32>
    %c0_8 = arith.constant 0 : index
    %c0_9 = arith.constant 0 : index
    %c0_10 = arith.constant 0 : index
    %6 = vector.load %arg5[%c0_8, %c0_9, %c0_10] : memref<1x8x32xf32, #tpu.memory_space<vmem>>, vector<1x8x32xf32>
    %7 = vector.shape_cast %6 : vector<1x8x32xf32> to vector<8x32xf32>
    %c0_11 = arith.constant 0 : index
    %c0_12 = arith.constant 0 : index
    %c0_13 = arith.constant 0 : index
    %8 = vector.load %arg6[%c0_11, %c0_12, %c0_13] : memref<1x8x32xf32, #tpu.memory_space<vmem>>, vector<1x8x32xf32>
    %9 = vector.shape_cast %8 : vector<1x8x32xf32> to vector<8x32xf32>
    %c0_14 = arith.constant 0 : index
    %c0_15 = arith.constant 0 : index
    %c0_16 = arith.constant 0 : index
    %10 = vector.load %arg7[%c0_14, %c0_15, %c0_16] : memref<1x8x32xf32, #tpu.memory_space<vmem>>, vector<1x8x32xf32>
    %11 = vector.shape_cast %10 : vector<1x8x32xf32> to vector<8x32xf32>
    %c0_17 = arith.constant 0 : index
    %c0_18 = arith.constant 0 : index
    %c0_19 = arith.constant 0 : index
    %12 = vector.load %arg8[%c0_17, %c0_18, %c0_19] : memref<3x32x32xbf16, #tpu.memory_space<vmem>>, vector<1x32x32xbf16>
    %13 = vector.shape_cast %12 : vector<1x32x32xbf16> to vector<32x32xbf16>
    %14 = arith.truncf %1 : vector<8x32xf32> to vector<8x32xbf16>
    %cst = arith.constant dense<0.000000e+00> : vector<8x32xf32>
    %15 = tpu.matmul %14, %13, %cst {dimension_numbers = #tpu.dot_dimension_numbers<[1], [0], [0], [1], [0, 0, 1, 1], [], []>} : vector<8x32xbf16>, vector<32x32xbf16>, vector<8x32xf32> -> vector<8x32xf32>
    %c0_20 = arith.constant 0 : index
    %c0_21 = arith.constant 0 : index
    %c0_22 = arith.constant 0 : index
    %16 = vector.load %arg9[%c0_20, %c0_21, %c0_22] : memref<3x1x32xf32, #tpu.memory_space<vmem>>, vector<1x1x32xf32>
    %17 = vector.shape_cast %16 : vector<1x1x32xf32> to vector<1x32xf32>
    %18 = vector.broadcast %17 : vector<1x32xf32> to vector<8x32xf32>
    %19 = arith.addf %15, %18 : vector<8x32xf32>
    %c1 = arith.constant 1 : index
    %c0_23 = arith.constant 0 : index
    %c0_24 = arith.constant 0 : index
    %20 = vector.load %arg8[%c1, %c0_23, %c0_24] : memref<3x32x32xbf16, #tpu.memory_space<vmem>>, vector<1x32x32xbf16>
    %21 = vector.shape_cast %20 : vector<1x32x32xbf16> to vector<32x32xbf16>
    %22 = arith.truncf %5 : vector<8x32xf32> to vector<8x32xbf16>
    %cst_25 = arith.constant dense<0.000000e+00> : vector<8x32xf32>
    %23 = tpu.matmul %22, %21, %cst_25 {dimension_numbers = #tpu.dot_dimension_numbers<[1], [0], [0], [1], [0, 0, 1, 1], [], []>} : vector<8x32xbf16>, vector<32x32xbf16>, vector<8x32xf32> -> vector<8x32xf32>
    %c1_26 = arith.constant 1 : index
    %c0_27 = arith.constant 0 : index
    %c0_28 = arith.constant 0 : index
    %24 = vector.load %arg9[%c1_26, %c0_27, %c0_28] : memref<3x1x32xf32, #tpu.memory_space<vmem>>, vector<1x1x32xf32>
    %25 = vector.shape_cast %24 : vector<1x1x32xf32> to vector<1x32xf32>
    %26 = vector.broadcast %25 : vector<1x32xf32> to vector<8x32xf32>
    %27 = arith.addf %23, %26 : vector<8x32xf32>
    %c2 = arith.constant 2 : index
    %c0_29 = arith.constant 0 : index
    %c0_30 = arith.constant 0 : index
    %28 = vector.load %arg8[%c2, %c0_29, %c0_30] : memref<3x32x32xbf16, #tpu.memory_space<vmem>>, vector<1x32x32xbf16>
    %29 = vector.shape_cast %28 : vector<1x32x32xbf16> to vector<32x32xbf16>
    %30 = arith.truncf %9 : vector<8x32xf32> to vector<8x32xbf16>
    %cst_31 = arith.constant dense<0.000000e+00> : vector<8x32xf32>
    %31 = tpu.matmul %30, %29, %cst_31 {dimension_numbers = #tpu.dot_dimension_numbers<[1], [0], [0], [1], [0, 0, 1, 1], [], []>} : vector<8x32xbf16>, vector<32x32xbf16>, vector<8x32xf32> -> vector<8x32xf32>
    %c2_32 = arith.constant 2 : index
    %c0_33 = arith.constant 0 : index
    %c0_34 = arith.constant 0 : index
    %32 = vector.load %arg9[%c2_32, %c0_33, %c0_34] : memref<3x1x32xf32, #tpu.memory_space<vmem>>, vector<1x1x32xf32>
    %33 = vector.shape_cast %32 : vector<1x1x32xf32> to vector<1x32xf32>
    %34 = vector.broadcast %33 : vector<1x32xf32> to vector<8x32xf32>
    %35 = arith.addf %31, %34 : vector<8x32xf32>
    %c0_35 = arith.constant 0 : index
    %c0_36 = arith.constant 0 : index
    %c0_37 = arith.constant 0 : index
    %36 = vector.load %arg10[%c0_35, %c0_36, %c0_37] : memref<3x32x32xbf16, #tpu.memory_space<vmem>>, vector<1x32x32xbf16>
    %37 = vector.shape_cast %36 : vector<1x32x32xbf16> to vector<32x32xbf16>
    %38 = arith.truncf %3 : vector<8x32xf32> to vector<8x32xbf16>
    %cst_38 = arith.constant dense<0.000000e+00> : vector<8x32xf32>
    %39 = tpu.matmul %38, %37, %cst_38 {dimension_numbers = #tpu.dot_dimension_numbers<[1], [0], [0], [1], [0, 0, 1, 1], [], []>} : vector<8x32xbf16>, vector<32x32xbf16>, vector<8x32xf32> -> vector<8x32xf32>
    %c0_39 = arith.constant 0 : index
    %c0_40 = arith.constant 0 : index
    %c0_41 = arith.constant 0 : index
    %40 = vector.load %arg11[%c0_39, %c0_40, %c0_41] : memref<3x1x32xf32, #tpu.memory_space<vmem>>, vector<1x1x32xf32>
    %41 = vector.shape_cast %40 : vector<1x1x32xf32> to vector<1x32xf32>
    %42 = vector.broadcast %41 : vector<1x32xf32> to vector<8x32xf32>
    %43 = arith.addf %39, %42 : vector<8x32xf32>
    %cst_42 = arith.constant 0.000000e+00 : f32
    %44 = vector.broadcast %cst_42 : f32 to vector<8x32xf32>
    %45 = arith.cmpf ogt, %43, %44 : vector<8x32xf32>
    %46 = math.exp %43 : vector<8x32xf32>
    %cst_43 = arith.constant 1.000000e+00 : f32
    %47 = vector.broadcast %cst_43 : f32 to vector<8x32xf32>
    %48 = arith.subf %46, %47 : vector<8x32xf32>
    %49 = arith.select %45, %43, %48 : vector<8x32xi1>, vector<8x32xf32>
    %cst_44 = arith.constant 1.000000e+00 : f32
    %50 = vector.broadcast %cst_44 : f32 to vector<8x32xf32>
    %51 = arith.addf %49, %50 : vector<8x32xf32>
    %c1_45 = arith.constant 1 : index
    %c0_46 = arith.constant 0 : index
    %c0_47 = arith.constant 0 : index
    %52 = vector.load %arg10[%c1_45, %c0_46, %c0_47] : memref<3x32x32xbf16, #tpu.memory_space<vmem>>, vector<1x32x32xbf16>
    %53 = vector.shape_cast %52 : vector<1x32x32xbf16> to vector<32x32xbf16>
    %54 = arith.truncf %7 : vector<8x32xf32> to vector<8x32xbf16>
    %cst_48 = arith.constant dense<0.000000e+00> : vector<8x32xf32>
    %55 = tpu.matmul %54, %53, %cst_48 {dimension_numbers = #tpu.dot_dimension_numbers<[1], [0], [0], [1], [0, 0, 1, 1], [], []>} : vector<8x32xbf16>, vector<32x32xbf16>, vector<8x32xf32> -> vector<8x32xf32>
    %c1_49 = arith.constant 1 : index
    %c0_50 = arith.constant 0 : index
    %c0_51 = arith.constant 0 : index
    %56 = vector.load %arg11[%c1_49, %c0_50, %c0_51] : memref<3x1x32xf32, #tpu.memory_space<vmem>>, vector<1x1x32xf32>
    %57 = vector.shape_cast %56 : vector<1x1x32xf32> to vector<1x32xf32>
    %58 = vector.broadcast %57 : vector<1x32xf32> to vector<8x32xf32>
    %59 = arith.addf %55, %58 : vector<8x32xf32>
    %cst_52 = arith.constant 0.000000e+00 : f32
    %60 = vector.broadcast %cst_52 : f32 to vector<8x32xf32>
    %61 = arith.cmpf ogt, %59, %60 : vector<8x32xf32>
    %62 = math.exp %59 : vector<8x32xf32>
    %cst_53 = arith.constant 1.000000e+00 : f32
    %63 = vector.broadcast %cst_53 : f32 to vector<8x32xf32>
    %64 = arith.subf %62, %63 : vector<8x32xf32>
    %65 = arith.select %61, %59, %64 : vector<8x32xi1>, vector<8x32xf32>
    %cst_54 = arith.constant 1.000000e+00 : f32
    %66 = vector.broadcast %cst_54 : f32 to vector<8x32xf32>
    %67 = arith.addf %65, %66 : vector<8x32xf32>
    %c2_55 = arith.constant 2 : index
    %c0_56 = arith.constant 0 : index
    %c0_57 = arith.constant 0 : index
    %68 = vector.load %arg10[%c2_55, %c0_56, %c0_57] : memref<3x32x32xbf16, #tpu.memory_space<vmem>>, vector<1x32x32xbf16>
    %69 = vector.shape_cast %68 : vector<1x32x32xbf16> to vector<32x32xbf16>
    %70 = arith.truncf %11 : vector<8x32xf32> to vector<8x32xbf16>
    %cst_58 = arith.constant dense<0.000000e+00> : vector<8x32xf32>
    %71 = tpu.matmul %70, %69, %cst_58 {dimension_numbers = #tpu.dot_dimension_numbers<[1], [0], [0], [1], [0, 0, 1, 1], [], []>} : vector<8x32xbf16>, vector<32x32xbf16>, vector<8x32xf32> -> vector<8x32xf32>
    %c2_59 = arith.constant 2 : index
    %c0_60 = arith.constant 0 : index
    %c0_61 = arith.constant 0 : index
    %72 = vector.load %arg11[%c2_59, %c0_60, %c0_61] : memref<3x1x32xf32, #tpu.memory_space<vmem>>, vector<1x1x32xf32>
    %73 = vector.shape_cast %72 : vector<1x1x32xf32> to vector<1x32xf32>
    %74 = vector.broadcast %73 : vector<1x32xf32> to vector<8x32xf32>
    %75 = arith.addf %71, %74 : vector<8x32xf32>
    %cst_62 = arith.constant 0.000000e+00 : f32
    %76 = vector.broadcast %cst_62 : f32 to vector<8x32xf32>
    %77 = arith.cmpf ogt, %75, %76 : vector<8x32xf32>
    %78 = math.exp %75 : vector<8x32xf32>
    %cst_63 = arith.constant 1.000000e+00 : f32
    %79 = vector.broadcast %cst_63 : f32 to vector<8x32xf32>
    %80 = arith.subf %78, %79 : vector<8x32xf32>
    %81 = arith.select %77, %75, %80 : vector<8x32xi1>, vector<8x32xf32>
    %cst_64 = arith.constant 1.000000e+00 : f32
    %82 = vector.broadcast %cst_64 : f32 to vector<8x32xf32>
    %83 = arith.addf %81, %82 : vector<8x32xf32>
    %84 = tpu.iota {dimensions = array<i32: 0>} : vector<8x8xi32>
    %85 = tpu.iota {dimensions = array<i32: 1>} : vector<8x8xi32>
    %c0_i32 = arith.constant 0 : i32
    %86 = vector.broadcast %c0_i32 : i32 to vector<8x8xi32>
    %87 = arith.addi %84, %86 : vector<8x8xi32>
    %88 = arith.cmpi slt, %85, %87 : vector<8x8xi32>
    %89 = arith.extui %88 : vector<8x8xi1> to vector<8x8xi32>
    %90 = arith.sitofp %89 : vector<8x8xi32> to vector<8x8xf32>
    %91 = arith.subi %85, %84 : vector<8x8xi32>
    %92 = math.absi %91 : vector<8x8xi32>
    %93 = arith.sitofp %92 : vector<8x8xi32> to vector<8x8xf32>
    %94 = arith.cmpi sle, %84, %85 : vector<8x8xi32>
    %95 = arith.extui %94 : vector<8x8xi1> to vector<8x8xi32>
    %96 = arith.sitofp %95 : vector<8x8xi32> to vector<8x8xf32>
    %cst_65 = arith.constant 1.000000e+00 : f32
    %97 = vector.broadcast %cst_65 : f32 to vector<8x1xf32>
    %98 = vector.extract_strided_slice %19 {offsets = [0, 0], sizes = [8, 8], strides = [1, 1]} : vector<8x32xf32> to vector<8x8xf32>
    %99 = vector.extract_strided_slice %27 {offsets = [0, 0], sizes = [8, 8], strides = [1, 1]} : vector<8x32xf32> to vector<8x8xf32>
    %100 = vector.extract_strided_slice %35 {offsets = [0, 0], sizes = [8, 8], strides = [1, 1]} : vector<8x32xf32> to vector<8x8xf32>
    %101 = vector.extract_strided_slice %51 {offsets = [0, 0], sizes = [8, 8], strides = [1, 1]} : vector<8x32xf32> to vector<8x8xf32>
    %102 = vector.extract_strided_slice %67 {offsets = [0, 0], sizes = [8, 8], strides = [1, 1]} : vector<8x32xf32> to vector<8x8xf32>
    %103 = vector.extract_strided_slice %83 {offsets = [0, 0], sizes = [8, 8], strides = [1, 1]} : vector<8x32xf32> to vector<8x8xf32>
    %cst_66 = arith.constant 1.000000e-24 : f32
    %104 = vector.broadcast %cst_66 : f32 to vector<8x8xf32>
    %105 = arith.maximumf %101, %104 : vector<8x8xf32>
    %106 = math.sqrt %105 : vector<8x8xf32>
    %cst_67 = arith.constant 1.000000e-24 : f32
    %107 = vector.broadcast %cst_67 : f32 to vector<8x8xf32>
    %108 = arith.maximumf %102, %107 : vector<8x8xf32>
    %109 = math.sqrt %108 : vector<8x8xf32>
    %110 = arith.mulf %98, %98 : vector<8x8xf32>
    %111 = arith.addf %110, %101 : vector<8x8xf32>
    %cst_68 = arith.constant dense<0.000000e+00> : vector<8xf32>
    %112 = vector.multi_reduction <add>, %111, %cst_68 [1] : vector<8x8xf32> to vector<8xf32>
    %113 = vector.shape_cast %112 : vector<8xf32> to vector<8x1xf32>
    %114 = arith.mulf %99, %99 : vector<8x8xf32>
    %115 = arith.addf %114, %102 : vector<8x8xf32>
    %cst_69 = arith.constant dense<0.000000e+00> : vector<8xf32>
    %116 = vector.multi_reduction <add>, %115, %cst_69 [1] : vector<8x8xf32> to vector<8xf32>
    %117 = vector.shape_cast %116 : vector<8xf32> to vector<8x1xf32>
    %cst_70 = arith.constant -2.000000e+00 : f32
    %118 = vector.broadcast %cst_70 : f32 to vector<8x8xf32>
    %119 = arith.mulf %118, %98 : vector<8x8xf32>
    %cst_71 = arith.constant -2.000000e+00 : f32
    %120 = vector.broadcast %cst_71 : f32 to vector<8x8xf32>
    %121 = arith.mulf %120, %106 : vector<8x8xf32>
    %122 = tpu.concatenate %119, %121, %113, %97 in 1 : vector<8x8xf32>, vector<8x8xf32>, vector<8x1xf32>, vector<8x1xf32> -> vector<8x18xf32>
    %123 = tpu.concatenate %99, %109, %97, %117 in 1 : vector<8x8xf32>, vector<8x8xf32>, vector<8x1xf32>, vector<8x1xf32> -> vector<8x18xf32>
    %cst_72 = arith.constant dense<0.000000e+00> : vector<8x8xf32>
    %124 = tpu.matmul %122, %123, %cst_72 {dimension_numbers = #tpu.dot_dimension_numbers<[1], [1], [0], [0], [0, 0, 1, 0], [], []>} : vector<8x18xf32>, vector<8x18xf32>, vector<8x8xf32> -> vector<8x8xf32>
    %cst_73 = arith.constant 0.000000e+00 : f32
    %125 = vector.broadcast %cst_73 : f32 to vector<8x8xf32>
    %126 = arith.subf %125, %124 : vector<8x8xf32>
    %cst_74 = arith.constant 0.353553385 : f32
    %127 = vector.broadcast %cst_74 : f32 to vector<8x8xf32>
    %128 = arith.mulf %126, %127 : vector<8x8xf32>
    %cst_75 = arith.constant -1.000000e+32 : f32
    %129 = vector.broadcast %cst_75 : f32 to vector<8x8xf32>
    %130 = arith.select %88, %128, %129 : vector<8x8xi1>, vector<8x8xf32>
    %cst_76 = arith.constant dense<0xFF800000> : vector<8xf32>
    %131 = vector.multi_reduction <maximumf>, %130, %cst_76 [1] : vector<8x8xf32> to vector<8xf32>
    %132 = vector.shape_cast %131 : vector<8xf32> to vector<8x1xf32>
    %133 = vector.broadcast %132 : vector<8x1xf32> to vector<8x8xf32>
    %134 = arith.subf %130, %133 : vector<8x8xf32>
    %135 = math.exp %134 : vector<8x8xf32>
    %cst_77 = arith.constant dense<0.000000e+00> : vector<8xf32>
    %136 = vector.multi_reduction <add>, %135, %cst_77 [1] : vector<8x8xf32> to vector<8xf32>
    %137 = vector.shape_cast %136 : vector<8xf32> to vector<8x1xf32>
    %138 = tpu.reciprocal %137 {approx = true} : vector<8x1xf32> -> vector<8x1xf32>
    %139 = vector.broadcast %138 : vector<8x1xf32> to vector<8x8xf32>
    %140 = arith.mulf %135, %139 : vector<8x8xf32>
    %141 = arith.mulf %140, %90 : vector<8x8xf32>
    %cst_78 = arith.constant dense<0.000000e+00> : vector<8x8xf32>
    %142 = tpu.matmul %141, %96, %cst_78 {dimension_numbers = #tpu.dot_dimension_numbers<[1], [0], [0], [1], [0, 0, 1, 1], [], []>} : vector<8x8xf32>, vector<8x8xf32>, vector<8x8xf32> -> vector<8x8xf32>
    %cst_79 = arith.constant dense<0.000000e+00> : vector<8xf32>
    %143 = vector.multi_reduction <add>, %141, %cst_79 [1] : vector<8x8xf32> to vector<8xf32>
    %144 = vector.shape_cast %143 : vector<8xf32> to vector<8x1xf32>
    %145 = vector.broadcast %144 : vector<8x1xf32> to vector<8x8xf32>
    %146 = arith.subf %145, %142 : vector<8x8xf32>
    %147 = arith.mulf %146, %93 : vector<8x8xf32>
    %cst_80 = arith.constant 0.000000e+00 : f32
    %148 = vector.broadcast %cst_80 : f32 to vector<8x8xf32>
    %149 = arith.maximumf %147, %148 : vector<8x8xf32>
    %150 = math.sqrt %149 : vector<8x8xf32>
    %c0_81 = arith.constant 0 : index
    %151 = memref.load %arg1[%c0_81] : memref<4xf32, #tpu.memory_space<smem>>
    %152 = vector.broadcast %151 : f32 to vector<8x8xf32>
    %153 = arith.mulf %150, %152 : vector<8x8xf32>
    %154 = math.exp %153 : vector<8x8xf32>
    %cst_82 = arith.constant 9.99999974E-6 : f32
    %cst_83 = arith.constant 1.000000e+05 : f32
    %155 = vector.broadcast %cst_82 : f32 to vector<8x8xf32>
    %156 = arith.maximumf %155, %154 : vector<8x8xf32>
    %157 = vector.broadcast %cst_83 : f32 to vector<8x8xf32>
    %158 = arith.minimumf %157, %156 : vector<8x8xf32>
    %159 = arith.mulf %128, %158 : vector<8x8xf32>
    %cst_84 = arith.constant -1.000000e+32 : f32
    %160 = vector.broadcast %cst_84 : f32 to vector<8x8xf32>
    %161 = arith.select %88, %159, %160 : vector<8x8xi1>, vector<8x8xf32>
    %cst_85 = arith.constant dense<0xFF800000> : vector<8xf32>
    %162 = vector.multi_reduction <maximumf>, %161, %cst_85 [1] : vector<8x8xf32> to vector<8xf32>
    %163 = vector.shape_cast %162 : vector<8xf32> to vector<8x1xf32>
    %164 = vector.broadcast %163 : vector<8x1xf32> to vector<8x8xf32>
    %165 = arith.subf %161, %164 : vector<8x8xf32>
    %166 = math.exp %165 : vector<8x8xf32>
    %cst_86 = arith.constant dense<0.000000e+00> : vector<8xf32>
    %167 = vector.multi_reduction <add>, %166, %cst_86 [1] : vector<8x8xf32> to vector<8xf32>
    %168 = vector.shape_cast %167 : vector<8xf32> to vector<8x1xf32>
    %169 = tpu.reciprocal %168 {approx = true} : vector<8x1xf32> -> vector<8x1xf32>
    %170 = vector.broadcast %169 : vector<8x1xf32> to vector<8x8xf32>
    %171 = arith.mulf %166, %170 : vector<8x8xf32>
    %c0_i32_87 = arith.constant 0 : i32
    %172 = vector.broadcast %c0_i32_87 : i32 to vector<8x8xi32>
    %173 = arith.cmpi eq, %84, %172 : vector<8x8xi32>
    %cst_88 = arith.constant 0.000000e+00 : f32
    %174 = vector.broadcast %cst_88 : f32 to vector<8x8xf32>
    %175 = arith.select %173, %174, %171 : vector<8x8xi1>, vector<8x8xf32>
    %176 = arith.truncf %175 : vector<8x8xf32> to vector<8x8xbf16>
    %177 = arith.truncf %100 : vector<8x8xf32> to vector<8x8xbf16>
    %cst_89 = arith.constant dense<0.000000e+00> : vector<8x8xf32>
    %178 = tpu.matmul %176, %177, %cst_89 {dimension_numbers = #tpu.dot_dimension_numbers<[1], [0], [0], [1], [0, 0, 1, 1], [], []>} : vector<8x8xbf16>, vector<8x8xbf16>, vector<8x8xf32> -> vector<8x8xf32>
    %179 = arith.mulf %175, %175 : vector<8x8xf32>
    %180 = arith.truncf %179 : vector<8x8xf32> to vector<8x8xbf16>
    %181 = arith.truncf %103 : vector<8x8xf32> to vector<8x8xbf16>
    %cst_90 = arith.constant dense<0.000000e+00> : vector<8x8xf32>
    %182 = tpu.matmul %180, %181, %cst_90 {dimension_numbers = #tpu.dot_dimension_numbers<[1], [0], [0], [1], [0, 0, 1, 1], [], []>} : vector<8x8xbf16>, vector<8x8xbf16>, vector<8x8xf32> -> vector<8x8xf32>
    %183 = vector.extract_strided_slice %19 {offsets = [0, 8], sizes = [8, 8], strides = [1, 1]} : vector<8x32xf32> to vector<8x8xf32>
    %184 = vector.extract_strided_slice %27 {offsets = [0, 8], sizes = [8, 8], strides = [1, 1]} : vector<8x32xf32> to vector<8x8xf32>
    %185 = vector.extract_strided_slice %35 {offsets = [0, 8], sizes = [8, 8], strides = [1, 1]} : vector<8x32xf32> to vector<8x8xf32>
    %186 = vector.extract_strided_slice %51 {offsets = [0, 8], sizes = [8, 8], strides = [1, 1]} : vector<8x32xf32> to vector<8x8xf32>
    %187 = vector.extract_strided_slice %67 {offsets = [0, 8], sizes = [8, 8], strides = [1, 1]} : vector<8x32xf32> to vector<8x8xf32>
    %188 = vector.extract_strided_slice %83 {offsets = [0, 8], sizes = [8, 8], strides = [1, 1]} : vector<8x32xf32> to vector<8x8xf32>
    %cst_91 = arith.constant 1.000000e-24 : f32
    %189 = vector.broadcast %cst_91 : f32 to vector<8x8xf32>
    %190 = arith.maximumf %186, %189 : vector<8x8xf32>
    %191 = math.sqrt %190 : vector<8x8xf32>
    %cst_92 = arith.constant 1.000000e-24 : f32
    %192 = vector.broadcast %cst_92 : f32 to vector<8x8xf32>
    %193 = arith.maximumf %187, %192 : vector<8x8xf32>
    %194 = math.sqrt %193 : vector<8x8xf32>
    %195 = arith.mulf %183, %183 : vector<8x8xf32>
    %196 = arith.addf %195, %186 : vector<8x8xf32>
    %cst_93 = arith.constant dense<0.000000e+00> : vector<8xf32>
    %197 = vector.multi_reduction <add>, %196, %cst_93 [1] : vector<8x8xf32> to vector<8xf32>
    %198 = vector.shape_cast %197 : vector<8xf32> to vector<8x1xf32>
    %199 = arith.mulf %184, %184 : vector<8x8xf32>
    %200 = arith.addf %199, %187 : vector<8x8xf32>
    %cst_94 = arith.constant dense<0.000000e+00> : vector<8xf32>
    %201 = vector.multi_reduction <add>, %200, %cst_94 [1] : vector<8x8xf32> to vector<8xf32>
    %202 = vector.shape_cast %201 : vector<8xf32> to vector<8x1xf32>
    %cst_95 = arith.constant -2.000000e+00 : f32
    %203 = vector.broadcast %cst_95 : f32 to vector<8x8xf32>
    %204 = arith.mulf %203, %183 : vector<8x8xf32>
    %cst_96 = arith.constant -2.000000e+00 : f32
    %205 = vector.broadcast %cst_96 : f32 to vector<8x8xf32>
    %206 = arith.mulf %205, %191 : vector<8x8xf32>
    %207 = tpu.concatenate %204, %206, %198, %97 in 1 : vector<8x8xf32>, vector<8x8xf32>, vector<8x1xf32>, vector<8x1xf32> -> vector<8x18xf32>
    %208 = tpu.concatenate %184, %194, %97, %202 in 1 : vector<8x8xf32>, vector<8x8xf32>, vector<8x1xf32>, vector<8x1xf32> -> vector<8x18xf32>
    %cst_97 = arith.constant dense<0.000000e+00> : vector<8x8xf32>
    %209 = tpu.matmul %207, %208, %cst_97 {dimension_numbers = #tpu.dot_dimension_numbers<[1], [1], [0], [0], [0, 0, 1, 0], [], []>} : vector<8x18xf32>, vector<8x18xf32>, vector<8x8xf32> -> vector<8x8xf32>
    %cst_98 = arith.constant 0.000000e+00 : f32
    %210 = vector.broadcast %cst_98 : f32 to vector<8x8xf32>
    %211 = arith.subf %210, %209 : vector<8x8xf32>
    %cst_99 = arith.constant 0.353553385 : f32
    %212 = vector.broadcast %cst_99 : f32 to vector<8x8xf32>
    %213 = arith.mulf %211, %212 : vector<8x8xf32>
    %cst_100 = arith.constant -1.000000e+32 : f32
    %214 = vector.broadcast %cst_100 : f32 to vector<8x8xf32>
    %215 = arith.select %88, %213, %214 : vector<8x8xi1>, vector<8x8xf32>
    %cst_101 = arith.constant dense<0xFF800000> : vector<8xf32>
    %216 = vector.multi_reduction <maximumf>, %215, %cst_101 [1] : vector<8x8xf32> to vector<8xf32>
    %217 = vector.shape_cast %216 : vector<8xf32> to vector<8x1xf32>
    %218 = vector.broadcast %217 : vector<8x1xf32> to vector<8x8xf32>
    %219 = arith.subf %215, %218 : vector<8x8xf32>
    %220 = math.exp %219 : vector<8x8xf32>
    %cst_102 = arith.constant dense<0.000000e+00> : vector<8xf32>
    %221 = vector.multi_reduction <add>, %220, %cst_102 [1] : vector<8x8xf32> to vector<8xf32>
    %222 = vector.shape_cast %221 : vector<8xf32> to vector<8x1xf32>
    %223 = tpu.reciprocal %222 {approx = true} : vector<8x1xf32> -> vector<8x1xf32>
    %224 = vector.broadcast %223 : vector<8x1xf32> to vector<8x8xf32>
    %225 = arith.mulf %220, %224 : vector<8x8xf32>
    %226 = arith.mulf %225, %90 : vector<8x8xf32>
    %cst_103 = arith.constant dense<0.000000e+00> : vector<8x8xf32>
    %227 = tpu.matmul %226, %96, %cst_103 {dimension_numbers = #tpu.dot_dimension_numbers<[1], [0], [0], [1], [0, 0, 1, 1], [], []>} : vector<8x8xf32>, vector<8x8xf32>, vector<8x8xf32> -> vector<8x8xf32>
    %cst_104 = arith.constant dense<0.000000e+00> : vector<8xf32>
    %228 = vector.multi_reduction <add>, %226, %cst_104 [1] : vector<8x8xf32> to vector<8xf32>
    %229 = vector.shape_cast %228 : vector<8xf32> to vector<8x1xf32>
    %230 = vector.broadcast %229 : vector<8x1xf32> to vector<8x8xf32>
    %231 = arith.subf %230, %227 : vector<8x8xf32>
    %232 = arith.mulf %231, %93 : vector<8x8xf32>
    %cst_105 = arith.constant 0.000000e+00 : f32
    %233 = vector.broadcast %cst_105 : f32 to vector<8x8xf32>
    %234 = arith.maximumf %232, %233 : vector<8x8xf32>
    %235 = math.sqrt %234 : vector<8x8xf32>
    %c1_106 = arith.constant 1 : index
    %236 = memref.load %arg1[%c1_106] : memref<4xf32, #tpu.memory_space<smem>>
    %237 = vector.broadcast %236 : f32 to vector<8x8xf32>
    %238 = arith.mulf %235, %237 : vector<8x8xf32>
    %239 = math.exp %238 : vector<8x8xf32>
    %cst_107 = arith.constant 9.99999974E-6 : f32
    %cst_108 = arith.constant 1.000000e+05 : f32
    %240 = vector.broadcast %cst_107 : f32 to vector<8x8xf32>
    %241 = arith.maximumf %240, %239 : vector<8x8xf32>
    %242 = vector.broadcast %cst_108 : f32 to vector<8x8xf32>
    %243 = arith.minimumf %242, %241 : vector<8x8xf32>
    %244 = arith.mulf %213, %243 : vector<8x8xf32>
    %cst_109 = arith.constant -1.000000e+32 : f32
    %245 = vector.broadcast %cst_109 : f32 to vector<8x8xf32>
    %246 = arith.select %88, %244, %245 : vector<8x8xi1>, vector<8x8xf32>
    %cst_110 = arith.constant dense<0xFF800000> : vector<8xf32>
    %247 = vector.multi_reduction <maximumf>, %246, %cst_110 [1] : vector<8x8xf32> to vector<8xf32>
    %248 = vector.shape_cast %247 : vector<8xf32> to vector<8x1xf32>
    %249 = vector.broadcast %248 : vector<8x1xf32> to vector<8x8xf32>
    %250 = arith.subf %246, %249 : vector<8x8xf32>
    %251 = math.exp %250 : vector<8x8xf32>
    %cst_111 = arith.constant dense<0.000000e+00> : vector<8xf32>
    %252 = vector.multi_reduction <add>, %251, %cst_111 [1] : vector<8x8xf32> to vector<8xf32>
    %253 = vector.shape_cast %252 : vector<8xf32> to vector<8x1xf32>
    %254 = tpu.reciprocal %253 {approx = true} : vector<8x1xf32> -> vector<8x1xf32>
    %255 = vector.broadcast %254 : vector<8x1xf32> to vector<8x8xf32>
    %256 = arith.mulf %251, %255 : vector<8x8xf32>
    %c0_i32_112 = arith.constant 0 : i32
    %257 = vector.broadcast %c0_i32_112 : i32 to vector<8x8xi32>
    %258 = arith.cmpi eq, %84, %257 : vector<8x8xi32>
    %cst_113 = arith.constant 0.000000e+00 : f32
    %259 = vector.broadcast %cst_113 : f32 to vector<8x8xf32>
    %260 = arith.select %258, %259, %256 : vector<8x8xi1>, vector<8x8xf32>
    %261 = arith.truncf %260 : vector<8x8xf32> to vector<8x8xbf16>
    %262 = arith.truncf %185 : vector<8x8xf32> to vector<8x8xbf16>
    %cst_114 = arith.constant dense<0.000000e+00> : vector<8x8xf32>
    %263 = tpu.matmul %261, %262, %cst_114 {dimension_numbers = #tpu.dot_dimension_numbers<[1], [0], [0], [1], [0, 0, 1, 1], [], []>} : vector<8x8xbf16>, vector<8x8xbf16>, vector<8x8xf32> -> vector<8x8xf32>
    %264 = arith.mulf %260, %260 : vector<8x8xf32>
    %265 = arith.truncf %264 : vector<8x8xf32> to vector<8x8xbf16>
    %266 = arith.truncf %188 : vector<8x8xf32> to vector<8x8xbf16>
    %cst_115 = arith.constant dense<0.000000e+00> : vector<8x8xf32>
    %267 = tpu.matmul %265, %266, %cst_115 {dimension_numbers = #tpu.dot_dimension_numbers<[1], [0], [0], [1], [0, 0, 1, 1], [], []>} : vector<8x8xbf16>, vector<8x8xbf16>, vector<8x8xf32> -> vector<8x8xf32>
    %268 = vector.extract_strided_slice %19 {offsets = [0, 16], sizes = [8, 8], strides = [1, 1]} : vector<8x32xf32> to vector<8x8xf32>
    %269 = vector.extract_strided_slice %27 {offsets = [0, 16], sizes = [8, 8], strides = [1, 1]} : vector<8x32xf32> to vector<8x8xf32>
    %270 = vector.extract_strided_slice %35 {offsets = [0, 16], sizes = [8, 8], strides = [1, 1]} : vector<8x32xf32> to vector<8x8xf32>
    %271 = vector.extract_strided_slice %51 {offsets = [0, 16], sizes = [8, 8], strides = [1, 1]} : vector<8x32xf32> to vector<8x8xf32>
    %272 = vector.extract_strided_slice %67 {offsets = [0, 16], sizes = [8, 8], strides = [1, 1]} : vector<8x32xf32> to vector<8x8xf32>
    %273 = vector.extract_strided_slice %83 {offsets = [0, 16], sizes = [8, 8], strides = [1, 1]} : vector<8x32xf32> to vector<8x8xf32>
    %cst_116 = arith.constant 1.000000e-24 : f32
    %274 = vector.broadcast %cst_116 : f32 to vector<8x8xf32>
    %275 = arith.maximumf %271, %274 : vector<8x8xf32>
    %276 = math.sqrt %275 : vector<8x8xf32>
    %cst_117 = arith.constant 1.000000e-24 : f32
    %277 = vector.broadcast %cst_117 : f32 to vector<8x8xf32>
    %278 = arith.maximumf %272, %277 : vector<8x8xf32>
    %279 = math.sqrt %278 : vector<8x8xf32>
    %280 = arith.mulf %268, %268 : vector<8x8xf32>
    %281 = arith.addf %280, %271 : vector<8x8xf32>
    %cst_118 = arith.constant dense<0.000000e+00> : vector<8xf32>
    %282 = vector.multi_reduction <add>, %281, %cst_118 [1] : vector<8x8xf32> to vector<8xf32>
    %283 = vector.shape_cast %282 : vector<8xf32> to vector<8x1xf32>
    %284 = arith.mulf %269, %269 : vector<8x8xf32>
    %285 = arith.addf %284, %272 : vector<8x8xf32>
    %cst_119 = arith.constant dense<0.000000e+00> : vector<8xf32>
    %286 = vector.multi_reduction <add>, %285, %cst_119 [1] : vector<8x8xf32> to vector<8xf32>
    %287 = vector.shape_cast %286 : vector<8xf32> to vector<8x1xf32>
    %cst_120 = arith.constant -2.000000e+00 : f32
    %288 = vector.broadcast %cst_120 : f32 to vector<8x8xf32>
    %289 = arith.mulf %288, %268 : vector<8x8xf32>
    %cst_121 = arith.constant -2.000000e+00 : f32
    %290 = vector.broadcast %cst_121 : f32 to vector<8x8xf32>
    %291 = arith.mulf %290, %276 : vector<8x8xf32>
    %292 = tpu.concatenate %289, %291, %283, %97 in 1 : vector<8x8xf32>, vector<8x8xf32>, vector<8x1xf32>, vector<8x1xf32> -> vector<8x18xf32>
    %293 = tpu.concatenate %269, %279, %97, %287 in 1 : vector<8x8xf32>, vector<8x8xf32>, vector<8x1xf32>, vector<8x1xf32> -> vector<8x18xf32>
    %cst_122 = arith.constant dense<0.000000e+00> : vector<8x8xf32>
    %294 = tpu.matmul %292, %293, %cst_122 {dimension_numbers = #tpu.dot_dimension_numbers<[1], [1], [0], [0], [0, 0, 1, 0], [], []>} : vector<8x18xf32>, vector<8x18xf32>, vector<8x8xf32> -> vector<8x8xf32>
    %cst_123 = arith.constant 0.000000e+00 : f32
    %295 = vector.broadcast %cst_123 : f32 to vector<8x8xf32>
    %296 = arith.subf %295, %294 : vector<8x8xf32>
    %cst_124 = arith.constant 0.353553385 : f32
    %297 = vector.broadcast %cst_124 : f32 to vector<8x8xf32>
    %298 = arith.mulf %296, %297 : vector<8x8xf32>
    %cst_125 = arith.constant -1.000000e+32 : f32
    %299 = vector.broadcast %cst_125 : f32 to vector<8x8xf32>
    %300 = arith.select %88, %298, %299 : vector<8x8xi1>, vector<8x8xf32>
    %cst_126 = arith.constant dense<0xFF800000> : vector<8xf32>
    %301 = vector.multi_reduction <maximumf>, %300, %cst_126 [1] : vector<8x8xf32> to vector<8xf32>
    %302 = vector.shape_cast %301 : vector<8xf32> to vector<8x1xf32>
    %303 = vector.broadcast %302 : vector<8x1xf32> to vector<8x8xf32>
    %304 = arith.subf %300, %303 : vector<8x8xf32>
    %305 = math.exp %304 : vector<8x8xf32>
    %cst_127 = arith.constant dense<0.000000e+00> : vector<8xf32>
    %306 = vector.multi_reduction <add>, %305, %cst_127 [1] : vector<8x8xf32> to vector<8xf32>
    %307 = vector.shape_cast %306 : vector<8xf32> to vector<8x1xf32>
    %308 = tpu.reciprocal %307 {approx = true} : vector<8x1xf32> -> vector<8x1xf32>
    %309 = vector.broadcast %308 : vector<8x1xf32> to vector<8x8xf32>
    %310 = arith.mulf %305, %309 : vector<8x8xf32>
    %311 = arith.mulf %310, %90 : vector<8x8xf32>
    %cst_128 = arith.constant dense<0.000000e+00> : vector<8x8xf32>
    %312 = tpu.matmul %311, %96, %cst_128 {dimension_numbers = #tpu.dot_dimension_numbers<[1], [0], [0], [1], [0, 0, 1, 1], [], []>} : vector<8x8xf32>, vector<8x8xf32>, vector<8x8xf32> -> vector<8x8xf32>
    %cst_129 = arith.constant dense<0.000000e+00> : vector<8xf32>
    %313 = vector.multi_reduction <add>, %311, %cst_129 [1] : vector<8x8xf32> to vector<8xf32>
    %314 = vector.shape_cast %313 : vector<8xf32> to vector<8x1xf32>
    %315 = vector.broadcast %314 : vector<8x1xf32> to vector<8x8xf32>
    %316 = arith.subf %315, %312 : vector<8x8xf32>
    %317 = arith.mulf %316, %93 : vector<8x8xf32>
    %cst_130 = arith.constant 0.000000e+00 : f32
    %318 = vector.broadcast %cst_130 : f32 to vector<8x8xf32>
    %319 = arith.maximumf %317, %318 : vector<8x8xf32>
    %320 = math.sqrt %319 : vector<8x8xf32>
    %c2_131 = arith.constant 2 : index
    %321 = memref.load %arg1[%c2_131] : memref<4xf32, #tpu.memory_space<smem>>
    %322 = vector.broadcast %321 : f32 to vector<8x8xf32>
    %323 = arith.mulf %320, %322 : vector<8x8xf32>
    %324 = math.exp %323 : vector<8x8xf32>
    %cst_132 = arith.constant 9.99999974E-6 : f32
    %cst_133 = arith.constant 1.000000e+05 : f32
    %325 = vector.broadcast %cst_132 : f32 to vector<8x8xf32>
    %326 = arith.maximumf %325, %324 : vector<8x8xf32>
    %327 = vector.broadcast %cst_133 : f32 to vector<8x8xf32>
    %328 = arith.minimumf %327, %326 : vector<8x8xf32>
    %329 = arith.mulf %298, %328 : vector<8x8xf32>
    %cst_134 = arith.constant -1.000000e+32 : f32
    %330 = vector.broadcast %cst_134 : f32 to vector<8x8xf32>
    %331 = arith.select %88, %329, %330 : vector<8x8xi1>, vector<8x8xf32>
    %cst_135 = arith.constant dense<0xFF800000> : vector<8xf32>
    %332 = vector.multi_reduction <maximumf>, %331, %cst_135 [1] : vector<8x8xf32> to vector<8xf32>
    %333 = vector.shape_cast %332 : vector<8xf32> to vector<8x1xf32>
    %334 = vector.broadcast %333 : vector<8x1xf32> to vector<8x8xf32>
    %335 = arith.subf %331, %334 : vector<8x8xf32>
    %336 = math.exp %335 : vector<8x8xf32>
    %cst_136 = arith.constant dense<0.000000e+00> : vector<8xf32>
    %337 = vector.multi_reduction <add>, %336, %cst_136 [1] : vector<8x8xf32> to vector<8xf32>
    %338 = vector.shape_cast %337 : vector<8xf32> to vector<8x1xf32>
    %339 = tpu.reciprocal %338 {approx = true} : vector<8x1xf32> -> vector<8x1xf32>
    %340 = vector.broadcast %339 : vector<8x1xf32> to vector<8x8xf32>
    %341 = arith.mulf %336, %340 : vector<8x8xf32>
    %c0_i32_137 = arith.constant 0 : i32
    %342 = vector.broadcast %c0_i32_137 : i32 to vector<8x8xi32>
    %343 = arith.cmpi eq, %84, %342 : vector<8x8xi32>
    %cst_138 = arith.constant 0.000000e+00 : f32
    %344 = vector.broadcast %cst_138 : f32 to vector<8x8xf32>
    %345 = arith.select %343, %344, %341 : vector<8x8xi1>, vector<8x8xf32>
    %346 = arith.truncf %345 : vector<8x8xf32> to vector<8x8xbf16>
    %347 = arith.truncf %270 : vector<8x8xf32> to vector<8x8xbf16>
    %cst_139 = arith.constant dense<0.000000e+00> : vector<8x8xf32>
    %348 = tpu.matmul %346, %347, %cst_139 {dimension_numbers = #tpu.dot_dimension_numbers<[1], [0], [0], [1], [0, 0, 1, 1], [], []>} : vector<8x8xbf16>, vector<8x8xbf16>, vector<8x8xf32> -> vector<8x8xf32>
    %349 = arith.mulf %345, %345 : vector<8x8xf32>
    %350 = arith.truncf %349 : vector<8x8xf32> to vector<8x8xbf16>
    %351 = arith.truncf %273 : vector<8x8xf32> to vector<8x8xbf16>
    %cst_140 = arith.constant dense<0.000000e+00> : vector<8x8xf32>
    %352 = tpu.matmul %350, %351, %cst_140 {dimension_numbers = #tpu.dot_dimension_numbers<[1], [0], [0], [1], [0, 0, 1, 1], [], []>} : vector<8x8xbf16>, vector<8x8xbf16>, vector<8x8xf32> -> vector<8x8xf32>
    %353 = vector.extract_strided_slice %19 {offsets = [0, 24], sizes = [8, 8], strides = [1, 1]} : vector<8x32xf32> to vector<8x8xf32>
    %354 = vector.extract_strided_slice %27 {offsets = [0, 24], sizes = [8, 8], strides = [1, 1]} : vector<8x32xf32> to vector<8x8xf32>
    %355 = vector.extract_strided_slice %35 {offsets = [0, 24], sizes = [8, 8], strides = [1, 1]} : vector<8x32xf32> to vector<8x8xf32>
    %356 = vector.extract_strided_slice %51 {offsets = [0, 24], sizes = [8, 8], strides = [1, 1]} : vector<8x32xf32> to vector<8x8xf32>
    %357 = vector.extract_strided_slice %67 {offsets = [0, 24], sizes = [8, 8], strides = [1, 1]} : vector<8x32xf32> to vector<8x8xf32>
    %358 = vector.extract_strided_slice %83 {offsets = [0, 24], sizes = [8, 8], strides = [1, 1]} : vector<8x32xf32> to vector<8x8xf32>
    %cst_141 = arith.constant 1.000000e-24 : f32
    %359 = vector.broadcast %cst_141 : f32 to vector<8x8xf32>
    %360 = arith.maximumf %356, %359 : vector<8x8xf32>
    %361 = math.sqrt %360 : vector<8x8xf32>
    %cst_142 = arith.constant 1.000000e-24 : f32
    %362 = vector.broadcast %cst_142 : f32 to vector<8x8xf32>
    %363 = arith.maximumf %357, %362 : vector<8x8xf32>
    %364 = math.sqrt %363 : vector<8x8xf32>
    %365 = arith.mulf %353, %353 : vector<8x8xf32>
    %366 = arith.addf %365, %356 : vector<8x8xf32>
    %cst_143 = arith.constant dense<0.000000e+00> : vector<8xf32>
    %367 = vector.multi_reduction <add>, %366, %cst_143 [1] : vector<8x8xf32> to vector<8xf32>
    %368 = vector.shape_cast %367 : vector<8xf32> to vector<8x1xf32>
    %369 = arith.mulf %354, %354 : vector<8x8xf32>
    %370 = arith.addf %369, %357 : vector<8x8xf32>
    %cst_144 = arith.constant dense<0.000000e+00> : vector<8xf32>
    %371 = vector.multi_reduction <add>, %370, %cst_144 [1] : vector<8x8xf32> to vector<8xf32>
    %372 = vector.shape_cast %371 : vector<8xf32> to vector<8x1xf32>
    %cst_145 = arith.constant -2.000000e+00 : f32
    %373 = vector.broadcast %cst_145 : f32 to vector<8x8xf32>
    %374 = arith.mulf %373, %353 : vector<8x8xf32>
    %cst_146 = arith.constant -2.000000e+00 : f32
    %375 = vector.broadcast %cst_146 : f32 to vector<8x8xf32>
    %376 = arith.mulf %375, %361 : vector<8x8xf32>
    %377 = tpu.concatenate %374, %376, %368, %97 in 1 : vector<8x8xf32>, vector<8x8xf32>, vector<8x1xf32>, vector<8x1xf32> -> vector<8x18xf32>
    %378 = tpu.concatenate %354, %364, %97, %372 in 1 : vector<8x8xf32>, vector<8x8xf32>, vector<8x1xf32>, vector<8x1xf32> -> vector<8x18xf32>
    %cst_147 = arith.constant dense<0.000000e+00> : vector<8x8xf32>
    %379 = tpu.matmul %377, %378, %cst_147 {dimension_numbers = #tpu.dot_dimension_numbers<[1], [1], [0], [0], [0, 0, 1, 0], [], []>} : vector<8x18xf32>, vector<8x18xf32>, vector<8x8xf32> -> vector<8x8xf32>
    %cst_148 = arith.constant 0.000000e+00 : f32
    %380 = vector.broadcast %cst_148 : f32 to vector<8x8xf32>
    %381 = arith.subf %380, %379 : vector<8x8xf32>
    %cst_149 = arith.constant 0.353553385 : f32
    %382 = vector.broadcast %cst_149 : f32 to vector<8x8xf32>
    %383 = arith.mulf %381, %382 : vector<8x8xf32>
    %cst_150 = arith.constant -1.000000e+32 : f32
    %384 = vector.broadcast %cst_150 : f32 to vector<8x8xf32>
    %385 = arith.select %88, %383, %384 : vector<8x8xi1>, vector<8x8xf32>
    %cst_151 = arith.constant dense<0xFF800000> : vector<8xf32>
    %386 = vector.multi_reduction <maximumf>, %385, %cst_151 [1] : vector<8x8xf32> to vector<8xf32>
    %387 = vector.shape_cast %386 : vector<8xf32> to vector<8x1xf32>
    %388 = vector.broadcast %387 : vector<8x1xf32> to vector<8x8xf32>
    %389 = arith.subf %385, %388 : vector<8x8xf32>
    %390 = math.exp %389 : vector<8x8xf32>
    %cst_152 = arith.constant dense<0.000000e+00> : vector<8xf32>
    %391 = vector.multi_reduction <add>, %390, %cst_152 [1] : vector<8x8xf32> to vector<8xf32>
    %392 = vector.shape_cast %391 : vector<8xf32> to vector<8x1xf32>
    %393 = tpu.reciprocal %392 {approx = true} : vector<8x1xf32> -> vector<8x1xf32>
    %394 = vector.broadcast %393 : vector<8x1xf32> to vector<8x8xf32>
    %395 = arith.mulf %390, %394 : vector<8x8xf32>
    %396 = arith.mulf %395, %90 : vector<8x8xf32>
    %cst_153 = arith.constant dense<0.000000e+00> : vector<8x8xf32>
    %397 = tpu.matmul %396, %96, %cst_153 {dimension_numbers = #tpu.dot_dimension_numbers<[1], [0], [0], [1], [0, 0, 1, 1], [], []>} : vector<8x8xf32>, vector<8x8xf32>, vector<8x8xf32> -> vector<8x8xf32>
    %cst_154 = arith.constant dense<0.000000e+00> : vector<8xf32>
    %398 = vector.multi_reduction <add>, %396, %cst_154 [1] : vector<8x8xf32> to vector<8xf32>
    %399 = vector.shape_cast %398 : vector<8xf32> to vector<8x1xf32>
    %400 = vector.broadcast %399 : vector<8x1xf32> to vector<8x8xf32>
    %401 = arith.subf %400, %397 : vector<8x8xf32>
    %402 = arith.mulf %401, %93 : vector<8x8xf32>
    %cst_155 = arith.constant 0.000000e+00 : f32
    %403 = vector.broadcast %cst_155 : f32 to vector<8x8xf32>
    %404 = arith.maximumf %402, %403 : vector<8x8xf32>
    %405 = math.sqrt %404 : vector<8x8xf32>
    %c3 = arith.constant 3 : index
    %406 = memref.load %arg1[%c3] : memref<4xf32, #tpu.memory_space<smem>>
    %407 = vector.broadcast %406 : f32 to vector<8x8xf32>
    %408 = arith.mulf %405, %407 : vector<8x8xf32>
    %409 = math.exp %408 : vector<8x8xf32>
    %cst_156 = arith.constant 9.99999974E-6 : f32
    %cst_157 = arith.constant 1.000000e+05 : f32
    %410 = vector.broadcast %cst_156 : f32 to vector<8x8xf32>
    %411 = arith.maximumf %410, %409 : vector<8x8xf32>
    %412 = vector.broadcast %cst_157 : f32 to vector<8x8xf32>
    %413 = arith.minimumf %412, %411 : vector<8x8xf32>
    %414 = arith.mulf %383, %413 : vector<8x8xf32>
    %cst_158 = arith.constant -1.000000e+32 : f32
    %415 = vector.broadcast %cst_158 : f32 to vector<8x8xf32>
    %416 = arith.select %88, %414, %415 : vector<8x8xi1>, vector<8x8xf32>
    %cst_159 = arith.constant dense<0xFF800000> : vector<8xf32>
    %417 = vector.multi_reduction <maximumf>, %416, %cst_159 [1] : vector<8x8xf32> to vector<8xf32>
    %418 = vector.shape_cast %417 : vector<8xf32> to vector<8x1xf32>
    %419 = vector.broadcast %418 : vector<8x1xf32> to vector<8x8xf32>
    %420 = arith.subf %416, %419 : vector<8x8xf32>
    %421 = math.exp %420 : vector<8x8xf32>
    %cst_160 = arith.constant dense<0.000000e+00> : vector<8xf32>
    %422 = vector.multi_reduction <add>, %421, %cst_160 [1] : vector<8x8xf32> to vector<8xf32>
    %423 = vector.shape_cast %422 : vector<8xf32> to vector<8x1xf32>
    %424 = tpu.reciprocal %423 {approx = true} : vector<8x1xf32> -> vector<8x1xf32>
    %425 = vector.broadcast %424 : vector<8x1xf32> to vector<8x8xf32>
    %426 = arith.mulf %421, %425 : vector<8x8xf32>
    %c0_i32_161 = arith.constant 0 : i32
    %427 = vector.broadcast %c0_i32_161 : i32 to vector<8x8xi32>
    %428 = arith.cmpi eq, %84, %427 : vector<8x8xi32>
    %cst_162 = arith.constant 0.000000e+00 : f32
    %429 = vector.broadcast %cst_162 : f32 to vector<8x8xf32>
    %430 = arith.select %428, %429, %426 : vector<8x8xi1>, vector<8x8xf32>
    %431 = arith.truncf %430 : vector<8x8xf32> to vector<8x8xbf16>
    %432 = arith.truncf %355 : vector<8x8xf32> to vector<8x8xbf16>
    %cst_163 = arith.constant dense<0.000000e+00> : vector<8x8xf32>
    %433 = tpu.matmul %431, %432, %cst_163 {dimension_numbers = #tpu.dot_dimension_numbers<[1], [0], [0], [1], [0, 0, 1, 1], [], []>} : vector<8x8xbf16>, vector<8x8xbf16>, vector<8x8xf32> -> vector<8x8xf32>
    %434 = arith.mulf %430, %430 : vector<8x8xf32>
    %435 = arith.truncf %434 : vector<8x8xf32> to vector<8x8xbf16>
    %436 = arith.truncf %358 : vector<8x8xf32> to vector<8x8xbf16>
    %cst_164 = arith.constant dense<0.000000e+00> : vector<8x8xf32>
    %437 = tpu.matmul %435, %436, %cst_164 {dimension_numbers = #tpu.dot_dimension_numbers<[1], [0], [0], [1], [0, 0, 1, 1], [], []>} : vector<8x8xbf16>, vector<8x8xbf16>, vector<8x8xf32> -> vector<8x8xf32>
    %438 = tpu.concatenate %178, %263, %348, %433 in 1 : vector<8x8xf32>, vector<8x8xf32>, vector<8x8xf32>, vector<8x8xf32> -> vector<8x32xf32>
    %439 = tpu.concatenate %182, %267, %352, %437 in 1 : vector<8x8xf32>, vector<8x8xf32>, vector<8x8xf32>, vector<8x8xf32> -> vector<8x32xf32>
    %c0_165 = arith.constant 0 : index
    %c0_166 = arith.constant 0 : index
    %440 = vector.load %arg16[%c0_165, %c0_166] : memref<1x32xf32, #tpu.memory_space<vmem>>, vector<1x32xf32>
    %c0_167 = arith.constant 0 : index
    %c0_168 = arith.constant 0 : index
    %441 = vector.load %arg17[%c0_167, %c0_168] : memref<1x32xf32, #tpu.memory_space<vmem>>, vector<1x32xf32>
    %c0_169 = arith.constant 0 : index
    %c0_170 = arith.constant 0 : index
    %442 = vector.load %arg12[%c0_169, %c0_170] : memref<32x32xbf16, #tpu.memory_space<vmem>>, vector<32x32xbf16>
    %443 = arith.truncf %438 : vector<8x32xf32> to vector<8x32xbf16>
    %cst_171 = arith.constant dense<0.000000e+00> : vector<8x32xf32>
    %444 = tpu.matmul %443, %442, %cst_171 {dimension_numbers = #tpu.dot_dimension_numbers<[1], [0], [0], [1], [0, 0, 1, 1], [], []>} : vector<8x32xbf16>, vector<32x32xbf16>, vector<8x32xf32> -> vector<8x32xf32>
    %c0_172 = arith.constant 0 : index
    %c0_173 = arith.constant 0 : index
    %445 = vector.load %arg13[%c0_172, %c0_173] : memref<1x32xf32, #tpu.memory_space<vmem>>, vector<1x32xf32>
    %446 = vector.broadcast %445 : vector<1x32xf32> to vector<8x32xf32>
    %447 = arith.addf %444, %446 : vector<8x32xf32>
    %c0_174 = arith.constant 0 : index
    %c0_175 = arith.constant 0 : index
    %448 = vector.load %arg14[%c0_174, %c0_175] : memref<32x32xbf16, #tpu.memory_space<vmem>>, vector<32x32xbf16>
    %449 = arith.truncf %439 : vector<8x32xf32> to vector<8x32xbf16>
    %cst_176 = arith.constant dense<0.000000e+00> : vector<8x32xf32>
    %450 = tpu.matmul %449, %448, %cst_176 {dimension_numbers = #tpu.dot_dimension_numbers<[1], [0], [0], [1], [0, 0, 1, 1], [], []>} : vector<8x32xbf16>, vector<32x32xbf16>, vector<8x32xf32> -> vector<8x32xf32>
    %c0_177 = arith.constant 0 : index
    %c0_178 = arith.constant 0 : index
    %451 = vector.load %arg15[%c0_177, %c0_178] : memref<1x32xf32, #tpu.memory_space<vmem>>, vector<1x32xf32>
    %452 = vector.broadcast %451 : vector<1x32xf32> to vector<8x32xf32>
    %453 = arith.addf %450, %452 : vector<8x32xf32>
    %454 = arith.addf %1, %447 : vector<8x32xf32>
    %cst_179 = arith.constant dense<0.000000e+00> : vector<8xf32>
    %455 = vector.multi_reduction <add>, %454, %cst_179 [1] : vector<8x32xf32> to vector<8xf32>
    %456 = vector.shape_cast %455 : vector<8xf32> to vector<8x1xf32>
    %cst_180 = arith.constant 3.200000e+01 : f32
    %457 = vector.broadcast %cst_180 : f32 to vector<8x1xf32>
    %458 = arith.divf %456, %457 : vector<8x1xf32>
    %459 = vector.broadcast %458 : vector<8x1xf32> to vector<8x32xf32>
    %460 = arith.subf %454, %459 : vector<8x32xf32>
    %461 = arith.mulf %460, %460 : vector<8x32xf32>
    %cst_181 = arith.constant dense<0.000000e+00> : vector<8xf32>
    %462 = vector.multi_reduction <add>, %461, %cst_181 [1] : vector<8x32xf32> to vector<8xf32>
    %463 = vector.shape_cast %462 : vector<8xf32> to vector<8x1xf32>
    %cst_182 = arith.constant 3.200000e+01 : f32
    %464 = vector.broadcast %cst_182 : f32 to vector<8x1xf32>
    %465 = arith.divf %463, %464 : vector<8x1xf32>
    %466 = vector.broadcast %458 : vector<8x1xf32> to vector<8x32xf32>
    %467 = arith.subf %454, %466 : vector<8x32xf32>
    %cst_183 = arith.constant 9.99999974E-6 : f32
    %468 = vector.broadcast %cst_183 : f32 to vector<8x1xf32>
    %469 = arith.addf %465, %468 : vector<8x1xf32>
    %470 = math.rsqrt %469 : vector<8x1xf32>
    %471 = vector.broadcast %470 : vector<8x1xf32> to vector<8x32xf32>
    %472 = arith.mulf %467, %471 : vector<8x32xf32>
    %473 = vector.broadcast %440 : vector<1x32xf32> to vector<8x32xf32>
    %474 = arith.mulf %472, %473 : vector<8x32xf32>
    %475 = vector.broadcast %441 : vector<1x32xf32> to vector<8x32xf32>
    %476 = arith.addf %474, %475 : vector<8x32xf32>
    %477 = arith.addf %3, %453 : vector<8x32xf32>
    %cst_184 = arith.constant 0.000000e+00 : f32
    %478 = vector.broadcast %cst_184 : f32 to vector<8x32xf32>
    %479 = arith.cmpf ogt, %477, %478 : vector<8x32xf32>
    %480 = math.exp %477 : vector<8x32xf32>
    %cst_185 = arith.constant 1.000000e+00 : f32
    %481 = vector.broadcast %cst_185 : f32 to vector<8x32xf32>
    %482 = arith.subf %480, %481 : vector<8x32xf32>
    %483 = arith.select %479, %477, %482 : vector<8x32xi1>, vector<8x32xf32>
    %cst_186 = arith.constant 1.000000e+00 : f32
    %484 = vector.broadcast %cst_186 : f32 to vector<8x32xf32>
    %485 = arith.addf %483, %484 : vector<8x32xf32>
    %cst_187 = arith.constant dense<0.000000e+00> : vector<8xf32>
    %486 = vector.multi_reduction <add>, %485, %cst_187 [1] : vector<8x32xf32> to vector<8xf32>
    %487 = vector.shape_cast %486 : vector<8xf32> to vector<8x1xf32>
    %cst_188 = arith.constant 3.200000e+01 : f32
    %488 = vector.broadcast %cst_188 : f32 to vector<8x1xf32>
    %489 = arith.divf %487, %488 : vector<8x1xf32>
    %490 = vector.broadcast %489 : vector<8x1xf32> to vector<8x32xf32>
    %491 = arith.subf %485, %490 : vector<8x32xf32>
    %492 = arith.mulf %491, %491 : vector<8x32xf32>
    %cst_189 = arith.constant dense<0.000000e+00> : vector<8xf32>
    %493 = vector.multi_reduction <add>, %492, %cst_189 [1] : vector<8x32xf32> to vector<8xf32>
    %494 = vector.shape_cast %493 : vector<8xf32> to vector<8x1xf32>
    %cst_190 = arith.constant 3.200000e+01 : f32
    %495 = vector.broadcast %cst_190 : f32 to vector<8x1xf32>
    %496 = arith.divf %494, %495 : vector<8x1xf32>
    %497 = vector.broadcast %489 : vector<8x1xf32> to vector<8x32xf32>
    %498 = arith.subf %485, %497 : vector<8x32xf32>
    %cst_191 = arith.constant 9.99999974E-6 : f32
    %499 = vector.broadcast %cst_191 : f32 to vector<8x1xf32>
    %500 = arith.addf %496, %499 : vector<8x1xf32>
    %501 = math.rsqrt %500 : vector<8x1xf32>
    %502 = vector.broadcast %501 : vector<8x1xf32> to vector<8x32xf32>
    %503 = arith.mulf %498, %502 : vector<8x32xf32>
    %504 = vector.broadcast %440 : vector<1x32xf32> to vector<8x32xf32>
    %505 = arith.mulf %503, %504 : vector<8x32xf32>
    %506 = vector.broadcast %441 : vector<1x32xf32> to vector<8x32xf32>
    %507 = arith.addf %505, %506 : vector<8x32xf32>
    %c0_192 = arith.constant 0 : index
    %c0_193 = arith.constant 0 : index
    %508 = vector.load %arg26[%c0_192, %c0_193] : memref<1x32xf32, #tpu.memory_space<vmem>>, vector<1x32xf32>
    %c0_194 = arith.constant 0 : index
    %c0_195 = arith.constant 0 : index
    %509 = vector.load %arg27[%c0_194, %c0_195] : memref<1x32xf32, #tpu.memory_space<vmem>>, vector<1x32xf32>
    %c0_196 = arith.constant 0 : index
    %c0_197 = arith.constant 0 : index
    %510 = vector.load %arg18[%c0_196, %c0_197] : memref<32x64xbf16, #tpu.memory_space<vmem>>, vector<32x64xbf16>
    %511 = arith.truncf %476 : vector<8x32xf32> to vector<8x32xbf16>
    %cst_198 = arith.constant dense<0.000000e+00> : vector<8x64xf32>
    %512 = tpu.matmul %511, %510, %cst_198 {dimension_numbers = #tpu.dot_dimension_numbers<[1], [0], [0], [1], [0, 0, 1, 1], [], []>} : vector<8x32xbf16>, vector<32x64xbf16>, vector<8x64xf32> -> vector<8x64xf32>
    %c0_199 = arith.constant 0 : index
    %c0_200 = arith.constant 0 : index
    %513 = vector.load %arg19[%c0_199, %c0_200] : memref<1x64xf32, #tpu.memory_space<vmem>>, vector<1x64xf32>
    %514 = vector.broadcast %513 : vector<1x64xf32> to vector<8x64xf32>
    %515 = arith.addf %512, %514 : vector<8x64xf32>
    %cst_201 = arith.constant 0.000000e+00 : f32
    %516 = vector.broadcast %cst_201 : f32 to vector<8x64xf32>
    %517 = arith.maximumf %515, %516 : vector<8x64xf32>
    %c0_202 = arith.constant 0 : index
    %c0_203 = arith.constant 0 : index
    %518 = vector.load %arg20[%c0_202, %c0_203] : memref<64x32xbf16, #tpu.memory_space<vmem>>, vector<64x32xbf16>
    %519 = arith.truncf %517 : vector<8x64xf32> to vector<8x64xbf16>
    %cst_204 = arith.constant dense<0.000000e+00> : vector<8x32xf32>
    %520 = tpu.matmul %519, %518, %cst_204 {dimension_numbers = #tpu.dot_dimension_numbers<[1], [0], [0], [1], [0, 0, 1, 1], [], []>} : vector<8x64xbf16>, vector<64x32xbf16>, vector<8x32xf32> -> vector<8x32xf32>
    %c0_205 = arith.constant 0 : index
    %c0_206 = arith.constant 0 : index
    %521 = vector.load %arg21[%c0_205, %c0_206] : memref<1x32xf32, #tpu.memory_space<vmem>>, vector<1x32xf32>
    %522 = vector.broadcast %521 : vector<1x32xf32> to vector<8x32xf32>
    %523 = arith.addf %520, %522 : vector<8x32xf32>
    %c0_207 = arith.constant 0 : index
    %c0_208 = arith.constant 0 : index
    %524 = vector.load %arg22[%c0_207, %c0_208] : memref<32x64xbf16, #tpu.memory_space<vmem>>, vector<32x64xbf16>
    %525 = arith.truncf %507 : vector<8x32xf32> to vector<8x32xbf16>
    %cst_209 = arith.constant dense<0.000000e+00> : vector<8x64xf32>
    %526 = tpu.matmul %525, %524, %cst_209 {dimension_numbers = #tpu.dot_dimension_numbers<[1], [0], [0], [1], [0, 0, 1, 1], [], []>} : vector<8x32xbf16>, vector<32x64xbf16>, vector<8x64xf32> -> vector<8x64xf32>
    %c0_210 = arith.constant 0 : index
    %c0_211 = arith.constant 0 : index
    %527 = vector.load %arg23[%c0_210, %c0_211] : memref<1x64xf32, #tpu.memory_space<vmem>>, vector<1x64xf32>
    %528 = vector.broadcast %527 : vector<1x64xf32> to vector<8x64xf32>
    %529 = arith.addf %526, %528 : vector<8x64xf32>
    %cst_212 = arith.constant 0.000000e+00 : f32
    %530 = vector.broadcast %cst_212 : f32 to vector<8x64xf32>
    %531 = arith.maximumf %529, %530 : vector<8x64xf32>
    %c0_213 = arith.constant 0 : index
    %c0_214 = arith.constant 0 : index
    %532 = vector.load %arg24[%c0_213, %c0_214] : memref<64x32xbf16, #tpu.memory_space<vmem>>, vector<64x32xbf16>
    %533 = arith.truncf %531 : vector<8x64xf32> to vector<8x64xbf16>
    %cst_215 = arith.constant dense<0.000000e+00> : vector<8x32xf32>
    %534 = tpu.matmul %533, %532, %cst_215 {dimension_numbers = #tpu.dot_dimension_numbers<[1], [0], [0], [1], [0, 0, 1, 1], [], []>} : vector<8x64xbf16>, vector<64x32xbf16>, vector<8x32xf32> -> vector<8x32xf32>
    %c0_216 = arith.constant 0 : index
    %c0_217 = arith.constant 0 : index
    %535 = vector.load %arg25[%c0_216, %c0_217] : memref<1x32xf32, #tpu.memory_space<vmem>>, vector<1x32xf32>
    %536 = vector.broadcast %535 : vector<1x32xf32> to vector<8x32xf32>
    %537 = arith.addf %534, %536 : vector<8x32xf32>
    %cst_218 = arith.constant dense<0.000000e+00> : vector<8xf32>
    %538 = vector.multi_reduction <add>, %523, %cst_218 [1] : vector<8x32xf32> to vector<8xf32>
    %539 = vector.shape_cast %538 : vector<8xf32> to vector<8x1xf32>
    %cst_219 = arith.constant 3.200000e+01 : f32
    %540 = vector.broadcast %cst_219 : f32 to vector<8x1xf32>
    %541 = arith.divf %539, %540 : vector<8x1xf32>
    %542 = vector.broadcast %541 : vector<8x1xf32> to vector<8x32xf32>
    %543 = arith.subf %523, %542 : vector<8x32xf32>
    %544 = arith.mulf %543, %543 : vector<8x32xf32>
    %cst_220 = arith.constant dense<0.000000e+00> : vector<8xf32>
    %545 = vector.multi_reduction <add>, %544, %cst_220 [1] : vector<8x32xf32> to vector<8xf32>
    %546 = vector.shape_cast %545 : vector<8xf32> to vector<8x1xf32>
    %cst_221 = arith.constant 3.200000e+01 : f32
    %547 = vector.broadcast %cst_221 : f32 to vector<8x1xf32>
    %548 = arith.divf %546, %547 : vector<8x1xf32>
    %549 = vector.broadcast %541 : vector<8x1xf32> to vector<8x32xf32>
    %550 = arith.subf %523, %549 : vector<8x32xf32>
    %cst_222 = arith.constant 9.99999974E-6 : f32
    %551 = vector.broadcast %cst_222 : f32 to vector<8x1xf32>
    %552 = arith.addf %548, %551 : vector<8x1xf32>
    %553 = math.rsqrt %552 : vector<8x1xf32>
    %554 = vector.broadcast %553 : vector<8x1xf32> to vector<8x32xf32>
    %555 = arith.mulf %550, %554 : vector<8x32xf32>
    %556 = vector.broadcast %508 : vector<1x32xf32> to vector<8x32xf32>
    %557 = arith.mulf %555, %556 : vector<8x32xf32>
    %558 = vector.broadcast %509 : vector<1x32xf32> to vector<8x32xf32>
    %559 = arith.addf %557, %558 : vector<8x32xf32>
    %cst_223 = arith.constant 0.000000e+00 : f32
    %560 = vector.broadcast %cst_223 : f32 to vector<8x32xf32>
    %561 = arith.cmpf ogt, %537, %560 : vector<8x32xf32>
    %562 = math.exp %537 : vector<8x32xf32>
    %cst_224 = arith.constant 1.000000e+00 : f32
    %563 = vector.broadcast %cst_224 : f32 to vector<8x32xf32>
    %564 = arith.subf %562, %563 : vector<8x32xf32>
    %565 = arith.select %561, %537, %564 : vector<8x32xi1>, vector<8x32xf32>
    %cst_225 = arith.constant 1.000000e+00 : f32
    %566 = vector.broadcast %cst_225 : f32 to vector<8x32xf32>
    %567 = arith.addf %565, %566 : vector<8x32xf32>
    %cst_226 = arith.constant dense<0.000000e+00> : vector<8xf32>
    %568 = vector.multi_reduction <add>, %567, %cst_226 [1] : vector<8x32xf32> to vector<8xf32>
    %569 = vector.shape_cast %568 : vector<8xf32> to vector<8x1xf32>
    %cst_227 = arith.constant 3.200000e+01 : f32
    %570 = vector.broadcast %cst_227 : f32 to vector<8x1xf32>
    %571 = arith.divf %569, %570 : vector<8x1xf32>
    %572 = vector.broadcast %571 : vector<8x1xf32> to vector<8x32xf32>
    %573 = arith.subf %567, %572 : vector<8x32xf32>
    %574 = arith.mulf %573, %573 : vector<8x32xf32>
    %cst_228 = arith.constant dense<0.000000e+00> : vector<8xf32>
    %575 = vector.multi_reduction <add>, %574, %cst_228 [1] : vector<8x32xf32> to vector<8xf32>
    %576 = vector.shape_cast %575 : vector<8xf32> to vector<8x1xf32>
    %cst_229 = arith.constant 3.200000e+01 : f32
    %577 = vector.broadcast %cst_229 : f32 to vector<8x1xf32>
    %578 = arith.divf %576, %577 : vector<8x1xf32>
    %579 = vector.broadcast %571 : vector<8x1xf32> to vector<8x32xf32>
    %580 = arith.subf %567, %579 : vector<8x32xf32>
    %cst_230 = arith.constant 9.99999974E-6 : f32
    %581 = vector.broadcast %cst_230 : f32 to vector<8x1xf32>
    %582 = arith.addf %578, %581 : vector<8x1xf32>
    %583 = math.rsqrt %582 : vector<8x1xf32>
    %584 = vector.broadcast %583 : vector<8x1xf32> to vector<8x32xf32>
    %585 = arith.mulf %580, %584 : vector<8x32xf32>
    %586 = vector.broadcast %508 : vector<1x32xf32> to vector<8x32xf32>
    %587 = arith.mulf %585, %586 : vector<8x32xf32>
    %588 = vector.broadcast %509 : vector<1x32xf32> to vector<8x32xf32>
    %589 = arith.addf %587, %588 : vector<8x32xf32>
    %c0_231 = arith.constant 0 : index
    %c0_232 = arith.constant 0 : index
    %c0_233 = arith.constant 0 : index
    %590 = vector.load %arg28[%c0_231, %c0_232, %c0_233] : memref<1x8x32xf32, #tpu.memory_space<vmem>>, vector<1x8x32xf32>
    %591 = vector.shape_cast %590 : vector<1x8x32xf32> to vector<8x32xf32>
    %592 = vector.shape_cast %559 : vector<8x32xf32> to vector<1x8x32xf32>
    tpu.vector_store %arg28[%c0_231, %c0_232, %c0_233], %592 {strides = array<i32>} : memref<1x8x32xf32, #tpu.memory_space<vmem>>, vector<1x8x32xf32>,
    %c0_234 = arith.constant 0 : index
    %c0_235 = arith.constant 0 : index
    %c0_236 = arith.constant 0 : index
    %593 = vector.load %arg29[%c0_234, %c0_235, %c0_236] : memref<1x8x32xf32, #tpu.memory_space<vmem>>, vector<1x8x32xf32>
    %594 = vector.shape_cast %593 : vector<1x8x32xf32> to vector<8x32xf32>
    %595 = vector.shape_cast %589 : vector<8x32xf32> to vector<1x8x32xf32>
    tpu.vector_store %arg29[%c0_234, %c0_235, %c0_236], %595 {strides = array<i32>} : memref<1x8x32xf32, #tpu.memory_space<vmem>>, vector<1x8x32xf32>,
    return
  }
  func.func @transform_0(%arg0: i32, %arg1: memref<4xf32, #tpu.memory_space<smem>>) -> (i32, i32, i32) {
    %c0_i32 = arith.constant 0 : i32
    %c0_i32_0 = arith.constant 0 : i32
    %c0_i32_1 = arith.constant 0 : i32
    return %arg0, %c0_i32, %c0_i32_0 : i32, i32, i32
  }
  func.func @transform_1(%arg0: i32, %arg1: memref<4xf32, #tpu.memory_space<smem>>) -> (i32, i32, i32) {
    %c0_i32 = arith.constant 0 : i32
    %c0_i32_0 = arith.constant 0 : i32
    %c0_i32_1 = arith.constant 0 : i32
    return %arg0, %c0_i32, %c0_i32_0 : i32, i32, i32
  }
  func.func @transform_2(%arg0: i32, %arg1: memref<4xf32, #tpu.memory_space<smem>>) -> (i32, i32, i32) {
    %c0_i32 = arith.constant 0 : i32
    %c0_i32_0 = arith.constant 0 : i32
    %c0_i32_1 = arith.constant 0 : i32
    return %arg0, %c0_i32, %c0_i32_0 : i32, i32, i32
  }
  func.func @transform_3(%arg0: i32, %arg1: memref<4xf32, #tpu.memory_space<smem>>) -> (i32, i32, i32) {
    %c0_i32 = arith.constant 0 : i32
    %c0_i32_0 = arith.constant 0 : i32
    %c0_i32_1 = arith.constant 0 : i32
    return %arg0, %c0_i32, %c0_i32_0 : i32, i32, i32
  }
  func.func @transform_4(%arg0: i32, %arg1: memref<4xf32, #tpu.memory_space<smem>>) -> (i32, i32, i32) {
    %c0_i32 = arith.constant 0 : i32
    %c0_i32_0 = arith.constant 0 : i32
    %c0_i32_1 = arith.constant 0 : i32
    return %arg0, %c0_i32, %c0_i32_0 : i32, i32, i32
  }
  func.func @transform_5(%arg0: i32, %arg1: memref<4xf32, #tpu.memory_space<smem>>) -> (i32, i32, i32) {
    %c0_i32 = arith.constant 0 : i32
    %c0_i32_0 = arith.constant 0 : i32
    %c0_i32_1 = arith.constant 0 : i32
    return %arg0, %c0_i32, %c0_i32_0 : i32, i32, i32
  }
  func.func @transform_6(%arg0: i32, %arg1: memref<4xf32, #tpu.memory_space<smem>>) -> (i32, i32, i32) {
    %c0_i32 = arith.constant 0 : i32
    %c0_i32_0 = arith.constant 0 : i32
    %c0_i32_1 = arith.constant 0 : i32
    %c0_i32_2 = arith.constant 0 : i32
    return %c0_i32, %c0_i32_0, %c0_i32_1 : i32, i32, i32
  }
  func.func @transform_7(%arg0: i32, %arg1: memref<4xf32, #tpu.memory_space<smem>>) -> (i32, i32, i32) {
    %c0_i32 = arith.constant 0 : i32
    %c0_i32_0 = arith.constant 0 : i32
    %c0_i32_1 = arith.constant 0 : i32
    %c0_i32_2 = arith.constant 0 : i32
    return %c0_i32, %c0_i32_0, %c0_i32_1 : i32, i32, i32
  }
  func.func @transform_8(%arg0: i32, %arg1: memref<4xf32, #tpu.memory_space<smem>>) -> (i32, i32, i32) {
    %c0_i32 = arith.constant 0 : i32
    %c0_i32_0 = arith.constant 0 : i32
    %c0_i32_1 = arith.constant 0 : i32
    %c0_i32_2 = arith.constant 0 : i32
    return %c0_i32, %c0_i32_0, %c0_i32_1 : i32, i32, i32
  }
  func.func @transform_9(%arg0: i32, %arg1: memref<4xf32, #tpu.memory_space<smem>>) -> (i32, i32, i32) {
    %c0_i32 = arith.constant 0 : i32
    %c0_i32_0 = arith.constant 0 : i32
    %c0_i32_1 = arith.constant 0 : i32
    %c0_i32_2 = arith.constant 0 : i32
    return %c0_i32, %c0_i32_0, %c0_i32_1 : i32, i32, i32
  }
  func.func @transform_10(%arg0: i32, %arg1: memref<4xf32, #tpu.memory_space<smem>>) -> (i32, i32) {
    %c0_i32 = arith.constant 0 : i32
    %c0_i32_0 = arith.constant 0 : i32
    %c0_i32_1 = arith.constant 0 : i32
    return %c0_i32, %c0_i32_0 : i32, i32
  }
  func.func @transform_11(%arg0: i32, %arg1: memref<4xf32, #tpu.memory_space<smem>>) -> (i32, i32) {
    %c0_i32 = arith.constant 0 : i32
    %c0_i32_0 = arith.constant 0 : i32
    %c0_i32_1 = arith.constant 0 : i32
    return %c0_i32, %c0_i32_0 : i32, i32
  }
  func.func @transform_12(%arg0: i32, %arg1: memref<4xf32, #tpu.memory_space<smem>>) -> (i32, i32) {
    %c0_i32 = arith.constant 0 : i32
    %c0_i32_0 = arith.constant 0 : i32
    %c0_i32_1 = arith.constant 0 : i32
    return %c0_i32, %c0_i32_0 : i32, i32
  }
  func.func @transform_13(%arg0: i32, %arg1: memref<4xf32, #tpu.memory_space<smem>>) -> (i32, i32) {
    %c0_i32 = arith.constant 0 : i32
    %c0_i32_0 = arith.constant 0 : i32
    %c0_i32_1 = arith.constant 0 : i32
    return %c0_i32, %c0_i32_0 : i32, i32
  }
  func.func @transform_14(%arg0: i32, %arg1: memref<4xf32, #tpu.memory_space<smem>>) -> (i32, i32) {
    %c0_i32 = arith.constant 0 : i32
    %c0_i32_0 = arith.constant 0 : i32
    %c0_i32_1 = arith.constant 0 : i32
    return %c0_i32, %c0_i32_0 : i32, i32
  }
  func.func @transform_15(%arg0: i32, %arg1: memref<4xf32, #tpu.memory_space<smem>>) -> (i32, i32) {
    %c0_i32 = arith.constant 0 : i32
    %c0_i32_0 = arith.constant 0 : i32
    %c0_i32_1 = arith.constant 0 : i32
    return %c0_i32, %c0_i32_0 : i32, i32
  }
  func.func @transform_16(%arg0: i32, %arg1: memref<4xf32, #tpu.memory_space<smem>>) -> (i32, i32) {
    %c0_i32 = arith.constant 0 : i32
    %c0_i32_0 = arith.constant 0 : i32
    %c0_i32_1 = arith.constant 0 : i32
    return %c0_i32, %c0_i32_0 : i32, i32
  }
  func.func @transform_17(%arg0: i32, %arg1: memref<4xf32, #tpu.memory_space<smem>>) -> (i32, i32) {
    %c0_i32 = arith.constant 0 : i32
    %c0_i32_0 = arith.constant 0 : i32
    %c0_i32_1 = arith.constant 0 : i32
    return %c0_i32, %c0_i32_0 : i32, i32
  }
  func.func @transform_18(%arg0: i32, %arg1: memref<4xf32, #tpu.memory_space<smem>>) -> (i32, i32) {
    %c0_i32 = arith.constant 0 : i32
    %c0_i32_0 = arith.constant 0 : i32
    %c0_i32_1 = arith.constant 0 : i32
    return %c0_i32, %c0_i32_0 : i32, i32
  }
  func.func @transform_19(%arg0: i32, %arg1: memref<4xf32, #tpu.memory_space<smem>>) -> (i32, i32) {
    %c0_i32 = arith.constant 0 : i32
    %c0_i32_0 = arith.constant 0 : i32
    %c0_i32_1 = arith.constant 0 : i32
    return %c0_i32, %c0_i32_0 : i32, i32
  }
  func.func @transform_20(%arg0: i32, %arg1: memref<4xf32, #tpu.memory_space<smem>>) -> (i32, i32) {
    %c0_i32 = arith.constant 0 : i32
    %c0_i32_0 = arith.constant 0 : i32
    %c0_i32_1 = arith.constant 0 : i32
    return %c0_i32, %c0_i32_0 : i32, i32
  }
  func.func @transform_21(%arg0: i32, %arg1: memref<4xf32, #tpu.memory_space<smem>>) -> (i32, i32) {
    %c0_i32 = arith.constant 0 : i32
    %c0_i32_0 = arith.constant 0 : i32
    %c0_i32_1 = arith.constant 0 : i32
    return %c0_i32, %c0_i32_0 : i32, i32
  }
  func.func @transform_22(%arg0: i32, %arg1: memref<4xf32, #tpu.memory_space<smem>>) -> (i32, i32) {
    %c0_i32 = arith.constant 0 : i32
    %c0_i32_0 = arith.constant 0 : i32
    %c0_i32_1 = arith.constant 0 : i32
    return %c0_i32, %c0_i32_0 : i32, i32
  }
  func.func @transform_23(%arg0: i32, %arg1: memref<4xf32, #tpu.memory_space<smem>>) -> (i32, i32) {
    %c0_i32 = arith.constant 0 : i32
    %c0_i32_0 = arith.constant 0 : i32
    %c0_i32_1 = arith.constant 0 : i32
    return %c0_i32, %c0_i32_0 : i32, i32
  }
  func.func @transform_24(%arg0: i32, %arg1: memref<4xf32, #tpu.memory_space<smem>>) -> (i32, i32) {
    %c0_i32 = arith.constant 0 : i32
    %c0_i32_0 = arith.constant 0 : i32
    %c0_i32_1 = arith.constant 0 : i32
    return %c0_i32, %c0_i32_0 : i32, i32
  }
  func.func @transform_25(%arg0: i32, %arg1: memref<4xf32, #tpu.memory_space<smem>>) -> (i32, i32) {
    %c0_i32 = arith.constant 0 : i32
    %c0_i32_0 = arith.constant 0 : i32
    %c0_i32_1 = arith.constant 0 : i32
    return %c0_i32, %c0_i32_0 : i32, i32
  }
  func.func @transform_26(%arg0: i32, %arg1: memref<4xf32, #tpu.memory_space<smem>>) -> (i32, i32, i32) {
    %c0_i32 = arith.constant 0 : i32
    %c0_i32_0 = arith.constant 0 : i32
    %c0_i32_1 = arith.constant 0 : i32
    return %arg0, %c0_i32, %c0_i32_0 : i32, i32, i32
  }
  func.func @transform_27(%arg0: i32, %arg1: memref<4xf32, #tpu.memory_space<smem>>) -> (i32, i32, i32) {
    %c0_i32 = arith.constant 0 : i32
    %c0_i32_0 = arith.constant 0 : i32
    %c0_i32_1 = arith.constant 0 : i32
    return %arg0, %c0_i32, %c0_i32_0 : i32, i32, i32
  }
}

</mosaic_0001>

<llo_original>
// kernel: tpu_custom_call.1
$region0: #{tpu_custom_call.1}
  #allocation0 [shape = 'u32[]', space=smem, size = 0x4, offset = 0x4, fixed_abs, tag = 'smem constant byte address 0x4 - core index']
  #allocation1 [shape = 'u32[144,128]{1,0:T(1,128)}', space=vmem, size = 0x12000, scoped, tag = 'internal scratch']
  #allocation2 [shape = 's32[1]{0}', space=sflag, size = 0x4, scoped, tag = 'scoped memory for tpu_custom_call.1']
  #allocation3 [shape = 'u8[512]{0}', space=smem, size = 0x200, scoped, tag = 'prefetched SMEM operand 0']
  %s0 = inlined_call_operand.hbm [shape: f32[4], index: 0, kind: input, shape index: {}]
  %s1 = inlined_call_operand.hbm [shape: f32[2,8,32], index: 1, kind: input, shape index: {}]
  %s2 = inlined_call_operand.hbm [shape: f32[2,8,32], index: 2, kind: input, shape index: {}]
  %s3 = inlined_call_operand.hbm [shape: f32[2,8,32], index: 3, kind: input, shape index: {}]
  %s4 = inlined_call_operand.hbm [shape: f32[2,8,32], index: 4, kind: input, shape index: {}]
  %s5 = inlined_call_operand.hbm [shape: f32[2,8,32], index: 5, kind: input, shape index: {}]
  %s6 = inlined_call_operand.hbm [shape: f32[2,8,32], index: 6, kind: input, shape index: {}]
  %s7 = inlined_call_operand.hbm [shape: bf16[3,32,32], index: 7, kind: input, shape index: {}]
  %s8 = inlined_call_operand.hbm [shape: f32[3,1,32], index: 8, kind: input, shape index: {}]
  %s9 = inlined_call_operand.hbm [shape: bf16[3,32,32], index: 9, kind: input, shape index: {}]
  %s10 = inlined_call_operand.hbm [shape: f32[3,1,32], index: 10, kind: input, shape index: {}]
  %s11 = inlined_call_operand.hbm [shape: bf16[32,32], index: 11, kind: input, shape index: {}]
  %s12 = inlined_call_operand.hbm [shape: f32[1,32], index: 12, kind: input, shape index: {}]
  %s13 = inlined_call_operand.hbm [shape: bf16[32,32], index: 13, kind: input, shape index: {}]
  %s14 = inlined_call_operand.hbm [shape: f32[1,32], index: 14, kind: input, shape index: {}]
  %s15 = inlined_call_operand.hbm [shape: f32[1,32], index: 15, kind: input, shape index: {}]
  %s16 = inlined_call_operand.hbm [shape: f32[1,32], index: 16, kind: input, shape index: {}]
  %s17 = inlined_call_operand.hbm [shape: bf16[32,64], index: 17, kind: input, shape index: {}]
  %s18 = inlined_call_operand.hbm [shape: f32[1,64], index: 18, kind: input, shape index: {}]
  %s19 = inlined_call_operand.hbm [shape: bf16[64,32], index: 19, kind: input, shape index: {}]
  %s20 = inlined_call_operand.hbm [shape: f32[1,32], index: 20, kind: input, shape index: {}]
  %s21 = inlined_call_operand.hbm [shape: bf16[32,64], index: 21, kind: input, shape index: {}]
  %s22 = inlined_call_operand.hbm [shape: f32[1,64], index: 22, kind: input, shape index: {}]
  %s23 = inlined_call_operand.hbm [shape: bf16[64,32], index: 23, kind: input, shape index: {}]
  %s24 = inlined_call_operand.hbm [shape: f32[1,32], index: 24, kind: input, shape index: {}]
  %s25 = inlined_call_operand.hbm [shape: f32[1,32], index: 25, kind: input, shape index: {}]
  %s26 = inlined_call_operand.hbm [shape: f32[1,32], index: 26, kind: input, shape index: {}]
  %s27 = inlined_call_operand.hbm [shape: f32[2,8,32], index: 27, kind: output, shape index: {0}]
  %s28 = inlined_call_operand.hbm [shape: f32[2,8,32], index: 28, kind: output, shape index: {1}]
  %29 = xla_tuple %s27, %s28
  %s30 = sld [smem:[#allocation0]]
  $region249: #{tpu_custom_call.1} parent=0
    _
  %s32 = ssub.s32 1, %s30
  %s33 = scalar_select 0, %s32, %s30
  %35 = dma.hbm_to_smem %s0, 16, [#allocation3], [#allocation2]
  %36 = dma.done [#allocation2], 16
  %37 = sfence
  $region1: #{tpu_custom_call.1} parent=0
    #allocation4 [shape = 'u8[8192]{0}', space=vmem, size = 0x2000, scoped, tag = 'input window, operand 1']
    #allocation5 [shape = 's32[2]{0}', space=sflag, size = 0x8, scoped, tag = 'scoped memory for tpu_custom_call.1']
    #allocation6 [shape = 's32[2]{0}', space=sflag, size = 0x8, scoped, tag = 'scoped memory for tpu_custom_call.1']
    #allocation7 [shape = 'u8[8192]{0}', space=vmem, size = 0x2000, scoped, tag = 'input window, operand 2']
    #allocation8 [shape = 's32[2]{0}', space=sflag, size = 0x8, scoped, tag = 'scoped memory for tpu_custom_call.1']
    #allocation9 [shape = 'u8[8192]{0}', space=vmem, size = 0x2000, scoped, tag = 'input window, operand 3']
    #allocation10 [shape = 'u8[8192]{0}', space=vmem, size = 0x2000, scoped, tag = 'input window, operand 4']
    #allocation11 [shape = 's32[2]{0}', space=sflag, size = 0x8, scoped, tag = 'scoped memory for tpu_custom_call.1']
    #allocation12 [shape = 'u8[8192]{0}', space=vmem, size = 0x2000, scoped, tag = 'input window, operand 5']
    #allocation13 [shape = 'u8[8192]{0}', space=vmem, size = 0x2000, scoped, tag = 'input window, operand 6']
    #allocation14 [shape = 's32[2]{0}', space=sflag, size = 0x8, scoped, tag = 'scoped memory for tpu_custom_call.1']
    #allocation15 [shape = 'u8[24576]{0}', space=vmem, size = 0x6000, scoped, tag = 'input window, operand 7, single buffered']
    #allocation16 [shape = 'u8[1536]{0}', space=vmem, size = 0x800, scoped, tag = 'input window, operand 8, single buffered']
    #allocation17 [shape = 's32[1]{0}', space=sflag, size = 0x4, scoped, tag = 'scoped memory for tpu_custom_call.1']
    #allocation18 [shape = 'u8[24576]{0}', space=vmem, size = 0x6000, scoped, tag = 'input window, operand 9, single buffered']
    #allocation19 [shape = 'u8[1536]{0}', space=vmem, size = 0x800, scoped, tag = 'input window, operand 10, single buffered']
    #allocation20 [shape = 's32[1]{0}', space=sflag, size = 0x4, scoped, tag = 'scoped memory for tpu_custom_call.1']
    #allocation21 [shape = 'u8[8192]{0}', space=vmem, size = 0x2000, scoped, tag = 'input window, operand 11, single buffered']
    #allocation22 [shape = 'u8[512]{0}', space=vmem, size = 0x400, scoped, tag = 'input window, operand 12, single buffered']
    #allocation23 [shape = 's32[1]{0}', space=sflag, size = 0x4, scoped, tag = 'scoped memory for tpu_custom_call.1']
    #allocation24 [shape = 'u8[8192]{0}', space=vmem, size = 0x2000, scoped, tag = 'input window, operand 13, single buffered']
    #allocation25 [shape = 'u8[512]{0}', space=vmem, size = 0x400, scoped, tag = 'input window, operand 14, single buffered']
    #allocation26 [shape = 's32[1]{0}', space=sflag, size = 0x4, scoped, tag = 'scoped memory for tpu_custom_call.1']
    #allocation27 [shape = 'u8[512]{0}', space=vmem, size = 0x400, scoped, tag = 'input window, operand 15, single buffered']
    #allocation28 [shape = 'u8[512]{0}', space=vmem, size = 0x400, scoped, tag = 'input window, operand 16, single buffered']
    #allocation29 [shape = 's32[1]{0}', space=sflag, size = 0x4, scoped, tag = 'scoped memory for tpu_custom_call.1']
    #allocation30 [shape = 'u8[8192]{0}', space=vmem, size = 0x2000, scoped, tag = 'input window, operand 17, single buffered']
    #allocation31 [shape = 'u8[512]{0}', space=vmem, size = 0x400, scoped, tag = 'input window, operand 18, single buffered']
    #allocation32 [shape = 's32[1]{0}', space=sflag, size = 0x4, scoped, tag = 'scoped memory for tpu_custom_call.1']
    #allocation33 [shape = 'u8[16384]{0}', space=vmem, size = 0x4000, scoped, tag = 'input window, operand 19, single buffered']
    #allocation34 [shape = 'u8[512]{0}', space=vmem, size = 0x400, scoped, tag = 'input window, operand 20, single buffered']
    #allocation35 [shape = 's32[1]{0}', space=sflag, size = 0x4, scoped, tag = 'scoped memory for tpu_custom_call.1']
    #allocation36 [shape = 'u8[8192]{0}', space=vmem, size = 0x2000, scoped, tag = 'input window, operand 21, single buffered']
    #allocation37 [shape = 'u8[512]{0}', space=vmem, size = 0x400, scoped, tag = 'input window, operand 22, single buffered']
    #allocation38 [shape = 's32[1]{0}', space=sflag, size = 0x4, scoped, tag = 'scoped memory for tpu_custom_call.1']
    #allocation39 [shape = 'u8[16384]{0}', space=vmem, size = 0x4000, scoped, tag = 'input window, operand 23, single buffered']
    #allocation40 [shape = 'u8[512]{0}', space=vmem, size = 0x400, scoped, tag = 'input window, operand 24, single buffered']
    #allocation41 [shape = 's32[1]{0}', space=sflag, size = 0x4, scoped, tag = 'scoped memory for tpu_custom_call.1']
    #allocation42 [shape = 'u8[512]{0}', space=vmem, size = 0x400, scoped, tag = 'input window, operand 25, single buffered']
    #allocation43 [shape = 'u8[512]{0}', space=vmem, size = 0x400, scoped, tag = 'input window, operand 26, single buffered']
    #allocation44 [shape = 's32[1]{0}', space=sflag, size = 0x4, scoped, tag = 'scoped memory for tpu_custom_call.1']
    #allocation45 [shape = 'u8[8192]{0}', space=vmem, size = 0x2000, scoped, tag = 'output window, operand 0']
    #allocation46 [shape = 'u8[8192]{0}', space=vmem, size = 0x2000, scoped, tag = 'output window, operand 1']
    #allocation47 [shape = 's32[2]{0}', space=sflag, size = 0x8, scoped, tag = 'scoped memory for tpu_custom_call.1']
    %38 = vsyncpa [#allocation5], 0
    %s39 = scalar_lea.sflag [#allocation5], 1
    %40 = vsyncpa %s39, 0
    %41 = vsyncpa [#allocation8], 0
    %s42 = scalar_lea.sflag [#allocation8], 1
    %43 = vsyncpa %s42, 0
    %44 = vsyncpa [#allocation11], 0
    %s45 = scalar_lea.sflag [#allocation11], 1
    %46 = vsyncpa %s45, 0
    %47 = vsyncpa [#allocation14], 0
    %s48 = scalar_lea.sflag [#allocation14], 1
    %49 = vsyncpa %s48, 0
    %50 = vsyncpa [#allocation17], 0
    %51 = vsyncpa [#allocation20], 0
    %52 = vsyncpa [#allocation23], 0
    %53 = vsyncpa [#allocation26], 0
    %54 = vsyncpa [#allocation29], 0
    %55 = vsyncpa [#allocation32], 0
    %56 = vsyncpa [#allocation35], 0
    %57 = vsyncpa [#allocation38], 0
    %58 = vsyncpa [#allocation41], 0
    %59 = vsyncpa [#allocation44], 0
    %60 = vsyncpa [#allocation6], 0
    %s61 = scalar_lea.sflag [#allocation6], 1
    %62 = vsyncpa %s61, 0
    %63 = vsyncpa [#allocation47], 0
    %s64 = scalar_lea.sflag [#allocation47], 1
    %65 = vsyncpa %s64, 0
    loop: start=0, step=1, limit=4
    $region2: #{tpu_custom_call.1} parent=1 // loop_pre_header
      _
    $region3: #{tpu_custom_call.1} parent=1 // loop_header
      %s67 = sphi 0, %s71
      %p68 = scmp.ge.s32.totalorder %s67, 4
      %s77 = sphi 0, %s79
      %s80 = sphi 0, %s77
      %s81 = sphi 0, %s80
      %s97 = sphi 0, %s81
      %s103 = sphi 0, %s105
      %s106 = sphi 0, %s103
      %s107 = sphi 0, %s106
      %s123 = sphi 0, %s107
      %s129 = sphi 0, %s131
      %s132 = sphi 0, %s129
      %s133 = sphi 0, %s132
      %s149 = sphi 0, %s133
      %s155 = sphi 0, %s157
      %s158 = sphi 0, %s155
      %s159 = sphi 0, %s158
      %s175 = sphi 0, %s159
      %s181 = sphi 0, %s183
      %s184 = sphi 0, %s181
      %s185 = sphi 0, %s184
      %s201 = sphi 0, %s185
      %s207 = sphi 0, %s209
      %s210 = sphi 0, %s207
      %s211 = sphi 0, %s210
      %s227 = sphi 0, %s211
      %s231 = sphi 0, %s231
      %s233 = sphi 0, %s231
      %s234 = sphi 0, %s233
      %s248 = sphi 0, %s234
      %s252 = sphi 0, %s252
      %s254 = sphi 0, %s252
      %s255 = sphi 0, %s254
      %s269 = sphi 0, %s255
      %s273 = sphi 0, %s273
      %s275 = sphi 0, %s273
      %s276 = sphi 0, %s275
      %s290 = sphi 0, %s276
      %s294 = sphi 0, %s294
      %s296 = sphi 0, %s294
      %s297 = sphi 0, %s296
      %s311 = sphi 0, %s297
      %s315 = sphi 0, %s315
      %s317 = sphi 0, %s315
      %s318 = sphi 0, %s317
      %s332 = sphi 0, %s318
      %s336 = sphi 0, %s336
      %s338 = sphi 0, %s336
      %s339 = sphi 0, %s338
      %s353 = sphi 0, %s339
      %s357 = sphi 0, %s357
      %s359 = sphi 0, %s357
      %s360 = sphi 0, %s359
      %s374 = sphi 0, %s360
      %s378 = sphi 0, %s378
      %s380 = sphi 0, %s378
      %s381 = sphi 0, %s380
      %s395 = sphi 0, %s381
      %s399 = sphi 0, %s399
      %s401 = sphi 0, %s399
      %s402 = sphi 0, %s401
      %s416 = sphi 0, %s402
      %s420 = sphi 0, %s420
      %s422 = sphi 0, %s420
      %s423 = sphi 0, %s422
      %s437 = sphi 0, %s423
      %s441 = sphi 0, %s441
      %s443 = sphi 0, %s441
      %s444 = sphi 0, %s443
      %s458 = sphi 0, %s444
      %s462 = sphi 0, %s462
      %s464 = sphi 0, %s462
      %s465 = sphi 0, %s464
      %s479 = sphi 0, %s465
      %s483 = sphi 0, %s483
      %s485 = sphi 0, %s483
      %s486 = sphi 0, %s485
      %s500 = sphi 0, %s486
      %s504 = sphi 0, %s504
      %s506 = sphi 0, %s504
      %s507 = sphi 0, %s506
      %s521 = sphi 0, %s507
      %s525 = sphi 0, %s525
      %s527 = sphi 0, %s525
      %s528 = sphi 0, %s527
      %s542 = sphi 0, %s528
      %s546 = sphi 0, %s546
      %s548 = sphi 0, %s546
      %s549 = sphi 0, %s548
      %s563 = sphi 0, %s549
      %s567 = sphi 0, %s567
      %s569 = sphi 0, %s567
      %s570 = sphi 0, %s569
      %s584 = sphi 0, %s570
      %s588 = sphi 0, %s588
      %s590 = sphi 0, %s588
      %s591 = sphi 0, %s590
      %s605 = sphi 0, %s591
      %s609 = sphi 0, %s609
      %s611 = sphi 0, %s609
      %s612 = sphi 0, %s611
      %s626 = sphi 0, %s612
      %s630 = sphi 0, %s630
      %s632 = sphi 0, %s630
      %s633 = sphi 0, %s632
      %s647 = sphi 0, %s633
      %s653 = sphi 0, %s655
      %s656 = sphi 0, %s653
      %s657 = sphi 0, %s656
      %s673 = sphi 0, %s657
      %s679 = sphi 0, %s681
      %s682 = sphi 0, %s679
      %s683 = sphi 0, %s682
      %s699 = sphi 0, %s683
    $region4: #{tpu_custom_call.1} parent=1 // loop_header_branch
      %70 = sbr.rel (%p68) target = $region8
    $region5: #{tpu_custom_call.1} parent=1 // loop_body
      %s72 = ssub.s32 %s67, 1
      %s73 = ssub.s32 %s67, 2
      %s74 = sadd.s32 %s67, 1
      %s75 = ssub.s32 %s67, %s74
      %p76 = scmp.eq.s32.totalorder %s75, 0
      %s78 = sadd.s32 %s77, 1
      %s79 = scalar_select %p76, %s77, %s78
      %p82 = pneg %p76
      %p83 = scmp.eq.s32.totalorder %s67, 1
      %p84 = por %p82, %p83
      %p85 = scmp.ne.s32.totalorder %s77, %s80
      %p86 = scmp.eq.s32.totalorder %s67, 0
      %p87 = por %p85, %p86
      %p88 = scmp.ne.s32.totalorder %s77, %s80
      %p89 = scmp.eq.s32.totalorder %s72, 1
      %p90 = por %p88, %p89
      %p91 = scmp.ne.s32.totalorder %s80, %s81
      %p92 = scmp.eq.s32.totalorder %s72, 0
      %p93 = por %p91, %p92
      %p94 = scmp.ne.s32.totalorder %s80, %s81
      %p95 = scmp.eq.s32.totalorder %s73, 1
      %p96 = por %p94, %p95
      %p98 = scmp.ne.s32.totalorder %s81, %s97
      %p99 = scmp.eq.s32.totalorder %s73, 0
      %p100 = por %p98, %p99
      %s101 = ssub.s32 %s67, %s74
      %p102 = scmp.eq.s32.totalorder %s101, 0
      %s104 = sadd.s32 %s103, 1
      %s105 = scalar_select %p102, %s103, %s104
      %p108 = pneg %p102
      %p109 = scmp.eq.s32.totalorder %s67, 1
      %p110 = por %p108, %p109
      %p111 = scmp.ne.s32.totalorder %s103, %s106
      %p112 = scmp.eq.s32.totalorder %s67, 0
      %p113 = por %p111, %p112
      %p114 = scmp.ne.s32.totalorder %s103, %s106
      %p115 = scmp.eq.s32.totalorder %s72, 1
      %p116 = por %p114, %p115
      %p117 = scmp.ne.s32.totalorder %s106, %s107
      %p118 = scmp.eq.s32.totalorder %s72, 0
      %p119 = por %p117, %p118
      %p120 = scmp.ne.s32.totalorder %s106, %s107
      %p121 = scmp.eq.s32.totalorder %s73, 1
      %p122 = por %p120, %p121
      %p124 = scmp.ne.s32.totalorder %s107, %s123
      %p125 = scmp.eq.s32.totalorder %s73, 0
      %p126 = por %p124, %p125
      %s127 = ssub.s32 %s67, %s74
      %p128 = scmp.eq.s32.totalorder %s127, 0
      %s130 = sadd.s32 %s129, 1
      %s131 = scalar_select %p128, %s129, %s130
      %p134 = pneg %p128
      %p135 = scmp.eq.s32.totalorder %s67, 1
      %p136 = por %p134, %p135
      %p137 = scmp.ne.s32.totalorder %s129, %s132
      %p138 = scmp.eq.s32.totalorder %s67, 0
      %p139 = por %p137, %p138
      %p140 = scmp.ne.s32.totalorder %s129, %s132
      %p141 = scmp.eq.s32.totalorder %s72, 1
      %p142 = por %p140, %p141
      %p143 = scmp.ne.s32.totalorder %s132, %s133
      %p144 = scmp.eq.s32.totalorder %s72, 0
      %p145 = por %p143, %p144
      %p146 = scmp.ne.s32.totalorder %s132, %s133
      %p147 = scmp.eq.s32.totalorder %s73, 1
      %p148 = por %p146, %p147
      %p150 = scmp.ne.s32.totalorder %s133, %s149
      %p151 = scmp.eq.s32.totalorder %s73, 0
      %p152 = por %p150, %p151
      %s153 = ssub.s32 %s67, %s74
      %p154 = scmp.eq.s32.totalorder %s153, 0
      %s156 = sadd.s32 %s155, 1
      %s157 = scalar_select %p154, %s155, %s156
      %p160 = pneg %p154
      %p161 = scmp.eq.s32.totalorder %s67, 1
      %p162 = por %p160, %p161
      %p163 = scmp.ne.s32.totalorder %s155, %s158
      %p164 = scmp.eq.s32.totalorder %s67, 0
      %p165 = por %p163, %p164
      %p166 = scmp.ne.s32.totalorder %s155, %s158
      %p167 = scmp.eq.s32.totalorder %s72, 1
      %p168 = por %p166, %p167
      %p169 = scmp.ne.s32.totalorder %s158, %s159
      %p170 = scmp.eq.s32.totalorder %s72, 0
      %p171 = por %p169, %p170
      %p172 = scmp.ne.s32.totalorder %s158, %s159
      %p173 = scmp.eq.s32.totalorder %s73, 1
      %p174 = por %p172, %p173
      %p176 = scmp.ne.s32.totalorder %s159, %s175
      %p177 = scmp.eq.s32.totalorder %s73, 0
      %p178 = por %p176, %p177
      %s179 = ssub.s32 %s67, %s74
      %p180 = scmp.eq.s32.totalorder %s179, 0
      %s182 = sadd.s32 %s181, 1
      %s183 = scalar_select %p180, %s181, %s182
      %p186 = pneg %p180
      %p187 = scmp.eq.s32.totalorder %s67, 1
      %p188 = por %p186, %p187
      %p189 = scmp.ne.s32.totalorder %s181, %s184
      %p190 = scmp.eq.s32.totalorder %s67, 0
      %p191 = por %p189, %p190
      %p192 = scmp.ne.s32.totalorder %s181, %s184
      %p193 = scmp.eq.s32.totalorder %s72, 1
      %p194 = por %p192, %p193
      %p195 = scmp.ne.s32.totalorder %s184, %s185
      %p196 = scmp.eq.s32.totalorder %s72, 0
      %p197 = por %p195, %p196
      %p198 = scmp.ne.s32.totalorder %s184, %s185
      %p199 = scmp.eq.s32.totalorder %s73, 1
      %p200 = por %p198, %p199
      %p202 = scmp.ne.s32.totalorder %s185, %s201
      %p203 = scmp.eq.s32.totalorder %s73, 0
      %p204 = por %p202, %p203
      %s205 = ssub.s32 %s67, %s74
      %p206 = scmp.eq.s32.totalorder %s205, 0
      %s208 = sadd.s32 %s207, 1
      %s209 = scalar_select %p206, %s207, %s208
      %p212 = pneg %p206
      %p213 = scmp.eq.s32.totalorder %s67, 1
      %p214 = por %p212, %p213
      %p215 = scmp.ne.s32.totalorder %s207, %s210
      %p216 = scmp.eq.s32.totalorder %s67, 0
      %p217 = por %p215, %p216
      %p218 = scmp.ne.s32.totalorder %s207, %s210
      %p219 = scmp.eq.s32.totalorder %s72, 1
      %p220 = por %p218, %p219
      %p221 = scmp.ne.s32.totalorder %s210, %s211
      %p222 = scmp.eq.s32.totalorder %s72, 0
      %p223 = por %p221, %p222
      %p224 = scmp.ne.s32.totalorder %s210, %s211
      %p225 = scmp.eq.s32.totalorder %s73, 1
      %p226 = por %p224, %p225
      %p228 = scmp.ne.s32.totalorder %s211, %s227
      %p229 = scmp.eq.s32.totalorder %s73, 0
      %p230 = por %p228, %p229
      %s232 = sadd.s32 %s231, 1
      %p235 = scmp.eq.s32.totalorder %s67, 1
      %p236 = scmp.ne.s32.totalorder %s231, %s233
      %p237 = scmp.eq.s32.totalorder %s67, 0
      %p238 = por %p236, %p237
      %p239 = scmp.ne.s32.totalorder %s231, %s233
      %p240 = scmp.eq.s32.totalorder %s72, 1
      %p241 = por %p239, %p240
      %p242 = scmp.ne.s32.totalorder %s233, %s234
      %p243 = scmp.eq.s32.totalorder %s72, 0
      %p244 = por %p242, %p243
      %p245 = scmp.ne.s32.totalorder %s233, %s234
      %p246 = scmp.eq.s32.totalorder %s73, 1
      %p247 = por %p245, %p246
      %p249 = scmp.ne.s32.totalorder %s234, %s248
      %p250 = scmp.eq.s32.totalorder %s73, 0
      %p251 = por %p249, %p250
      %s253 = sadd.s32 %s252, 1
      %p256 = scmp.eq.s32.totalorder %s67, 1
      %p257 = scmp.ne.s32.totalorder %s252, %s254
      %p258 = scmp.eq.s32.totalorder %s67, 0
      %p259 = por %p257, %p258
      %p260 = scmp.ne.s32.totalorder %s252, %s254
      %p261 = scmp.eq.s32.totalorder %s72, 1
      %p262 = por %p260, %p261
      %p263 = scmp.ne.s32.totalorder %s254, %s255
      %p264 = scmp.eq.s32.totalorder %s72, 0
      %p265 = por %p263, %p264
      %p266 = scmp.ne.s32.totalorder %s254, %s255
      %p267 = scmp.eq.s32.totalorder %s73, 1
      %p268 = por %p266, %p267
      %p270 = scmp.ne.s32.totalorder %s255, %s269
      %p271 = scmp.eq.s32.totalorder %s73, 0
      %p272 = por %p270, %p271
      %s274 = sadd.s32 %s273, 1
      %p277 = scmp.eq.s32.totalorder %s67, 1
      %p278 = scmp.ne.s32.totalorder %s273, %s275
      %p279 = scmp.eq.s32.totalorder %s67, 0
      %p280 = por %p278, %p279
      %p281 = scmp.ne.s32.totalorder %s273, %s275
      %p282 = scmp.eq.s32.totalorder %s72, 1
      %p283 = por %p281, %p282
      %p284 = scmp.ne.s32.totalorder %s275, %s276
      %p285 = scmp.eq.s32.totalorder %s72, 0
      %p286 = por %p284, %p285
      %p287 = scmp.ne.s32.totalorder %s275, %s276
      %p288 = scmp.eq.s32.totalorder %s73, 1
      %p289 = por %p287, %p288
      %p291 = scmp.ne.s32.totalorder %s276, %s290
      %p292 = scmp.eq.s32.totalorder %s73, 0
      %p293 = por %p291, %p292
      %s295 = sadd.s32 %s294, 1
      %p298 = scmp.eq.s32.totalorder %s67, 1
      %p299 = scmp.ne.s32.totalorder %s294, %s296
      %p300 = scmp.eq.s32.totalorder %s67, 0
      %p301 = por %p299, %p300
      %p302 = scmp.ne.s32.totalorder %s294, %s296
      %p303 = scmp.eq.s32.totalorder %s72, 1
      %p304 = por %p302, %p303
      %p305 = scmp.ne.s32.totalorder %s296, %s297
      %p306 = scmp.eq.s32.totalorder %s72, 0
      %p307 = por %p305, %p306
      %p308 = scmp.ne.s32.totalorder %s296, %s297
      %p309 = scmp.eq.s32.totalorder %s73, 1
      %p310 = por %p308, %p309
      %p312 = scmp.ne.s32.totalorder %s297, %s311
      %p313 = scmp.eq.s32.totalorder %s73, 0
      %p314 = por %p312, %p313
      %s316 = sadd.s32 %s315, 1
      %p319 = scmp.eq.s32.totalorder %s67, 1
      %p320 = scmp.ne.s32.totalorder %s315, %s317
      %p321 = scmp.eq.s32.totalorder %s67, 0
      %p322 = por %p320, %p321
      %p323 = scmp.ne.s32.totalorder %s315, %s317
      %p324 = scmp.eq.s32.totalorder %s72, 1
      %p325 = por %p323, %p324
      %p326 = scmp.ne.s32.totalorder %s317, %s318
      %p327 = scmp.eq.s32.totalorder %s72, 0
      %p328 = por %p326, %p327
      %p329 = scmp.ne.s32.totalorder %s317, %s318
      %p330 = scmp.eq.s32.totalorder %s73, 1
      %p331 = por %p329, %p330
      %p333 = scmp.ne.s32.totalorder %s318, %s332
      %p334 = scmp.eq.s32.totalorder %s73, 0
      %p335 = por %p333, %p334
      %s337 = sadd.s32 %s336, 1
      %p340 = scmp.eq.s32.totalorder %s67, 1
      %p341 = scmp.ne.s32.totalorder %s336, %s338
      %p342 = scmp.eq.s32.totalorder %s67, 0
      %p343 = por %p341, %p342
      %p344 = scmp.ne.s32.totalorder %s336, %s338
      %p345 = scmp.eq.s32.totalorder %s72, 1
      %p346 = por %p344, %p345
      %p347 = scmp.ne.s32.totalorder %s338, %s339
      %p348 = scmp.eq.s32.totalorder %s72, 0
      %p349 = por %p347, %p348
      %p350 = scmp.ne.s32.totalorder %s338, %s339
      %p351 = scmp.eq.s32.totalorder %s73, 1
      %p352 = por %p350, %p351
      %p354 = scmp.ne.s32.totalorder %s339, %s353
      %p355 = scmp.eq.s32.totalorder %s73, 0
      %p356 = por %p354, %p355
      %s358 = sadd.s32 %s357, 1
      %p361 = scmp.eq.s32.totalorder %s67, 1
      %p362 = scmp.ne.s32.totalorder %s357, %s359
      %p363 = scmp.eq.s32.totalorder %s67, 0
      %p364 = por %p362, %p363
      %p365 = scmp.ne.s32.totalorder %s357, %s359
      %p366 = scmp.eq.s32.totalorder %s72, 1
      %p367 = por %p365, %p366
      %p368 = scmp.ne.s32.totalorder %s359, %s360
      %p369 = scmp.eq.s32.totalorder %s72, 0
      %p370 = por %p368, %p369
      %p371 = scmp.ne.s32.totalorder %s359, %s360
      %p372 = scmp.eq.s32.totalorder %s73, 1
      %p373 = por %p371, %p372
      %p375 = scmp.ne.s32.totalorder %s360, %s374
      %p376 = scmp.eq.s32.totalorder %s73, 0
      %p377 = por %p375, %p376
      %s379 = sadd.s32 %s378, 1
      %p382 = scmp.eq.s32.totalorder %s67, 1
      %p383 = scmp.ne.s32.totalorder %s378, %s380
      %p384 = scmp.eq.s32.totalorder %s67, 0
      %p385 = por %p383, %p384
      %p386 = scmp.ne.s32.totalorder %s378, %s380
      %p387 = scmp.eq.s32.totalorder %s72, 1
      %p388 = por %p386, %p387
      %p389 = scmp.ne.s32.totalorder %s380, %s381
      %p390 = scmp.eq.s32.totalorder %s72, 0
      %p391 = por %p389, %p390
      %p392 = scmp.ne.s32.totalorder %s380, %s381
      %p393 = scmp.eq.s32.totalorder %s73, 1
      %p394 = por %p392, %p393
      %p396 = scmp.ne.s32.totalorder %s381, %s395
      %p397 = scmp.eq.s32.totalorder %s73, 0
      %p398 = por %p396, %p397
      %s400 = sadd.s32 %s399, 1
      %p403 = scmp.eq.s32.totalorder %s67, 1
      %p404 = scmp.ne.s32.totalorder %s399, %s401
      %p405 = scmp.eq.s32.totalorder %s67, 0
      %p406 = por %p404, %p405
      %p407 = scmp.ne.s32.totalorder %s399, %s401
      %p408 = scmp.eq.s32.totalorder %s72, 1
      %p409 = por %p407, %p408
      %p410 = scmp.ne.s32.totalorder %s401, %s402
      %p411 = scmp.eq.s32.totalorder %s72, 0
      %p412 = por %p410, %p411
      %p413 = scmp.ne.s32.totalorder %s401, %s402
      %p414 = scmp.eq.s32.totalorder %s73, 1
      %p415 = por %p413, %p414
      %p417 = scmp.ne.s32.totalorder %s402, %s416
      %p418 = scmp.eq.s32.totalorder %s73, 0
      %p419 = por %p417, %p418
      %s421 = sadd.s32 %s420, 1
      %p424 = scmp.eq.s32.totalorder %s67, 1
      %p425 = scmp.ne.s32.totalorder %s420, %s422
      %p426 = scmp.eq.s32.totalorder %s67, 0
      %p427 = por %p425, %p426
      %p428 = scmp.ne.s32.totalorder %s420, %s422
      %p429 = scmp.eq.s32.totalorder %s72, 1
      %p430 = por %p428, %p429
      %p431 = scmp.ne.s32.totalorder %s422, %s423
      %p432 = scmp.eq.s32.totalorder %s72, 0
      %p433 = por %p431, %p432
      %p434 = scmp.ne.s32.totalorder %s422, %s423
      %p435 = scmp.eq.s32.totalorder %s73, 1
      %p436 = por %p434, %p435
      %p438 = scmp.ne.s32.totalorder %s423, %s437
      %p439 = scmp.eq.s32.totalorder %s73, 0
      %p440 = por %p438, %p439
      %s442 = sadd.s32 %s441, 1
      %p445 = scmp.eq.s32.totalorder %s67, 1
      %p446 = scmp.ne.s32.totalorder %s441, %s443
      %p447 = scmp.eq.s32.totalorder %s67, 0
      %p448 = por %p446, %p447
      %p449 = scmp.ne.s32.totalorder %s441, %s443
      %p450 = scmp.eq.s32.totalorder %s72, 1
      %p451 = por %p449, %p450
      %p452 = scmp.ne.s32.totalorder %s443, %s444
      %p453 = scmp.eq.s32.totalorder %s72, 0
      %p454 = por %p452, %p453
      %p455 = scmp.ne.s32.totalorder %s443, %s444
      %p456 = scmp.eq.s32.totalorder %s73, 1
      %p457 = por %p455, %p456
      %p459 = scmp.ne.s32.totalorder %s444, %s458
      %p460 = scmp.eq.s32.totalorder %s73, 0
      %p461 = por %p459, %p460
      %s463 = sadd.s32 %s462, 1
      %p466 = scmp.eq.s32.totalorder %s67, 1
      %p467 = scmp.ne.s32.totalorder %s462, %s464
      %p468 = scmp.eq.s32.totalorder %s67, 0
      %p469 = por %p467, %p468
      %p470 = scmp.ne.s32.totalorder %s462, %s464
      %p471 = scmp.eq.s32.totalorder %s72, 1
      %p472 = por %p470, %p471
      %p473 = scmp.ne.s32.totalorder %s464, %s465
      %p474 = scmp.eq.s32.totalorder %s72, 0
      %p475 = por %p473, %p474
      %p476 = scmp.ne.s32.totalorder %s464, %s465
      %p477 = scmp.eq.s32.totalorder %s73, 1
      %p478 = por %p476, %p477
      %p480 = scmp.ne.s32.totalorder %s465, %s479
      %p481 = scmp.eq.s32.totalorder %s73, 0
      %p482 = por %p480, %p481
      %s484 = sadd.s32 %s483, 1
      %p487 = scmp.eq.s32.totalorder %s67, 1
      %p488 = scmp.ne.s32.totalorder %s483, %s485
      %p489 = scmp.eq.s32.totalorder %s67, 0
      %p490 = por %p488, %p489
      %p491 = scmp.ne.s32.totalorder %s483, %s485
      %p492 = scmp.eq.s32.totalorder %s72, 1
      %p493 = por %p491, %p492
      %p494 = scmp.ne.s32.totalorder %s485, %s486
      %p495 = scmp.eq.s32.totalorder %s72, 0
      %p496 = por %p494, %p495
      %p497 = scmp.ne.s32.totalorder %s485, %s486
      %p498 = scmp.eq.s32.totalorder %s73, 1
      %p499 = por %p497, %p498
      %p501 = scmp.ne.s32.totalorder %s486, %s500
      %p502 = scmp.eq.s32.totalorder %s73, 0
      %p503 = por %p501, %p502
      %s505 = sadd.s32 %s504, 1
      %p508 = scmp.eq.s32.totalorder %s67, 1
      %p509 = scmp.ne.s32.totalorder %s504, %s506
      %p510 = scmp.eq.s32.totalorder %s67, 0
      %p511 = por %p509, %p510
      %p512 = scmp.ne.s32.totalorder %s504, %s506
      %p513 = scmp.eq.s32.totalorder %s72, 1
      %p514 = por %p512, %p513
      %p515 = scmp.ne.s32.totalorder %s506, %s507
      %p516 = scmp.eq.s32.totalorder %s72, 0
      %p517 = por %p515, %p516
      %p518 = scmp.ne.s32.totalorder %s506, %s507
      %p519 = scmp.eq.s32.totalorder %s73, 1
      %p520 = por %p518, %p519
      %p522 = scmp.ne.s32.totalorder %s507, %s521
      %p523 = scmp.eq.s32.totalorder %s73, 0
      %p524 = por %p522, %p523
      %s526 = sadd.s32 %s525, 1
      %p529 = scmp.eq.s32.totalorder %s67, 1
      %p530 = scmp.ne.s32.totalorder %s525, %s527
      %p531 = scmp.eq.s32.totalorder %s67, 0
      %p532 = por %p530, %p531
      %p533 = scmp.ne.s32.totalorder %s525, %s527
      %p534 = scmp.eq.s32.totalorder %s72, 1
      %p535 = por %p533, %p534
      %p536 = scmp.ne.s32.totalorder %s527, %s528
      %p537 = scmp.eq.s32.totalorder %s72, 0
      %p538 = por %p536, %p537
      %p539 = scmp.ne.s32.totalorder %s527, %s528
      %p540 = scmp.eq.s32.totalorder %s73, 1
      %p541 = por %p539, %p540
      %p543 = scmp.ne.s32.totalorder %s528, %s542
      %p544 = scmp.eq.s32.totalorder %s73, 0
      %p545 = por %p543, %p544
      %s547 = sadd.s32 %s546, 1
      %p550 = scmp.eq.s32.totalorder %s67, 1
      %p551 = scmp.ne.s32.totalorder %s546, %s548
      %p552 = scmp.eq.s32.totalorder %s67, 0
      %p553 = por %p551, %p552
      %p554 = scmp.ne.s32.totalorder %s546, %s548
      %p555 = scmp.eq.s32.totalorder %s72, 1
      %p556 = por %p554, %p555
      %p557 = scmp.ne.s32.totalorder %s548, %s549
      %p558 = scmp.eq.s32.totalorder %s72, 0
      %p559 = por %p557, %p558
      %p560 = scmp.ne.s32.totalorder %s548, %s549
      %p561 = scmp.eq.s32.totalorder %s73, 1
      %p562 = por %p560, %p561
      %p564 = scmp.ne.s32.totalorder %s549, %s563
      %p565 = scmp.eq.s32.totalorder %s73, 0
      %p566 = por %p564, %p565
      %s568 = sadd.s32 %s567, 1
      %p571 = scmp.eq.s32.totalorder %s67, 1
      %p572 = scmp.ne.s32.totalorder %s567, %s569
      %p573 = scmp.eq.s32.totalorder %s67, 0
      %p574 = por %p572, %p573
      %p575 = scmp.ne.s32.totalorder %s567, %s569
      %p576 = scmp.eq.s32.totalorder %s72, 1
      %p577 = por %p575, %p576
      %p578 = scmp.ne.s32.totalorder %s569, %s570
      %p579 = scmp.eq.s32.totalorder %s72, 0
      %p580 = por %p578, %p579
      %p581 = scmp.ne.s32.totalorder %s569, %s570
      %p582 = scmp.eq.s32.totalorder %s73, 1
      %p583 = por %p581, %p582
      %p585 = scmp.ne.s32.totalorder %s570, %s584
      %p586 = scmp.eq.s32.totalorder %s73, 0
      %p587 = por %p585, %p586
      %s589 = sadd.s32 %s588, 1
      %p592 = scmp.eq.s32.totalorder %s67, 1
      %p593 = scmp.ne.s32.totalorder %s588, %s590
      %p594 = scmp.eq.s32.totalorder %s67, 0
      %p595 = por %p593, %p594
      %p596 = scmp.ne.s32.totalorder %s588, %s590
      %p597 = scmp.eq.s32.totalorder %s72, 1
      %p598 = por %p596, %p597
      %p599 = scmp.ne.s32.totalorder %s590, %s591
      %p600 = scmp.eq.s32.totalorder %s72, 0
      %p601 = por %p599, %p600
      %p602 = scmp.ne.s32.totalorder %s590, %s591
      %p603 = scmp.eq.s32.totalorder %s73, 1
      %p604 = por %p602, %p603
      %p606 = scmp.ne.s32.totalorder %s591, %s605
      %p607 = scmp.eq.s32.totalorder %s73, 0
      %p608 = por %p606, %p607
      %s610 = sadd.s32 %s609, 1
      %p613 = scmp.eq.s32.totalorder %s67, 1
      %p614 = scmp.ne.s32.totalorder %s609, %s611
      %p615 = scmp.eq.s32.totalorder %s67, 0
      %p616 = por %p614, %p615
      %p617 = scmp.ne.s32.totalorder %s609, %s611
      %p618 = scmp.eq.s32.totalorder %s72, 1
      %p619 = por %p617, %p618
      %p620 = scmp.ne.s32.totalorder %s611, %s612
      %p621 = scmp.eq.s32.totalorder %s72, 0
      %p622 = por %p620, %p621
      %p623 = scmp.ne.s32.totalorder %s611, %s612
      %p624 = scmp.eq.s32.totalorder %s73, 1
      %p625 = por %p623, %p624
      %p627 = scmp.ne.s32.totalorder %s612, %s626
      %p628 = scmp.eq.s32.totalorder %s73, 0
      %p629 = por %p627, %p628
      %s631 = sadd.s32 %s630, 1
      %p634 = scmp.eq.s32.totalorder %s67, 1
      %p635 = scmp.ne.s32.totalorder %s630, %s632
      %p636 = scmp.eq.s32.totalorder %s67, 0
      %p637 = por %p635, %p636
      %p638 = scmp.ne.s32.totalorder %s630, %s632
      %p639 = scmp.eq.s32.totalorder %s72, 1
      %p640 = por %p638, %p639
      %p641 = scmp.ne.s32.totalorder %s632, %s633
      %p642 = scmp.eq.s32.totalorder %s72, 0
      %p643 = por %p641, %p642
      %p644 = scmp.ne.s32.totalorder %s632, %s633
      %p645 = scmp.eq.s32.totalorder %s73, 1
      %p646 = por %p644, %p645
      %p648 = scmp.ne.s32.totalorder %s633, %s647
      %p649 = scmp.eq.s32.totalorder %s73, 0
      %p650 = por %p648, %p649
      %s651 = ssub.s32 %s67, %s74
      %p652 = scmp.eq.s32.totalorder %s651, 0
      %s654 = sadd.s32 %s653, 1
      %s655 = scalar_select %p652, %s653, %s654
      %p658 = pneg %p652
      %p659 = scmp.eq.s32.totalorder %s67, 1
      %p660 = por %p658, %p659
      %p661 = scmp.ne.s32.totalorder %s653, %s656
      %p662 = scmp.eq.s32.totalorder %s67, 0
      %p663 = por %p661, %p662
      %p664 = scmp.ne.s32.totalorder %s653, %s656
      %p665 = scmp.eq.s32.totalorder %s72, 1
      %p666 = por %p664, %p665
      %p667 = scmp.ne.s32.totalorder %s656, %s657
      %p668 = scmp.eq.s32.totalorder %s72, 0
      %p669 = por %p667, %p668
      %p670 = scmp.ne.s32.totalorder %s656, %s657
      %p671 = scmp.eq.s32.totalorder %s73, 1
      %p672 = por %p670, %p671
      %p674 = scmp.ne.s32.totalorder %s657, %s673
      %p675 = scmp.eq.s32.totalorder %s73, 0
      %p676 = por %p674, %p675
      %s677 = ssub.s32 %s67, %s74
      %p678 = scmp.eq.s32.totalorder %s677, 0
      %s680 = sadd.s32 %s679, 1
      %s681 = scalar_select %p678, %s679, %s680
      %p684 = pneg %p678
      %p685 = scmp.eq.s32.totalorder %s67, 1
      %p686 = por %p684, %p685
      %p687 = scmp.ne.s32.totalorder %s679, %s682
      %p688 = scmp.eq.s32.totalorder %s67, 0
      %p689 = por %p687, %p688
      %p690 = scmp.ne.s32.totalorder %s679, %s682
      %p691 = scmp.eq.s32.totalorder %s72, 1
      %p692 = por %p690, %p691
      %p693 = scmp.ne.s32.totalorder %s682, %s683
      %p694 = scmp.eq.s32.totalorder %s72, 0
      %p695 = por %p693, %p694
      %p696 = scmp.ne.s32.totalorder %s682, %s683
      %p697 = scmp.eq.s32.totalorder %s73, 1
      %p698 = por %p696, %p697
      %p700 = scmp.ne.s32.totalorder %s683, %s699
      %p701 = scmp.eq.s32.totalorder %s73, 0
      %p702 = por %p700, %p701
      %p703 = scmp.le.s32.totalorder 1, %s67
      %p704 = scmp.lt.s32.totalorder %s67, 3
      %p705 = pnand %p703, %p704
      %p706 = pneg %p705
      // Predicated region
      $region9: #{tpu_custom_call.1} parent=5 // pred_check
        _
      $region10: #{tpu_custom_call.1} parent=5 // pred_check_branch
        %708 = sbr.rel (%p705) target = $region12
      $region11: #{tpu_custom_call.1} parent=5 // pred_region
        %s709 = ssub.s32 %s67, 1
        // Predicated region
        $region13: #{tpu_custom_call.1} parent=11 // pred_check
          %p710 = pneg %p244
        $region14: #{tpu_custom_call.1} parent=11 // pred_check_branch
          %712 = sbr.rel (%p710) target = $region16
        $region15: #{tpu_custom_call.1} parent=11 // pred_region
          %s714 = ssub.s32 768, 768
          %715 = vsyncadd [#allocation14], %s714
          %s716 = sshll.u32 [#allocation15], 4
          %s717 = int_to_ptr.vmem [resolvable:$true] %s716
          %722 = dma.hbm_to_vmem [thread:$0]  %s7, 768, %s717, [#allocation14], 64, 64, 4
        $region16: #{tpu_custom_call.1} parent=11 // pred_fallthru
          _
        // Predicated region
        $region17: #{tpu_custom_call.1} parent=11 // pred_check
          %p723 = pneg %p265
        $region18: #{tpu_custom_call.1} parent=11 // pred_check_branch
          %725 = sbr.rel (%p723) target = $region20
        $region19: #{tpu_custom_call.1} parent=11 // pred_region
          %s727 = ssub.s32 48, 48
          %728 = vsyncadd [#allocation17], %s727
          %s729 = sshll.u32 [#allocation16], 4
          %s730 = int_to_ptr.vmem [resolvable:$true] %s729
          %735 = dma.hbm_to_vmem [thread:$0]  %s8, 48, %s730, [#allocation17], 16, 16, 1
        $region20: #{tpu_custom_call.1} parent=11 // pred_fallthru
          _
        // Predicated region
        $region21: #{tpu_custom_call.1} parent=11 // pred_check
          %p736 = pneg %p286
        $region22: #{tpu_custom_call.1} parent=11 // pred_check_branch
          %738 = sbr.rel (%p736) target = $region24
        $region23: #{tpu_custom_call.1} parent=11 // pred_region
          %s740 = ssub.s32 768, 768
          %741 = vsyncadd [#allocation17], %s740
          %s742 = sshll.u32 [#allocation18], 4
          %s743 = int_to_ptr.vmem [resolvable:$true] %s742
          %748 = dma.hbm_to_vmem [thread:$0]  %s9, 768, %s743, [#allocation17], 64, 64, 4
        $region24: #{tpu_custom_call.1} parent=11 // pred_fallthru
          _
        // Predicated region
        $region25: #{tpu_custom_call.1} parent=11 // pred_check
          %p749 = pneg %p307
        $region26: #{tpu_custom_call.1} parent=11 // pred_check_branch
          %751 = sbr.rel (%p749) target = $region28
        $region27: #{tpu_custom_call.1} parent=11 // pred_region
          %s753 = ssub.s32 48, 48
          %754 = vsyncadd [#allocation20], %s753
          %s755 = sshll.u32 [#allocation19], 4
          %s756 = int_to_ptr.vmem [resolvable:$true] %s755
          %761 = dma.hbm_to_vmem [thread:$0]  %s10, 48, %s756, [#allocation20], 16, 16, 1
        $region28: #{tpu_custom_call.1} parent=11 // pred_fallthru
          _
        // Predicated region
        $region29: #{tpu_custom_call.1} parent=11 // pred_check
          %p762 = pneg %p328
        $region30: #{tpu_custom_call.1} parent=11 // pred_check_branch
          %764 = sbr.rel (%p762) target = $region32
        $region31: #{tpu_custom_call.1} parent=11 // pred_region
          %s766 = ssub.s32 256, 256
          %767 = vsyncadd [#allocation20], %s766
          %s768 = sshll.u32 [#allocation21], 4
          %s769 = int_to_ptr.vmem [resolvable:$true] %s768
          %774 = dma.hbm_to_vmem [thread:$0]  %s11, 256, %s769, [#allocation20], 64, 64, 4
        $region32: #{tpu_custom_call.1} parent=11 // pred_fallthru
          _
        // Predicated region
        $region33: #{tpu_custom_call.1} parent=11 // pred_check
          %p775 = pneg %p349
        $region34: #{tpu_custom_call.1} parent=11 // pred_check_branch
          %777 = sbr.rel (%p775) target = $region36
        $region35: #{tpu_custom_call.1} parent=11 // pred_region
          %s779 = ssub.s32 16, 16
          %780 = vsyncadd [#allocation23], %s779
          %s782 = sshll.u32 [#allocation22], 4
          %s783 = int_to_ptr.vmem [resolvable:$true] %s782
          %785 = dma.hbm_to_vmem [thread:$0]  %s12, 16, %s783, [#allocation23]
        $region36: #{tpu_custom_call.1} parent=11 // pred_fallthru
          _
        // Predicated region
        $region37: #{tpu_custom_call.1} parent=11 // pred_check
          %p786 = pneg %p370
        $region38: #{tpu_custom_call.1} parent=11 // pred_check_branch
          %788 = sbr.rel (%p786) target = $region40
        $region39: #{tpu_custom_call.1} parent=11 // pred_region
          %s790 = ssub.s32 256, 256
          %791 = vsyncadd [#allocation23], %s790
          %s792 = sshll.u32 [#allocation24], 4
          %s793 = int_to_ptr.vmem [resolvable:$true] %s792
          %798 = dma.hbm_to_vmem [thread:$0]  %s13, 256, %s793, [#allocation23], 64, 64, 4
        $region40: #{tpu_custom_call.1} parent=11 // pred_fallthru
          _
        // Predicated region
        $region41: #{tpu_custom_call.1} parent=11 // pred_check
          %p799 = pneg %p391
        $region42: #{tpu_custom_call.1} parent=11 // pred_check_branch
          %801 = sbr.rel (%p799) target = $region44
        $region43: #{tpu_custom_call.1} parent=11 // pred_region
          %s803 = ssub.s32 16, 16
          %804 = vsyncadd [#allocation26], %s803
          %s806 = sshll.u32 [#allocation25], 4
          %s807 = int_to_ptr.vmem [resolvable:$true] %s806
          %809 = dma.hbm_to_vmem [thread:$0]  %s14, 16, %s807, [#allocation26]
        $region44: #{tpu_custom_call.1} parent=11 // pred_fallthru
          _
        // Predicated region
        $region45: #{tpu_custom_call.1} parent=11 // pred_check
          %p810 = pneg %p412
        $region46: #{tpu_custom_call.1} parent=11 // pred_check_branch
          %812 = sbr.rel (%p810) target = $region48
        $region47: #{tpu_custom_call.1} parent=11 // pred_region
          %s814 = ssub.s32 16, 16
          %815 = vsyncadd [#allocation26], %s814
          %s817 = sshll.u32 [#allocation27], 4
          %s818 = int_to_ptr.vmem [resolvable:$true] %s817
          %820 = dma.hbm_to_vmem [thread:$0]  %s15, 16, %s818, [#allocation26]
        $region48: #{tpu_custom_call.1} parent=11 // pred_fallthru
          _
        // Predicated region
        $region49: #{tpu_custom_call.1} parent=11 // pred_check
          %p821 = pneg %p433
        $region50: #{tpu_custom_call.1} parent=11 // pred_check_branch
          %823 = sbr.rel (%p821) target = $region52
        $region51: #{tpu_custom_call.1} parent=11 // pred_region
          %s825 = ssub.s32 16, 16
          %826 = vsyncadd [#allocation29], %s825
          %s828 = sshll.u32 [#allocation28], 4
          %s829 = int_to_ptr.vmem [resolvable:$true] %s828
          %831 = dma.hbm_to_vmem [thread:$0]  %s16, 16, %s829, [#allocation29]
        $region52: #{tpu_custom_call.1} parent=11 // pred_fallthru
          _
        // Predicated region
        $region53: #{tpu_custom_call.1} parent=11 // pred_check
          %p832 = pneg %p454
        $region54: #{tpu_custom_call.1} parent=11 // pred_check_branch
          %834 = sbr.rel (%p832) target = $region56
        $region55: #{tpu_custom_call.1} parent=11 // pred_region
          %s836 = ssub.s32 256, 256
          %837 = vsyncadd [#allocation29], %s836
          %s838 = sshll.u32 [#allocation30], 4
          %s839 = int_to_ptr.vmem [resolvable:$true] %s838
          %844 = dma.hbm_to_vmem [thread:$0]  %s17, 256, %s839, [#allocation29], 64, 64, 4
        $region56: #{tpu_custom_call.1} parent=11 // pred_fallthru
          _
        // Predicated region
        $region57: #{tpu_custom_call.1} parent=11 // pred_check
          %p845 = pneg %p475
        $region58: #{tpu_custom_call.1} parent=11 // pred_check_branch
          %847 = sbr.rel (%p845) target = $region60
        $region59: #{tpu_custom_call.1} parent=11 // pred_region
          %s849 = ssub.s32 16, 16
          %850 = vsyncadd [#allocation32], %s849
          %s852 = sshll.u32 [#allocation31], 4
          %s853 = int_to_ptr.vmem [resolvable:$true] %s852
          %855 = dma.hbm_to_vmem [thread:$0]  %s18, 16, %s853, [#allocation32]
        $region60: #{tpu_custom_call.1} parent=11 // pred_fallthru
          _
        // Predicated region
        $region61: #{tpu_custom_call.1} parent=11 // pred_check
          %p856 = pneg %p496
        $region62: #{tpu_custom_call.1} parent=11 // pred_check_branch
          %858 = sbr.rel (%p856) target = $region64
        $region63: #{tpu_custom_call.1} parent=11 // pred_region
          %s860 = ssub.s32 512, 512
          %861 = vsyncadd [#allocation32], %s860
          %s862 = sshll.u32 [#allocation33], 4
          %s863 = int_to_ptr.vmem [resolvable:$true] %s862
          %868 = dma.hbm_to_vmem [thread:$0]  %s19, 512, %s863, [#allocation32], 64, 64, 4
        $region64: #{tpu_custom_call.1} parent=11 // pred_fallthru
          _
        // Predicated region
        $region65: #{tpu_custom_call.1} parent=11 // pred_check
          %p869 = pneg %p517
        $region66: #{tpu_custom_call.1} parent=11 // pred_check_branch
          %871 = sbr.rel (%p869) target = $region68
        $region67: #{tpu_custom_call.1} parent=11 // pred_region
          %s873 = ssub.s32 16, 16
          %874 = vsyncadd [#allocation35], %s873
          %s876 = sshll.u32 [#allocation34], 4
          %s877 = int_to_ptr.vmem [resolvable:$true] %s876
          %879 = dma.hbm_to_vmem [thread:$0]  %s20, 16, %s877, [#allocation35]
        $region68: #{tpu_custom_call.1} parent=11 // pred_fallthru
          _
        // Predicated region
        $region69: #{tpu_custom_call.1} parent=11 // pred_check
          %p880 = pneg %p538
        $region70: #{tpu_custom_call.1} parent=11 // pred_check_branch
          %882 = sbr.rel (%p880) target = $region72
        $region71: #{tpu_custom_call.1} parent=11 // pred_region
          %s884 = ssub.s32 256, 256
          %885 = vsyncadd [#allocation35], %s884
          %s886 = sshll.u32 [#allocation36], 4
          %s887 = int_to_ptr.vmem [resolvable:$true] %s886
          %892 = dma.hbm_to_vmem [thread:$0]  %s21, 256, %s887, [#allocation35], 64, 64, 4
        $region72: #{tpu_custom_call.1} parent=11 // pred_fallthru
          _
        // Predicated region
        $region73: #{tpu_custom_call.1} parent=11 // pred_check
          %p893 = pneg %p559
        $region74: #{tpu_custom_call.1} parent=11 // pred_check_branch
          %895 = sbr.rel (%p893) target = $region76
        $region75: #{tpu_custom_call.1} parent=11 // pred_region
          %s897 = ssub.s32 16, 16
          %898 = vsyncadd [#allocation38], %s897
          %s900 = sshll.u32 [#allocation37], 4
          %s901 = int_to_ptr.vmem [resolvable:$true] %s900
          %903 = dma.hbm_to_vmem [thread:$0]  %s22, 16, %s901, [#allocation38]
        $region76: #{tpu_custom_call.1} parent=11 // pred_fallthru
          _
        // Predicated region
        $region77: #{tpu_custom_call.1} parent=11 // pred_check
          %p904 = pneg %p580
        $region78: #{tpu_custom_call.1} parent=11 // pred_check_branch
          %906 = sbr.rel (%p904) target = $region80
        $region79: #{tpu_custom_call.1} parent=11 // pred_region
          %s908 = ssub.s32 512, 512
          %909 = vsyncadd [#allocation38], %s908
          %s910 = sshll.u32 [#allocation39], 4
          %s911 = int_to_ptr.vmem [resolvable:$true] %s910
          %916 = dma.hbm_to_vmem [thread:$0]  %s23, 512, %s911, [#allocation38], 64, 64, 4
        $region80: #{tpu_custom_call.1} parent=11 // pred_fallthru
          _
        // Predicated region
        $region81: #{tpu_custom_call.1} parent=11 // pred_check
          %p917 = pneg %p601
        $region82: #{tpu_custom_call.1} parent=11 // pred_check_branch
          %919 = sbr.rel (%p917) target = $region84
        $region83: #{tpu_custom_call.1} parent=11 // pred_region
          %s921 = ssub.s32 16, 16
          %922 = vsyncadd [#allocation41], %s921
          %s924 = sshll.u32 [#allocation40], 4
          %s925 = int_to_ptr.vmem [resolvable:$true] %s924
          %927 = dma.hbm_to_vmem [thread:$0]  %s24, 16, %s925, [#allocation41]
        $region84: #{tpu_custom_call.1} parent=11 // pred_fallthru
          _
        // Predicated region
        $region85: #{tpu_custom_call.1} parent=11 // pred_check
          %p928 = pneg %p622
        $region86: #{tpu_custom_call.1} parent=11 // pred_check_branch
          %930 = sbr.rel (%p928) target = $region88
        $region87: #{tpu_custom_call.1} parent=11 // pred_region
          %s932 = ssub.s32 16, 16
          %933 = vsyncadd [#allocation41], %s932
          %s935 = sshll.u32 [#allocation42], 4
          %s936 = int_to_ptr.vmem [resolvable:$true] %s935
          %938 = dma.hbm_to_vmem [thread:$0]  %s25, 16, %s936, [#allocation41]
        $region88: #{tpu_custom_call.1} parent=11 // pred_fallthru
          _
        // Predicated region
        $region89: #{tpu_custom_call.1} parent=11 // pred_check
          %p939 = pneg %p643
        $region90: #{tpu_custom_call.1} parent=11 // pred_check_branch
          %941 = sbr.rel (%p939) target = $region92
        $region91: #{tpu_custom_call.1} parent=11 // pred_region
          %s943 = ssub.s32 16, 16
          %944 = vsyncadd [#allocation44], %s943
          %s946 = sshll.u32 [#allocation43], 4
          %s947 = int_to_ptr.vmem [resolvable:$true] %s946
          %949 = dma.hbm_to_vmem [thread:$0]  %s26, 16, %s947, [#allocation44]
        $region92: #{tpu_custom_call.1} parent=11 // pred_fallthru
          _
      $region12: #{tpu_custom_call.1} parent=5 // pred_fallthru
        _
      %p950 = scmp.lt.s32.totalorder %s67, 2
      // Predicated region
      $region93: #{tpu_custom_call.1} parent=5 // pred_check
        %p951 = pneg %p950
      $region94: #{tpu_custom_call.1} parent=5 // pred_check_branch
        %953 = sbr.rel (%p951) target = $region96
      $region95: #{tpu_custom_call.1} parent=5 // pred_region
        // Predicated region
        $region97: #{tpu_custom_call.1} parent=95 // pred_check
          %p954 = pneg %p87
        $region98: #{tpu_custom_call.1} parent=95 // pred_check_branch
          %956 = sbr.rel (%p954) target = $region100
        $region99: #{tpu_custom_call.1} parent=95 // pred_region
          %s957 = sand.u32 %s77, 1
          %s958 = scalar_lea.sflag [#allocation5], %s957
          %s959 = sand.u32 %s77, 1
          %s960 = smul.addr %s959, 8
          %s961 = scalar_lea.vmem [#allocation4], %s960
          %s963 = ssub.s32 128, 128
          %964 = vsyncadd %s958, %s963
          %s965 = smul.addr %s67, 128
          %s966 = scalar_lea.hbm %s1, %s965
          %s968 = sshll.u32 %s961, 4
          %s969 = int_to_ptr.vmem [resolvable:$true] %s968
          %971 = dma.hbm_to_vmem [thread:$0]  %s966, 128, %s969, %s958
        $region100: #{tpu_custom_call.1} parent=95 // pred_fallthru
          _
        // Predicated region
        $region101: #{tpu_custom_call.1} parent=95 // pred_check
          %p972 = pneg %p113
        $region102: #{tpu_custom_call.1} parent=95 // pred_check_branch
          %974 = sbr.rel (%p972) target = $region104
        $region103: #{tpu_custom_call.1} parent=95 // pred_region
          %s975 = sand.u32 %s67, 1
          %s976 = scalar_lea.sflag [#allocation8], %s975
          %s977 = sand.u32 %s103, 1
          %s978 = smul.addr %s977, 8
          %s979 = scalar_lea.vmem [#allocation7], %s978
          %s981 = ssub.s32 128, 128
          %982 = vsyncadd %s976, %s981
          %s983 = smul.addr %s67, 128
          %s984 = scalar_lea.hbm %s2, %s983
          %s986 = sshll.u32 %s979, 4
          %s987 = int_to_ptr.vmem [resolvable:$true] %s986
          %989 = dma.hbm_to_vmem [thread:$0]  %s984, 128, %s987, %s976
        $region104: #{tpu_custom_call.1} parent=95 // pred_fallthru
          _
        // Predicated region
        $region105: #{tpu_custom_call.1} parent=95 // pred_check
          %p990 = pneg %p139
        $region106: #{tpu_custom_call.1} parent=95 // pred_check_branch
          %992 = sbr.rel (%p990) target = $region108
        $region107: #{tpu_custom_call.1} parent=95 // pred_region
          %s993 = sand.u32 %s67, 1
          %s994 = scalar_lea.sflag [#allocation8], %s993
          %s995 = sand.u32 %s129, 1
          %s996 = smul.addr %s995, 8
          %s997 = scalar_lea.vmem [#allocation9], %s996
          %s999 = ssub.s32 128, 128
          %1000 = vsyncadd %s994, %s999
          %s1001 = smul.addr %s67, 128
          %s1002 = scalar_lea.hbm %s3, %s1001
          %s1004 = sshll.u32 %s997, 4
          %s1005 = int_to_ptr.vmem [resolvable:$true] %s1004
          %1007 = dma.hbm_to_vmem [thread:$0]  %s1002, 128, %s1005, %s994
        $region108: #{tpu_custom_call.1} parent=95 // pred_fallthru
          _
        // Predicated region
        $region109: #{tpu_custom_call.1} parent=95 // pred_check
          %p1008 = pneg %p165
        $region110: #{tpu_custom_call.1} parent=95 // pred_check_branch
          %1010 = sbr.rel (%p1008) target = $region112
        $region111: #{tpu_custom_call.1} parent=95 // pred_region
          %s1011 = sand.u32 %s67, 1
          %s1012 = scalar_lea.sflag [#allocation11], %s1011
          %s1013 = sand.u32 %s155, 1
          %s1014 = smul.addr %s1013, 8
          %s1015 = scalar_lea.vmem [#allocation10], %s1014
          %s1017 = ssub.s32 128, 128
          %1018 = vsyncadd %s1012, %s1017
          %s1019 = smul.addr %s67, 128
          %s1020 = scalar_lea.hbm %s4, %s1019
          %s1022 = sshll.u32 %s1015, 4
          %s1023 = int_to_ptr.vmem [resolvable:$true] %s1022
          %1025 = dma.hbm_to_vmem [thread:$0]  %s1020, 128, %s1023, %s1012
        $region112: #{tpu_custom_call.1} parent=95 // pred_fallthru
          _
        // Predicated region
        $region113: #{tpu_custom_call.1} parent=95 // pred_check
          %p1026 = pneg %p191
        $region114: #{tpu_custom_call.1} parent=95 // pred_check_branch
          %1028 = sbr.rel (%p1026) target = $region116
        $region115: #{tpu_custom_call.1} parent=95 // pred_region
          %s1029 = sand.u32 %s67, 1
          %s1030 = scalar_lea.sflag [#allocation11], %s1029
          %s1031 = sand.u32 %s181, 1
          %s1032 = smul.addr %s1031, 8
          %s1033 = scalar_lea.vmem [#allocation12], %s1032
          %s1035 = ssub.s32 128, 128
          %1036 = vsyncadd %s1030, %s1035
          %s1037 = smul.addr %s67, 128
          %s1038 = scalar_lea.hbm %s5, %s1037
          %s1040 = sshll.u32 %s1033, 4
          %s1041 = int_to_ptr.vmem [resolvable:$true] %s1040
          %1043 = dma.hbm_to_vmem [thread:$0]  %s1038, 128, %s1041, %s1030
        $region116: #{tpu_custom_call.1} parent=95 // pred_fallthru
          _
        // Predicated region
        $region117: #{tpu_custom_call.1} parent=95 // pred_check
          %p1044 = pneg %p217
        $region118: #{tpu_custom_call.1} parent=95 // pred_check_branch
          %1046 = sbr.rel (%p1044) target = $region120
        $region119: #{tpu_custom_call.1} parent=95 // pred_region
          %s1047 = sand.u32 %s67, 1
          %s1048 = scalar_lea.sflag [#allocation14], %s1047
          %s1049 = sand.u32 %s207, 1
          %s1050 = smul.addr %s1049, 8
          %s1051 = scalar_lea.vmem [#allocation13], %s1050
          %s1053 = ssub.s32 128, 128
          %1054 = vsyncadd %s1048, %s1053
          %s1055 = smul.addr %s67, 128
          %s1056 = scalar_lea.hbm %s6, %s1055
          %s1058 = sshll.u32 %s1051, 4
          %s1059 = int_to_ptr.vmem [resolvable:$true] %s1058
          %1061 = dma.hbm_to_vmem [thread:$0]  %s1056, 128, %s1059, %s1048
        $region120: #{tpu_custom_call.1} parent=95 // pred_fallthru
          _
      $region96: #{tpu_custom_call.1} parent=5 // pred_fallthru
        _
      %p1062 = scmp.le.s32.totalorder 1, %s67
      %p1063 = scmp.lt.s32.totalorder %s67, 3
      %p1064 = pnand %p1062, %p1063
      %p1065 = pneg %p1064
      // Predicated region
      $region121: #{tpu_custom_call.1} parent=5 // pred_check
        _
      $region122: #{tpu_custom_call.1} parent=5 // pred_check_branch
        %1067 = sbr.rel (%p1064) target = $region124
      $region123: #{tpu_custom_call.1} parent=5 // pred_region
        %s1068 = ssub.s32 %s67, 1
        %s1069 = sand.u32 %s80, 1
        %s1070 = scalar_lea.sflag [#allocation5], %s1069
        %s1071 = sand.u32 %s80, 1
        %s1072 = smul.addr %s1071, 8
        %s1073 = scalar_lea.vmem [#allocation4], %s1072
        // Predicated region
        $region125: #{tpu_custom_call.1} parent=123 // pred_check
          %p1074 = pneg %p93
        $region126: #{tpu_custom_call.1} parent=123 // pred_check_branch
          %1076 = sbr.rel (%p1074) target = $region128
        $region127: #{tpu_custom_call.1} parent=123 // pred_region
          %1077 = dma.done %s1070, 128
        $region128: #{tpu_custom_call.1} parent=123 // pred_fallthru
          _
        %s1078 = sand.u32 %s72, 1
        %s1079 = scalar_lea.sflag [#allocation8], %s1078
        %s1080 = sand.u32 %s106, 1
        %s1081 = smul.addr %s1080, 8
        %s1082 = scalar_lea.vmem [#allocation7], %s1081
        // Predicated region
        $region129: #{tpu_custom_call.1} parent=123 // pred_check
          %p1083 = pneg %p119
        $region130: #{tpu_custom_call.1} parent=123 // pred_check_branch
          %1085 = sbr.rel (%p1083) target = $region132
        $region131: #{tpu_custom_call.1} parent=123 // pred_region
          %1086 = dma.done %s1079, 128
        $region132: #{tpu_custom_call.1} parent=123 // pred_fallthru
          _
        %s1087 = sand.u32 %s72, 1
        %s1088 = scalar_lea.sflag [#allocation8], %s1087
        %s1089 = sand.u32 %s132, 1
        %s1090 = smul.addr %s1089, 8
        %s1091 = scalar_lea.vmem [#allocation9], %s1090
        // Predicated region
        $region133: #{tpu_custom_call.1} parent=123 // pred_check
          %p1092 = pneg %p145
        $region134: #{tpu_custom_call.1} parent=123 // pred_check_branch
          %1094 = sbr.rel (%p1092) target = $region136
        $region135: #{tpu_custom_call.1} parent=123 // pred_region
          %1095 = dma.done %s1088, 128
        $region136: #{tpu_custom_call.1} parent=123 // pred_fallthru
          _
        %s1096 = sand.u32 %s72, 1
        %s1097 = scalar_lea.sflag [#allocation11], %s1096
        %s1098 = sand.u32 %s158, 1
        %s1099 = smul.addr %s1098, 8
        %s1100 = scalar_lea.vmem [#allocation10], %s1099
        // Predicated region
        $region137: #{tpu_custom_call.1} parent=123 // pred_check
          %p1101 = pneg %p171
        $region138: #{tpu_custom_call.1} parent=123 // pred_check_branch
          %1103 = sbr.rel (%p1101) target = $region140
        $region139: #{tpu_custom_call.1} parent=123 // pred_region
          %1104 = dma.done %s1097, 128
        $region140: #{tpu_custom_call.1} parent=123 // pred_fallthru
          _
        %s1105 = sand.u32 %s72, 1
        %s1106 = scalar_lea.sflag [#allocation11], %s1105
        %s1107 = sand.u32 %s184, 1
        %s1108 = smul.addr %s1107, 8
        %s1109 = scalar_lea.vmem [#allocation12], %s1108
        // Predicated region
        $region141: #{tpu_custom_call.1} parent=123 // pred_check
          %p1110 = pneg %p197
        $region142: #{tpu_custom_call.1} parent=123 // pred_check_branch
          %1112 = sbr.rel (%p1110) target = $region144
        $region143: #{tpu_custom_call.1} parent=123 // pred_region
          %1113 = dma.done %s1106, 128
        $region144: #{tpu_custom_call.1} parent=123 // pred_fallthru
          _
        %s1114 = sand.u32 %s72, 1
        %s1115 = scalar_lea.sflag [#allocation14], %s1114
        %s1116 = sand.u32 %s210, 1
        %s1117 = smul.addr %s1116, 8
        %s1118 = scalar_lea.vmem [#allocation13], %s1117
        // Predicated region
        $region145: #{tpu_custom_call.1} parent=123 // pred_check
          %p1119 = pneg %p223
        $region146: #{tpu_custom_call.1} parent=123 // pred_check_branch
          %1121 = sbr.rel (%p1119) target = $region148
        $region147: #{tpu_custom_call.1} parent=123 // pred_region
          %1122 = dma.done %s1115, 128
        $region148: #{tpu_custom_call.1} parent=123 // pred_fallthru
          _
        // Predicated region
        $region149: #{tpu_custom_call.1} parent=123 // pred_check
          %p1123 = pneg %p244
        $region150: #{tpu_custom_call.1} parent=123 // pred_check_branch
          %1125 = sbr.rel (%p1123) target = $region152
        $region151: #{tpu_custom_call.1} parent=123 // pred_region
          %1126 = dma.done [#allocation14], 768
        $region152: #{tpu_custom_call.1} parent=123 // pred_fallthru
          _
        // Predicated region
        $region153: #{tpu_custom_call.1} parent=123 // pred_check
          %p1127 = pneg %p265
        $region154: #{tpu_custom_call.1} parent=123 // pred_check_branch
          %1129 = sbr.rel (%p1127) target = $region156
        $region155: #{tpu_custom_call.1} parent=123 // pred_region
          %1130 = dma.done [#allocation17], 48
        $region156: #{tpu_custom_call.1} parent=123 // pred_fallthru
          _
        // Predicated region
        $region157: #{tpu_custom_call.1} parent=123 // pred_check
          %p1131 = pneg %p286
        $region158: #{tpu_custom_call.1} parent=123 // pred_check_branch
          %1133 = sbr.rel (%p1131) target = $region160
        $region159: #{tpu_custom_call.1} parent=123 // pred_region
          %1134 = dma.done [#allocation17], 768
        $region160: #{tpu_custom_call.1} parent=123 // pred_fallthru
          _
        // Predicated region
        $region161: #{tpu_custom_call.1} parent=123 // pred_check
          %p1135 = pneg %p307
        $region162: #{tpu_custom_call.1} parent=123 // pred_check_branch
          %1137 = sbr.rel (%p1135) target = $region164
        $region163: #{tpu_custom_call.1} parent=123 // pred_region
          %1138 = dma.done [#allocation20], 48
        $region164: #{tpu_custom_call.1} parent=123 // pred_fallthru
          _
        // Predicated region
        $region165: #{tpu_custom_call.1} parent=123 // pred_check
          %p1139 = pneg %p328
        $region166: #{tpu_custom_call.1} parent=123 // pred_check_branch
          %1141 = sbr.rel (%p1139) target = $region168
        $region167: #{tpu_custom_call.1} parent=123 // pred_region
          %1142 = dma.done [#allocation20], 256
        $region168: #{tpu_custom_call.1} parent=123 // pred_fallthru
          _
        // Predicated region
        $region169: #{tpu_custom_call.1} parent=123 // pred_check
          %p1143 = pneg %p349
        $region170: #{tpu_custom_call.1} parent=123 // pred_check_branch
          %1145 = sbr.rel (%p1143) target = $region172
        $region171: #{tpu_custom_call.1} parent=123 // pred_region
          %1146 = dma.done [#allocation23], 16
        $region172: #{tpu_custom_call.1} parent=123 // pred_fallthru
          _
        // Predicated region
        $region173: #{tpu_custom_call.1} parent=123 // pred_check
          %p1147 = pneg %p370
        $region174: #{tpu_custom_call.1} parent=123 // pred_check_branch
          %1149 = sbr.rel (%p1147) target = $region176
        $region175: #{tpu_custom_call.1} parent=123 // pred_region
          %1150 = dma.done [#allocation23], 256
        $region176: #{tpu_custom_call.1} parent=123 // pred_fallthru
          _
        // Predicated region
        $region177: #{tpu_custom_call.1} parent=123 // pred_check
          %p1151 = pneg %p391
        $region178: #{tpu_custom_call.1} parent=123 // pred_check_branch
          %1153 = sbr.rel (%p1151) target = $region180
        $region179: #{tpu_custom_call.1} parent=123 // pred_region
          %1154 = dma.done [#allocation26], 16
        $region180: #{tpu_custom_call.1} parent=123 // pred_fallthru
          _
        // Predicated region
        $region181: #{tpu_custom_call.1} parent=123 // pred_check
          %p1155 = pneg %p412
        $region182: #{tpu_custom_call.1} parent=123 // pred_check_branch
          %1157 = sbr.rel (%p1155) target = $region184
        $region183: #{tpu_custom_call.1} parent=123 // pred_region
          %1158 = dma.done [#allocation26], 16
        $region184: #{tpu_custom_call.1} parent=123 // pred_fallthru
          _
        // Predicated region
        $region185: #{tpu_custom_call.1} parent=123 // pred_check
          %p1159 = pneg %p433
        $region186: #{tpu_custom_call.1} parent=123 // pred_check_branch
          %1161 = sbr.rel (%p1159) target = $region188
        $region187: #{tpu_custom_call.1} parent=123 // pred_region
          %1162 = dma.done [#allocation29], 16
        $region188: #{tpu_custom_call.1} parent=123 // pred_fallthru
          _
        // Predicated region
        $region189: #{tpu_custom_call.1} parent=123 // pred_check
          %p1163 = pneg %p454
        $region190: #{tpu_custom_call.1} parent=123 // pred_check_branch
          %1165 = sbr.rel (%p1163) target = $region192
        $region191: #{tpu_custom_call.1} parent=123 // pred_region
          %1166 = dma.done [#allocation29], 256
        $region192: #{tpu_custom_call.1} parent=123 // pred_fallthru
          _
        // Predicated region
        $region193: #{tpu_custom_call.1} parent=123 // pred_check
          %p1167 = pneg %p475
        $region194: #{tpu_custom_call.1} parent=123 // pred_check_branch
          %1169 = sbr.rel (%p1167) target = $region196
        $region195: #{tpu_custom_call.1} parent=123 // pred_region
          %1170 = dma.done [#allocation32], 16
        $region196: #{tpu_custom_call.1} parent=123 // pred_fallthru
          _
        // Predicated region
        $region197: #{tpu_custom_call.1} parent=123 // pred_check
          %p1171 = pneg %p496
        $region198: #{tpu_custom_call.1} parent=123 // pred_check_branch
          %1173 = sbr.rel (%p1171) target = $region200
        $region199: #{tpu_custom_call.1} parent=123 // pred_region
          %1174 = dma.done [#allocation32], 512
        $region200: #{tpu_custom_call.1} parent=123 // pred_fallthru
          _
        // Predicated region
        $region201: #{tpu_custom_call.1} parent=123 // pred_check
          %p1175 = pneg %p517
        $region202: #{tpu_custom_call.1} parent=123 // pred_check_branch
          %1177 = sbr.rel (%p1175) target = $region204
        $region203: #{tpu_custom_call.1} parent=123 // pred_region
          %1178 = dma.done [#allocation35], 16
        $region204: #{tpu_custom_call.1} parent=123 // pred_fallthru
          _
        // Predicated region
        $region205: #{tpu_custom_call.1} parent=123 // pred_check
          %p1179 = pneg %p538
        $region206: #{tpu_custom_call.1} parent=123 // pred_check_branch
          %1181 = sbr.rel (%p1179) target = $region208
        $region207: #{tpu_custom_call.1} parent=123 // pred_region
          %1182 = dma.done [#allocation35], 256
        $region208: #{tpu_custom_call.1} parent=123 // pred_fallthru
          _
        // Predicated region
        $region209: #{tpu_custom_call.1} parent=123 // pred_check
          %p1183 = pneg %p559
        $region210: #{tpu_custom_call.1} parent=123 // pred_check_branch
          %1185 = sbr.rel (%p1183) target = $region212
        $region211: #{tpu_custom_call.1} parent=123 // pred_region
          %1186 = dma.done [#allocation38], 16
        $region212: #{tpu_custom_call.1} parent=123 // pred_fallthru
          _
        // Predicated region
        $region213: #{tpu_custom_call.1} parent=123 // pred_check
          %p1187 = pneg %p580
        $region214: #{tpu_custom_call.1} parent=123 // pred_check_branch
          %1189 = sbr.rel (%p1187) target = $region216
        $region215: #{tpu_custom_call.1} parent=123 // pred_region
          %1190 = dma.done [#allocation38], 512
        $region216: #{tpu_custom_call.1} parent=123 // pred_fallthru
          _
        // Predicated region
        $region217: #{tpu_custom_call.1} parent=123 // pred_check
          %p1191 = pneg %p601
        $region218: #{tpu_custom_call.1} parent=123 // pred_check_branch
          %1193 = sbr.rel (%p1191) target = $region220
        $region219: #{tpu_custom_call.1} parent=123 // pred_region
          %1194 = dma.done [#allocation41], 16
        $region220: #{tpu_custom_call.1} parent=123 // pred_fallthru
          _
        // Predicated region
        $region221: #{tpu_custom_call.1} parent=123 // pred_check
          %p1195 = pneg %p622
        $region222: #{tpu_custom_call.1} parent=123 // pred_check_branch
          %1197 = sbr.rel (%p1195) target = $region224
        $region223: #{tpu_custom_call.1} parent=123 // pred_region
          %1198 = dma.done [#allocation41], 16
        $region224: #{tpu_custom_call.1} parent=123 // pred_fallthru
          _
        // Predicated region
        $region225: #{tpu_custom_call.1} parent=123 // pred_check
          %p1199 = pneg %p643
        $region226: #{tpu_custom_call.1} parent=123 // pred_check_branch
          %1201 = sbr.rel (%p1199) target = $region228
        $region227: #{tpu_custom_call.1} parent=123 // pred_region
          %1202 = dma.done [#allocation44], 16
        $region228: #{tpu_custom_call.1} parent=123 // pred_fallthru
          _
        %s1203 = sand.u32 %s80, 1
        %s1204 = scalar_lea.sflag [#allocation5], %s1203
        %s1205 = sand.u32 %s80, 1
        %s1206 = smul.addr %s1205, 8
        %s1207 = scalar_lea.vmem [#allocation4], %s1206
        %p1208 = pneg %p93
        %p1209 = pneg %p90
        %s1210 = sand.u32 %s72, 1
        %s1211 = scalar_lea.sflag [#allocation8], %s1210
        %s1212 = sand.u32 %s106, 1
        %s1213 = smul.addr %s1212, 8
        %s1214 = scalar_lea.vmem [#allocation7], %s1213
        %p1215 = pneg %p119
        %p1216 = pneg %p116
        %s1217 = sand.u32 %s72, 1
        %s1218 = scalar_lea.sflag [#allocation8], %s1217
        %s1219 = sand.u32 %s132, 1
        %s1220 = smul.addr %s1219, 8
        %s1221 = scalar_lea.vmem [#allocation9], %s1220
        %p1222 = pneg %p145
        %p1223 = pneg %p142
        %s1224 = sand.u32 %s72, 1
        %s1225 = scalar_lea.sflag [#allocation11], %s1224
        %s1226 = sand.u32 %s158, 1
        %s1227 = smul.addr %s1226, 8
        %s1228 = scalar_lea.vmem [#allocation10], %s1227
        %p1229 = pneg %p171
        %p1230 = pneg %p168
        %s1231 = sand.u32 %s72, 1
        %s1232 = scalar_lea.sflag [#allocation11], %s1231
        %s1233 = sand.u32 %s184, 1
        %s1234 = smul.addr %s1233, 8
        %s1235 = scalar_lea.vmem [#allocation12], %s1234
        %p1236 = pneg %p197
        %p1237 = pneg %p194
        %s1238 = sand.u32 %s72, 1
        %s1239 = scalar_lea.sflag [#allocation14], %s1238
        %s1240 = sand.u32 %s210, 1
        %s1241 = smul.addr %s1240, 8
        %s1242 = scalar_lea.vmem [#allocation13], %s1241
        %p1243 = pneg %p223
        %p1244 = pneg %p220
        %p1245 = pneg %p244
        %p1246 = pneg %p241
        %p1247 = pneg %p265
        %p1248 = pneg %p262
        %p1249 = pneg %p286
        %p1250 = pneg %p283
        %p1251 = pneg %p307
        %p1252 = pneg %p304
        %p1253 = pneg %p328
        %p1254 = pneg %p325
        %p1255 = pneg %p349
        %p1256 = pneg %p346
        %p1257 = pneg %p370
        %p1258 = pneg %p367
        %p1259 = pneg %p391
        %p1260 = pneg %p388
        %p1261 = pneg %p412
        %p1262 = pneg %p409
        %p1263 = pneg %p433
        %p1264 = pneg %p430
        %p1265 = pneg %p454
        %p1266 = pneg %p451
        %p1267 = pneg %p475
        %p1268 = pneg %p472
        %p1269 = pneg %p496
        %p1270 = pneg %p493
        %p1271 = pneg %p517
        %p1272 = pneg %p514
        %p1273 = pneg %p538
        %p1274 = pneg %p535
        %p1275 = pneg %p559
        %p1276 = pneg %p556
        %p1277 = pneg %p580
        %p1278 = pneg %p577
        %p1279 = pneg %p601
        %p1280 = pneg %p598
        %p1281 = pneg %p622
        %p1282 = pneg %p619
        %p1283 = pneg %p643
        %p1284 = pneg %p640
        %p1285 = pneg %p669
        %p1286 = pneg %p666
        %s1287 = sand.u32 %s656, 1
        %s1288 = scalar_lea.sflag [#allocation6], %s1287
        %s1289 = sand.u32 %s656, 1
        %s1290 = smul.addr %s1289, 8
        %s1291 = scalar_lea.vmem [#allocation45], %s1290
        %p1292 = pneg %p695
        %p1293 = pneg %p692
        %s1294 = sand.u32 %s682, 1
        %s1295 = scalar_lea.sflag [#allocation47], %s1294
        %s1296 = sand.u32 %s682, 1
        %s1297 = smul.addr %s1296, 8
        %s1298 = scalar_lea.vmem [#allocation46], %s1297
        %v1300 = vld [vmem:[%s1073] sm:$0xff]
        %v1301 = vld [vmem:[%s1082] sm:$0xff]
        %v1302 = vld [vmem:[%s1091] sm:$0xff]
        %v1303 = vld [vmem:[%s1100] sm:$0xff]
        %v1304 = vld [vmem:[%s1109] sm:$0xff]
        %v1305 = vld [vmem:[%s1118] sm:$0xff]
        %v1306 = vld [vmem:[#allocation15] sm:$0xf]
        %v1307 = vld [vmem:[#allocation15 + $0x4] sm:$0xf]
        %v1308 = vld [vmem:[#allocation15 + $0x8] sm:$0xf]
        %v1309 = vld [vmem:[#allocation15 + $0xc] sm:$0xf]
        %v1310 = vpack.c.bf16 %v1300, %v1300
        %v1311 = vld [vmem:[#allocation16] sm:$0x1]
        %v1313 = vlaneseq
        %v1314 = vshrl.u32 %v1313, 7
        %v1315 = vsub.s32 0, %v1314
        %v1316 = vrot.slane %v1311, %v1315
        %v1322 = vunpack.c.l.b16 %v1306
        %v1323 = vunpack.c.l.b16 %v1307
        %v1324 = vunpack.c.l.b16 %v1308
        %v1325 = vunpack.c.l.b16 %v1309
        %v1326 = vpack.c.b16 %v1323, %v1322
        %v1327 = vpack.c.b16 %v1325, %v1324
        %vm1330 = vcmask 261120
        %v1332 = vsel %vm1330, %v1310, 0
        %1334 = vmatprep.subr.bf16.mxu0 0
        %1335 = vmatpush1.bf16.msra.mxu0 %v1326
        %1336 = vmatprep.subr.bf16.mxu0 0
        %1337 = vmatpush1.bf16.msra.mxu0 %v1327
        %1338 = vmatprep.subr.bf16.mxu0 0
        %1339 = vmatpush1.bf16.msra.mxu0 0
        %1340 = vmatprep.subr.bf16.mxu0 0
        %1341 = vmatpush1.bf16.msra.mxu0 0
        %1342 = vmatprep.subr.bf16.mxu0 0
        %1343 = vmatpush1.bf16.msra.mxu0 0
        %1344 = vmatprep.subr.bf16.mxu0 0
        %1345 = vmatpush1.bf16.msra.mxu0 0
        %1346 = vmatprep.subr.bf16.mxu0 0
        %1347 = vmatpush1.bf16.msra.mxu0 0
        %1348 = vmatprep.subr.bf16.mxu0 0
        %1349 = vmatpush1.bf16.msra.mxu0 0
        %1350 = vmatprep.subr.bf16.mxu0 0
        %1351 = vmatpush1.bf16.msra.mxu0 0
        %1352 = vmatprep.subr.bf16.mxu0 0
        %1353 = vmatpush1.bf16.msra.mxu0 0
        %1354 = vmatprep.subr.bf16.mxu0 0
        %1355 = vmatpush1.bf16.msra.mxu0 0
        %1356 = vmatprep.subr.bf16.mxu0 0
        %1357 = vmatpush1.bf16.msra.mxu0 0
        %1358 = vmatprep.subr.bf16.mxu0 0
        %1359 = vmatpush1.bf16.msra.mxu0 0
        %1360 = vmatprep.subr.bf16.mxu0 0
        %1361 = vmatpush1.bf16.msra.mxu0 0
        %1362 = vmatprep.subr.bf16.mxu0 0
        %1363 = vmatpush1.bf16.msra.mxu0 0
        %1364 = vmatprep.subr.bf16.mxu0 0
        %1365 = vmatpush1.bf16.msra.mxu0 0
        %1366 = vmatprep.mubr.bf16.mxu0 0
        %1367 = vmatmul.mubr.bf16.gmra.mrb[0].mxu0 %v1332
        %v1368 = vpop.f32.mrb[0].mxu0
        %v1369 = vadd.f32 %v1316, %v1368
        %v1370 = vpop.f32.mrb[0].mxu0
        %v1371 = vpop.f32.mrb[0].mxu0
        %v1372 = vpop.f32.mrb[0].mxu0
        %1373 = vdwg.mxu0
        %s1374 = scalar_lea.vmem [#allocation15], 16
        %v1375 = vld [vmem:[%s1374] sm:$0xf]
        %v1376 = vld [vmem:[%s1374 + $0x4] sm:$0xf]
        %v1377 = vld [vmem:[%s1374 + $0x8] sm:$0xf]
        %v1378 = vld [vmem:[%s1374 + $0xc] sm:$0xf]
        %v1379 = vpack.c.bf16 %v1302, %v1302
        %s1380 = scalar_lea.vmem [#allocation16], 1
        %v1381 = vld [vmem:[%s1380] sm:$0x1]
        %v1383 = vlaneseq
        %v1384 = vshrl.u32 %v1383, 7
        %v1385 = vsub.s32 0, %v1384
        %v1386 = vrot.slane %v1381, %v1385
        %v1392 = vunpack.c.l.b16 %v1375
        %v1393 = vunpack.c.l.b16 %v1376
        %v1394 = vunpack.c.l.b16 %v1377
        %v1395 = vunpack.c.l.b16 %v1378
        %v1396 = vpack.c.b16 %v1393, %v1392
        %v1397 = vpack.c.b16 %v1395, %v1394
        %v1401 = vsel %vm1330, %v1379, 0
        %1403 = vmatprep.subr.bf16.mxu0 0
        %1404 = vmatpush1.bf16.msra.mxu0 %v1396
        %1405 = vmatprep.subr.bf16.mxu0 0
        %1406 = vmatpush1.bf16.msra.mxu0 %v1397
        %1407 = vmatprep.subr.bf16.mxu0 0
        %1408 = vmatpush1.bf16.msra.mxu0 0
        %1409 = vmatprep.subr.bf16.mxu0 0
        %1410 = vmatpush1.bf16.msra.mxu0 0
        %1411 = vmatprep.subr.bf16.mxu0 0
        %1412 = vmatpush1.bf16.msra.mxu0 0
        %1413 = vmatprep.subr.bf16.mxu0 0
        %1414 = vmatpush1.bf16.msra.mxu0 0
        %1415 = vmatprep.subr.bf16.mxu0 0
        %1416 = vmatpush1.bf16.msra.mxu0 0
        %1417 = vmatprep.subr.bf16.mxu0 0
        %1418 = vmatpush1.bf16.msra.mxu0 0
        %1419 = vmatprep.subr.bf16.mxu0 0
        %1420 = vmatpush1.bf16.msra.mxu0 0
        %1421 = vmatprep.subr.bf16.mxu0 0
        %1422 = vmatpush1.bf16.msra.mxu0 0
        %1423 = vmatprep.subr.bf16.mxu0 0
        %1424 = vmatpush1.bf16.msra.mxu0 0
        %1425 = vmatprep.subr.bf16.mxu0 0
        %1426 = vmatpush1.bf16.msra.mxu0 0
        %1427 = vmatprep.subr.bf16.mxu0 0
        %1428 = vmatpush1.bf16.msra.mxu0 0
        %1429 = vmatprep.subr.bf16.mxu0 0
        %1430 = vmatpush1.bf16.msra.mxu0 0
        %1431 = vmatprep.subr.bf16.mxu0 0
        %1432 = vmatpush1.bf16.msra.mxu0 0
        %1433 = vmatprep.subr.bf16.mxu0 0
        %1434 = vmatpush1.bf16.msra.mxu0 0
        %1435 = vmatprep.mubr.bf16.mxu0 0
        %1436 = vmatmul.mubr.bf16.gmra.mrb[0].mxu0 %v1401
        %v1437 = vpop.f32.mrb[0].mxu0
        %v1438 = vadd.f32 %v1386, %v1437
        %v1439 = vpop.f32.mrb[0].mxu0
        %v1440 = vpop.f32.mrb[0].mxu0
        %v1441 = vpop.f32.mrb[0].mxu0
        %1442 = vdwg.mxu0
        %s1443 = scalar_lea.vmem [#allocation15], 32
        %v1444 = vld [vmem:[%s1443] sm:$0xf]
        %v1445 = vld [vmem:[%s1443 + $0x4] sm:$0xf]
        %v1446 = vld [vmem:[%s1443 + $0x8] sm:$0xf]
        %v1447 = vld [vmem:[%s1443 + $0xc] sm:$0xf]
        %v1448 = vpack.c.bf16 %v1304, %v1304
        %s1449 = scalar_lea.vmem [#allocation16], 2
        %v1450 = vld [vmem:[%s1449] sm:$0x1]
        %v1452 = vlaneseq
        %v1453 = vshrl.u32 %v1452, 7
        %v1454 = vsub.s32 0, %v1453
        %v1455 = vrot.slane %v1450, %v1454
        %v1461 = vunpack.c.l.b16 %v1444
        %v1462 = vunpack.c.l.b16 %v1445
        %v1463 = vunpack.c.l.b16 %v1446
        %v1464 = vunpack.c.l.b16 %v1447
        %v1465 = vpack.c.b16 %v1462, %v1461
        %v1466 = vpack.c.b16 %v1464, %v1463
        %v1470 = vsel %vm1330, %v1448, 0
        %1472 = vmatprep.subr.bf16.mxu0 0
        %1473 = vmatpush1.bf16.msra.mxu0 %v1465
        %1474 = vmatprep.subr.bf16.mxu0 0
        %1475 = vmatpush1.bf16.msra.mxu0 %v1466
        %1476 = vmatprep.subr.bf16.mxu0 0
        %1477 = vmatpush1.bf16.msra.mxu0 0
        %1478 = vmatprep.subr.bf16.mxu0 0
        %1479 = vmatpush1.bf16.msra.mxu0 0
        %1480 = vmatprep.subr.bf16.mxu0 0
        %1481 = vmatpush1.bf16.msra.mxu0 0
        %1482 = vmatprep.subr.bf16.mxu0 0
        %1483 = vmatpush1.bf16.msra.mxu0 0
        %1484 = vmatprep.subr.bf16.mxu0 0
        %1485 = vmatpush1.bf16.msra.mxu0 0
        %1486 = vmatprep.subr.bf16.mxu0 0
        %1487 = vmatpush1.bf16.msra.mxu0 0
        %1488 = vmatprep.subr.bf16.mxu0 0
        %1489 = vmatpush1.bf16.msra.mxu0 0
        %1490 = vmatprep.subr.bf16.mxu0 0
        %1491 = vmatpush1.bf16.msra.mxu0 0
        %1492 = vmatprep.subr.bf16.mxu0 0
        %1493 = vmatpush1.bf16.msra.mxu0 0
        %1494 = vmatprep.subr.bf16.mxu0 0
        %1495 = vmatpush1.bf16.msra.mxu0 0
        %1496 = vmatprep.subr.bf16.mxu0 0
        %1497 = vmatpush1.bf16.msra.mxu0 0
        %1498 = vmatprep.subr.bf16.mxu0 0
        %1499 = vmatpush1.bf16.msra.mxu0 0
        %1500 = vmatprep.subr.bf16.mxu0 0
        %1501 = vmatpush1.bf16.msra.mxu0 0
        %1502 = vmatprep.subr.bf16.mxu0 0
        %1503 = vmatpush1.bf16.msra.mxu0 0
        %1504 = vmatprep.mubr.bf16.mxu0 0
        %1505 = vmatmul.mubr.bf16.gmra.mrb[0].mxu0 %v1470
        %v1506 = vpop.f32.mrb[0].mxu0
        %v1507 = vadd.f32 %v1455, %v1506
        %v1508 = vpop.f32.mrb[0].mxu0
        %v1509 = vpop.f32.mrb[0].mxu0
        %v1510 = vpop.f32.mrb[0].mxu0
        %1511 = vdwg.mxu0
        %v1512 = vld [vmem:[#allocation18] sm:$0xf]
        %v1513 = vld [vmem:[#allocation18 + $0x4] sm:$0xf]
        %v1514 = vld [vmem:[#allocation18 + $0x8] sm:$0xf]
        %v1515 = vld [vmem:[#allocation18 + $0xc] sm:$0xf]
        %v1516 = vpack.c.bf16 %v1301, %v1301
        %v1517 = vld [vmem:[#allocation19] sm:$0x1]
        %v1519 = vlaneseq
        %v1520 = vshrl.u32 %v1519, 7
        %v1521 = vsub.s32 0, %v1520
        %v1522 = vrot.slane %v1517, %v1521
        %v1528 = vunpack.c.l.b16 %v1512
        %v1529 = vunpack.c.l.b16 %v1513
        %v1530 = vunpack.c.l.b16 %v1514
        %v1531 = vunpack.c.l.b16 %v1515
        %v1532 = vpack.c.b16 %v1529, %v1528
        %v1533 = vpack.c.b16 %v1531, %v1530
        %v1537 = vsel %vm1330, %v1516, 0
        %1539 = vmatprep.subr.bf16.mxu0 0
        %1540 = vmatpush1.bf16.msra.mxu0 %v1532
        %1541 = vmatprep.subr.bf16.mxu0 0
        %1542 = vmatpush1.bf16.msra.mxu0 %v1533
        %1543 = vmatprep.subr.bf16.mxu0 0
        %1544 = vmatpush1.bf16.msra.mxu0 0
        %1545 = vmatprep.subr.bf16.mxu0 0
        %1546 = vmatpush1.bf16.msra.mxu0 0
        %1547 = vmatprep.subr.bf16.mxu0 0
        %1548 = vmatpush1.bf16.msra.mxu0 0
        %1549 = vmatprep.subr.bf16.mxu0 0
        %1550 = vmatpush1.bf16.msra.mxu0 0
        %1551 = vmatprep.subr.bf16.mxu0 0
        %1552 = vmatpush1.bf16.msra.mxu0 0
        %1553 = vmatprep.subr.bf16.mxu0 0
        %1554 = vmatpush1.bf16.msra.mxu0 0
        %1555 = vmatprep.subr.bf16.mxu0 0
        %1556 = vmatpush1.bf16.msra.mxu0 0
        %1557 = vmatprep.subr.bf16.mxu0 0
        %1558 = vmatpush1.bf16.msra.mxu0 0
        %1559 = vmatprep.subr.bf16.mxu0 0
        %1560 = vmatpush1.bf16.msra.mxu0 0
        %1561 = vmatprep.subr.bf16.mxu0 0
        %1562 = vmatpush1.bf16.msra.mxu0 0
        %1563 = vmatprep.subr.bf16.mxu0 0
        %1564 = vmatpush1.bf16.msra.mxu0 0
        %1565 = vmatprep.subr.bf16.mxu0 0
        %1566 = vmatpush1.bf16.msra.mxu0 0
        %1567 = vmatprep.subr.bf16.mxu0 0
        %1568 = vmatpush1.bf16.msra.mxu0 0
        %1569 = vmatprep.subr.bf16.mxu0 0
        %1570 = vmatpush1.bf16.msra.mxu0 0
        %1571 = vmatprep.mubr.bf16.mxu0 0
        %1572 = vmatmul.mubr.bf16.gmra.mrb[0].mxu0 %v1537
        %v1573 = vpop.f32.mrb[0].mxu0
        %v1574 = vadd.f32 %v1522, %v1573
        %v1575 = vpop.f32.mrb[0].mxu0
        %v1576 = vpop.f32.mrb[0].mxu0
        %v1577 = vpop.f32.mrb[0].mxu0
        %1578 = vdwg.mxu0
        %vm1579 = vcmp.gt.f32.partialorder %v1574, 0.0
        %v1580 = vmul.f32 %v1574, 1.442695
        %v1581 = vpow.pop %v1580
        %v1582 = vsub.f32 %v1581, 1.0
        %v1583 = vsel %vm1579, %v1574, %v1582
        %v1584 = vadd.f32 %v1583, 1.0
        %s1585 = scalar_lea.vmem [#allocation18], 16
        %v1586 = vld [vmem:[%s1585] sm:$0xf]
        %v1587 = vld [vmem:[%s1585 + $0x4] sm:$0xf]
        %v1588 = vld [vmem:[%s1585 + $0x8] sm:$0xf]
        %v1589 = vld [vmem:[%s1585 + $0xc] sm:$0xf]
        %v1590 = vpack.c.bf16 %v1303, %v1303
        %s1591 = scalar_lea.vmem [#allocation19], 1
        %v1592 = vld [vmem:[%s1591] sm:$0x1]
        %v1594 = vlaneseq
        %v1595 = vshrl.u32 %v1594, 7
        %v1596 = vsub.s32 0, %v1595
        %v1597 = vrot.slane %v1592, %v1596
        %v1603 = vunpack.c.l.b16 %v1586
        %v1604 = vunpack.c.l.b16 %v1587
        %v1605 = vunpack.c.l.b16 %v1588
        %v1606 = vunpack.c.l.b16 %v1589
        %v1607 = vpack.c.b16 %v1604, %v1603
        %v1608 = vpack.c.b16 %v1606, %v1605
        %v1612 = vsel %vm1330, %v1590, 0
        %1614 = vmatprep.subr.bf16.mxu0 0
        %1615 = vmatpush1.bf16.msra.mxu0 %v1607
        %1616 = vmatprep.subr.bf16.mxu0 0
        %1617 = vmatpush1.bf16.msra.mxu0 %v1608
        %1618 = vmatprep.subr.bf16.mxu0 0
        %1619 = vmatpush1.bf16.msra.mxu0 0
        %1620 = vmatprep.subr.bf16.mxu0 0
        %1621 = vmatpush1.bf16.msra.mxu0 0
        %1622 = vmatprep.subr.bf16.mxu0 0
        %1623 = vmatpush1.bf16.msra.mxu0 0
        %1624 = vmatprep.subr.bf16.mxu0 0
        %1625 = vmatpush1.bf16.msra.mxu0 0
        %1626 = vmatprep.subr.bf16.mxu0 0
        %1627 = vmatpush1.bf16.msra.mxu0 0
        %1628 = vmatprep.subr.bf16.mxu0 0
        %1629 = vmatpush1.bf16.msra.mxu0 0
        %1630 = vmatprep.subr.bf16.mxu0 0
        %1631 = vmatpush1.bf16.msra.mxu0 0
        %1632 = vmatprep.subr.bf16.mxu0 0
        %1633 = vmatpush1.bf16.msra.mxu0 0
        %1634 = vmatprep.subr.bf16.mxu0 0
        %1635 = vmatpush1.bf16.msra.mxu0 0
        %1636 = vmatprep.subr.bf16.mxu0 0
        %1637 = vmatpush1.bf16.msra.mxu0 0
        %1638 = vmatprep.subr.bf16.mxu0 0
        %1639 = vmatpush1.bf16.msra.mxu0 0
        %1640 = vmatprep.subr.bf16.mxu0 0
        %1641 = vmatpush1.bf16.msra.mxu0 0
        %1642 = vmatprep.subr.bf16.mxu0 0
        %1643 = vmatpush1.bf16.msra.mxu0 0
        %1644 = vmatprep.subr.bf16.mxu0 0
        %1645 = vmatpush1.bf16.msra.mxu0 0
        %1646 = vmatprep.mubr.bf16.mxu0 0
        %1647 = vmatmul.mubr.bf16.gmra.mrb[0].mxu0 %v1612
        %v1648 = vpop.f32.mrb[0].mxu0
        %v1649 = vadd.f32 %v1597, %v1648
        %v1650 = vpop.f32.mrb[0].mxu0
        %v1651 = vpop.f32.mrb[0].mxu0
        %v1652 = vpop.f32.mrb[0].mxu0
        %1653 = vdwg.mxu0
        %vm1654 = vcmp.gt.f32.partialorder %v1649, 0.0
        %v1655 = vmul.f32 %v1649, 1.442695
        %v1656 = vpow.pop %v1655
        %v1657 = vsub.f32 %v1656, 1.0
        %v1658 = vsel %vm1654, %v1649, %v1657
        %v1659 = vadd.f32 %v1658, 1.0
        %s1660 = scalar_lea.vmem [#allocation18], 32
        %v1661 = vld [vmem:[%s1660] sm:$0xf]
        %v1662 = vld [vmem:[%s1660 + $0x4] sm:$0xf]
        %v1663 = vld [vmem:[%s1660 + $0x8] sm:$0xf]
        %v1664 = vld [vmem:[%s1660 + $0xc] sm:$0xf]
        %v1665 = vpack.c.bf16 %v1305, %v1305
        %s1666 = scalar_lea.vmem [#allocation19], 2
        %v1667 = vld [vmem:[%s1666] sm:$0x1]
        %v1669 = vlaneseq
        %v1670 = vshrl.u32 %v1669, 7
        %v1671 = vsub.s32 0, %v1670
        %v1672 = vrot.slane %v1667, %v1671
        %v1678 = vunpack.c.l.b16 %v1661
        %v1679 = vunpack.c.l.b16 %v1662
        %v1680 = vunpack.c.l.b16 %v1663
        %v1681 = vunpack.c.l.b16 %v1664
        %v1682 = vpack.c.b16 %v1679, %v1678
        %v1683 = vpack.c.b16 %v1681, %v1680
        %v1687 = vsel %vm1330, %v1665, 0
        %1689 = vmatprep.subr.bf16.mxu0 0
        %1690 = vmatpush1.bf16.msra.mxu0 %v1682
        %1691 = vmatprep.subr.bf16.mxu0 0
        %1692 = vmatpush1.bf16.msra.mxu0 %v1683
        %1693 = vmatprep.subr.bf16.mxu0 0
        %1694 = vmatpush1.bf16.msra.mxu0 0
        %1695 = vmatprep.subr.bf16.mxu0 0
        %1696 = vmatpush1.bf16.msra.mxu0 0
        %1697 = vmatprep.subr.bf16.mxu0 0
        %1698 = vmatpush1.bf16.msra.mxu0 0
        %1699 = vmatprep.subr.bf16.mxu0 0
        %1700 = vmatpush1.bf16.msra.mxu0 0
        %1701 = vmatprep.subr.bf16.mxu0 0
        %1702 = vmatpush1.bf16.msra.mxu0 0
        %1703 = vmatprep.subr.bf16.mxu0 0
        %1704 = vmatpush1.bf16.msra.mxu0 0
        %1705 = vmatprep.subr.bf16.mxu0 0
        %1706 = vmatpush1.bf16.msra.mxu0 0
        %1707 = vmatprep.subr.bf16.mxu0 0
        %1708 = vmatpush1.bf16.msra.mxu0 0
        %1709 = vmatprep.subr.bf16.mxu0 0
        %1710 = vmatpush1.bf16.msra.mxu0 0
        %1711 = vmatprep.subr.bf16.mxu0 0
        %1712 = vmatpush1.bf16.msra.mxu0 0
        %1713 = vmatprep.subr.bf16.mxu0 0
        %1714 = vmatpush1.bf16.msra.mxu0 0
        %1715 = vmatprep.subr.bf16.mxu0 0
        %1716 = vmatpush1.bf16.msra.mxu0 0
        %1717 = vmatprep.subr.bf16.mxu0 0
        %1718 = vmatpush1.bf16.msra.mxu0 0
        %1719 = vmatprep.subr.bf16.mxu0 0
        %1720 = vmatpush1.bf16.msra.mxu0 0
        %1721 = vmatprep.mubr.bf16.mxu0 0
        %1722 = vmatmul.mubr.bf16.gmra.mrb[0].mxu0 %v1687
        %v1723 = vpop.f32.mrb[0].mxu0
        %v1724 = vadd.f32 %v1672, %v1723
        %v1725 = vpop.f32.mrb[0].mxu0
        %v1726 = vpop.f32.mrb[0].mxu0
        %v1727 = vpop.f32.mrb[0].mxu0
        %1728 = vdwg.mxu0
        %vm1729 = vcmp.gt.f32.partialorder %v1724, 0.0
        %v1730 = vmul.f32 %v1724, 1.442695
        %v1731 = vpow.pop %v1730
        %v1732 = vsub.f32 %v1731, 1.0
        %v1733 = vsel %vm1729, %v1724, %v1732
        %v1734 = vadd.f32 %v1733, 1.0
        %v1735 = vlaneseq
        %v1736 = vshrl.u32 %v1735, 7
        %v1737 = vlaneseq
        %v1738 = vand.u32 %v1737, 127
        %vm1739 = vcmp.lt.s32.totalorder %v1738, %v1736
        %v1740 = vsel %vm1739, 1, 0
        %v1741 = vcvt.s32.f32 %v1740
        %v1742 = vsub.s32 %v1738, %v1736
        %vm1743 = vcmp.lt.s32.totalorder %v1742, 0
        %v1744 = vsub.s32 0, %v1742
        %v1745 = vsel %vm1743, %v1744, %v1742
        %v1746 = vcvt.s32.f32 %v1745
        %vm1747 = vcmp.le.s32.totalorder %v1736, %v1738
        %v1748 = vsel %vm1747, 1, 0
        %v1749 = vcvt.s32.f32 %v1748
        %v1750 = vmax.f32 %v1584, 1e-24
        %v1751 = vrsqrt.pop %v1750
        %v1752 = vmul.f32 %v1750, %v1751
        %vm1753 = vcmp.eq.f32.partialorder %v1750, inf
        %v1754 = vsel %vm1753, %v1750, %v1752
        %vm1755 = vcmp.eq.f32.partialorder %v1750, 0.0
        %v1756 = vand.u32 %v1750, 2147483648
        %v1757 = vsel %vm1755, %v1756, %v1754
        %v1758 = vmax.f32 %v1659, 1e-24
        %v1759 = vrsqrt.pop %v1758
        %v1760 = vmul.f32 %v1758, %v1759
        %vm1761 = vcmp.eq.f32.partialorder %v1758, inf
        %v1762 = vsel %vm1761, %v1758, %v1760
        %vm1763 = vcmp.eq.f32.partialorder %v1758, 0.0
        %v1764 = vand.u32 %v1758, 2147483648
        %v1765 = vsel %vm1763, %v1764, %v1762
        %v1766 = vmul.f32 %v1369, %v1369
        %v1767 = vadd.f32 %v1766, %v1584
        %vm1768 = vcmask 64512
        %v1769 = vsel %vm1768, %v1767, 0.0
        %1770 = vadd.xlane.f32.xlu0 %v1769
        %v1771 = vpop.xlane.xlu0 %1770
        %v1772 = vmul.f32 %v1438, %v1438
        %v1773 = vadd.f32 %v1772, %v1659
        %v1774 = vsel %vm1768, %v1773, 0.0
        %1775 = vadd.xlane.f32.xlu0 %v1774
        %v1776 = vpop.xlane.xlu0 %1775
        %v1777 = vmul.f32 %v1369, -2.0
        %v1778 = vmul.f32 %v1757, -2.0
        %1780 = vrot.lane.b32.xlu0 %v1778, 8
        %v1781 = vpop.permute.xlu0 %1780
        %v1783 = vsel %vm1768, %v1777, %v1781
        %vm1784 = vcmask 130048
        %v1785 = vsel %vm1784, %v1783, %v1771
        %vm1786 = vcmask 138240
        %v1787 = vsel %vm1786, %v1785, 1.0
        %1789 = vrot.lane.b32.xlu0 %v1765, 8
        %v1790 = vpop.permute.xlu0 %1789
        %v1792 = vsel %vm1768, %v1438, %v1790
        %v1793 = vsel %vm1784, %v1792, 1.0
        %v1794 = vsel %vm1786, %v1793, %v1776
        %vm1795 = vcmask 146432
        %v1797 = vsel %vm1795, %v1787, 0
        %v1800 = vsel %vm1795, %v1794, 0
        %1802 = vmatprep.subr.mxu0 0.0
        %1803 = vmatpush1.xpose.msra.mxu0 %v1800
        %1804 = vmatprep.subr.mxu0 0.0
        %1805 = vmatpush1.xpose.msra.mxu0 0.0
        %1806 = vmatprep.subr.mxu0 0.0
        %1807 = vmatpush1.xpose.msra.mxu0 0.0
        %1808 = vmatprep.subr.mxu0 0.0
        %1809 = vmatpush1.xpose.msra.mxu0 0.0
        %1810 = vmatprep.subr.mxu0 0.0
        %1811 = vmatpush1.xpose.msra.mxu0 0.0
        %1812 = vmatprep.subr.mxu0 0.0
        %1813 = vmatpush1.xpose.msra.mxu0 0.0
        %1814 = vmatprep.subr.mxu0 0.0
        %1815 = vmatpush1.xpose.msra.mxu0 0.0
        %1816 = vmatprep.subr.mxu0 0.0
        %1817 = vmatpush1.xpose.msra.mxu0 0.0
        %1818 = vmatprep.subr.mxu0 0.0
        %1819 = vmatpush1.xpose.msra.mxu0 0.0
        %1820 = vmatprep.subr.mxu0 0.0
        %1821 = vmatpush1.xpose.msra.mxu0 0.0
        %1822 = vmatprep.subr.mxu0 0.0
        %1823 = vmatpush1.xpose.msra.mxu0 0.0
        %1824 = vmatprep.subr.mxu0 0.0
        %1825 = vmatpush1.xpose.msra.mxu0 0.0
        %1826 = vmatprep.subr.mxu0 0.0
        %1827 = vmatpush1.xpose.msra.mxu0 0.0
        %1828 = vmatprep.subr.mxu0 0.0
        %1829 = vmatpush1.xpose.msra.mxu0 0.0
        %1830 = vmatprep.subr.mxu0 0.0
        %1831 = vmatpush1.xpose.msra.mxu0 0.0
        %1832 = vmatprep.subr.mxu0 0.0
        %1833 = vmatpush1.xpose.msra.mxu0 0.0
        %1834 = vmatprep.subr.mxu0 0.0
        %1835 = vmatpush1.xpose.msra.mxu0 0.0
        %1836 = vmatprep.subr.mxu0 0.0
        %1837 = vmatpush1.xpose.msra.mxu0 0.0
        %1838 = vmatprep.subr.mxu0 0.0
        %1839 = vmatpush1.xpose.msra.mxu0 0.0
        %1840 = vmatprep.subr.mxu0 0.0
        %1841 = vmatpush1.xpose.msra.mxu0 0.0
        %1842 = vmatprep.subr.mxu0 0.0
        %1843 = vmatpush1.xpose.msra.mxu0 0.0
        %1844 = vmatprep.subr.mxu0 0.0
        %1845 = vmatpush1.xpose.msra.mxu0 0.0
        %1846 = vmatprep.subr.mxu0 0.0
        %1847 = vmatpush1.xpose.msra.mxu0 0.0
        %1848 = vmatprep.subr.mxu0 0.0
        %1849 = vmatpush1.xpose.msra.mxu0 0.0
        %1850 = vmatprep.subr.mxu0 0.0
        %1851 = vmatpush1.xpose.msra.mxu0 0.0
        %1852 = vmatprep.subr.mxu0 0.0
        %1853 = vmatpush1.xpose.msra.mxu0 0.0
        %1854 = vmatprep.subr.mxu0 0.0
        %1855 = vmatpush1.xpose.msra.mxu0 0.0
        %1856 = vmatprep.subr.mxu0 0.0
        %1857 = vmatpush1.xpose.msra.mxu0 0.0
        %1858 = vmatprep.subr.mxu0 0.0
        %1859 = vmatpush1.xpose.msra.mxu0 0.0
        %1860 = vmatprep.subr.mxu0 0.0
        %1861 = vmatpush1.xpose.msra.mxu0 0.0
        %1862 = vmatprep.subr.mxu0 0.0
        %1863 = vmatpush1.xpose.msra.mxu0 0.0
        %1864 = vmatprep.subr.mxu0 0.0
        %1865 = vmatpush1.xpose.msra.mxu0 0.0
        %1866 = vmatprep.mubr.f32.mxu0 0.0
        %1867 = vmatmul.mubr.f32.gmra.mrb[0].mxu0 %v1797
        %v1868 = vpop.f32.mrb[0].mxu0
        %v1869 = vadd.f32 0.0, %v1868
        %v1870 = vpop.f32.mrb[0].mxu0
        %1871 = vdwg.mxu0
        %v1872 = vsub.f32 0.0, %v1869
        %v1873 = vmul.f32 %v1872, 0.35355338
        %v1874 = vsel %vm1739, %v1873, -1e+32
        %v1875 = vsel %vm1768, %v1874, -inf
        %1876 = vmax.xlane.f32.xlu0 %v1875
        %v1877 = vpop.xlane.xlu0 %1876
        %v1878 = vsub.f32 %v1874, %v1877
        %v1879 = vmul.f32 %v1878, 1.442695
        %v1880 = vpow.pop %v1879
        %v1881 = vsel %vm1768, %v1880, 0.0
        %1882 = vadd.xlane.f32.xlu0 %v1881
        %v1883 = vpop.xlane.xlu0 %1882
        %v1884 = vrcp.pop %v1883
        %v1885 = vmul.f32 %v1880, %v1884
        %v1886 = vmul.f32 %v1885, %v1741
        %v1888 = vsel %vm1768, %v1886, 0
        %1890 = vmatprep.subr.mxu0 0.0
        %1891 = vmatpush1.msra.mxu0 %v1749
        %1892 = vmatprep.subr.mxu0 0.0
        %1893 = vmatpush1.msra.mxu0 0.0
        %1894 = vmatprep.subr.mxu0 0.0
        %1895 = vmatpush1.msra.mxu0 0.0
        %1896 = vmatprep.subr.mxu0 0.0
        %1897 = vmatpush1.msra.mxu0 0.0
        %1898 = vmatprep.subr.mxu0 0.0
        %1899 = vmatpush1.msra.mxu0 0.0
        %1900 = vmatprep.subr.mxu0 0.0
        %1901 = vmatpush1.msra.mxu0 0.0
        %1902 = vmatprep.subr.mxu0 0.0
        %1903 = vmatpush1.msra.mxu0 0.0
        %1904 = vmatprep.subr.mxu0 0.0
        %1905 = vmatpush1.msra.mxu0 0.0
        %1906 = vmatprep.subr.mxu0 0.0
        %1907 = vmatpush1.msra.mxu0 0.0
        %1908 = vmatprep.subr.mxu0 0.0
        %1909 = vmatpush1.msra.mxu0 0.0
        %1910 = vmatprep.subr.mxu0 0.0
        %1911 = vmatpush1.msra.mxu0 0.0
        %1912 = vmatprep.subr.mxu0 0.0
        %1913 = vmatpush1.msra.mxu0 0.0
        %1914 = vmatprep.subr.mxu0 0.0
        %1915 = vmatpush1.msra.mxu0 0.0
        %1916 = vmatprep.subr.mxu0 0.0
        %1917 = vmatpush1.msra.mxu0 0.0
        %1918 = vmatprep.subr.mxu0 0.0
        %1919 = vmatpush1.msra.mxu0 0.0
        %1920 = vmatprep.subr.mxu0 0.0
        %1921 = vmatpush1.msra.mxu0 0.0
        %1922 = vmatprep.subr.mxu0 0.0
        %1923 = vmatpush1.msra.mxu0 0.0
        %1924 = vmatprep.subr.mxu0 0.0
        %1925 = vmatpush1.msra.mxu0 0.0
        %1926 = vmatprep.subr.mxu0 0.0
        %1927 = vmatpush1.msra.mxu0 0.0
        %1928 = vmatprep.subr.mxu0 0.0
        %1929 = vmatpush1.msra.mxu0 0.0
        %1930 = vmatprep.subr.mxu0 0.0
        %1931 = vmatpush1.msra.mxu0 0.0
        %1932 = vmatprep.subr.mxu0 0.0
        %1933 = vmatpush1.msra.mxu0 0.0
        %1934 = vmatprep.subr.mxu0 0.0
        %1935 = vmatpush1.msra.mxu0 0.0
        %1936 = vmatprep.subr.mxu0 0.0
        %1937 = vmatpush1.msra.mxu0 0.0
        %1938 = vmatprep.subr.mxu0 0.0
        %1939 = vmatpush1.msra.mxu0 0.0
        %1940 = vmatprep.subr.mxu0 0.0
        %1941 = vmatpush1.msra.mxu0 0.0
        %1942 = vmatprep.subr.mxu0 0.0
        %1943 = vmatpush1.msra.mxu0 0.0
        %1944 = vmatprep.subr.mxu0 0.0
        %1945 = vmatpush1.msra.mxu0 0.0
        %1946 = vmatprep.subr.mxu0 0.0
        %1947 = vmatpush1.msra.mxu0 0.0
        %1948 = vmatprep.subr.mxu0 0.0
        %1949 = vmatpush1.msra.mxu0 0.0
        %1950 = vmatprep.subr.mxu0 0.0
        %1951 = vmatpush1.msra.mxu0 0.0
        %1952 = vmatprep.subr.mxu0 0.0
        %1953 = vmatpush1.msra.mxu0 0.0
        %1954 = vmatprep.mubr.f32.mxu0 0.0
        %1955 = vmatmul.mubr.f32.gmra.mrb[0].mxu0 %v1888
        %v1956 = vpop.f32.mrb[0].mxu0
        %v1957 = vadd.f32 0.0, %v1956
        %v1958 = vpop.f32.mrb[0].mxu0
        %1959 = vdwg.mxu0
        %v1960 = vsel %vm1768, %v1886, 0.0
        %1961 = vadd.xlane.f32.xlu0 %v1960
        %v1962 = vpop.xlane.xlu0 %1961
        %v1963 = vsub.f32 %v1962, %v1957
        %v1964 = vmul.f32 %v1963, %v1746
        %v1965 = vmax.f32 %v1964, 0.0
        %v1966 = vrsqrt.pop %v1965
        %v1967 = vmul.f32 %v1965, %v1966
        %vm1968 = vcmp.eq.f32.partialorder %v1965, inf
        %v1969 = vsel %vm1968, %v1965, %v1967
        %vm1970 = vcmp.eq.f32.partialorder %v1965, 0.0
        %v1971 = vand.u32 %v1965, 2147483648
        %v1972 = vsel %vm1970, %v1971, %v1969
        %s1973 = sld [smem:[#allocation3]]
        %v1974 = vstv %s1973
        %v1975 = vmul.f32 %v1972, %v1974
        %v1976 = vmul.f32 %v1975, 1.442695
        %v1977 = vpow.pop %v1976
        %v1978 = vmax.f32 %v1977, 1e-05
        %v1979 = vmin.f32 %v1978, 100000.0
        %v1980 = vmul.f32 %v1873, %v1979
        %v1981 = vsel %vm1739, %v1980, -1e+32
        %v1982 = vsel %vm1768, %v1981, -inf
        %1983 = vmax.xlane.f32.xlu0 %v1982
        %v1984 = vpop.xlane.xlu0 %1983
        %v1985 = vsub.f32 %v1981, %v1984
        %v1986 = vmul.f32 %v1985, 1.442695
        %v1987 = vpow.pop %v1986
        %v1988 = vsel %vm1768, %v1987, 0.0
        %1989 = vadd.xlane.f32.xlu0 %v1988
        %v1990 = vpop.xlane.xlu0 %1989
        %v1991 = vrcp.pop %v1990
        %v1992 = vmul.f32 %v1987, %v1991
        %vm1993 = vcmp.eq.s32.totalorder %v1736, 0
        %v1994 = vsel %vm1993, 0.0, %v1992
        %v1995 = vpack.c.bf16 %v1994, %v1994
        %v1996 = vpack.c.bf16 %v1507, %v1507
        %v1998 = vsel %vm1768, %v1995, 0
        %vm2000 = vcmask 1043456
        %v2002 = vsel %vm2000, %v1996, 0
        %2004 = vmatprep.subr.bf16.mxu0 0
        %2005 = vmatpush1.bf16.msra.mxu0 %v2002
        %2006 = vmatprep.subr.bf16.mxu0 0
        %2007 = vmatpush1.bf16.msra.mxu0 0
        %2008 = vmatprep.subr.bf16.mxu0 0
        %2009 = vmatpush1.bf16.msra.mxu0 0
        %2010 = vmatprep.subr.bf16.mxu0 0
        %2011 = vmatpush1.bf16.msra.mxu0 0
        %2012 = vmatprep.subr.bf16.mxu0 0
        %2013 = vmatpush1.bf16.msra.mxu0 0
        %2014 = vmatprep.subr.bf16.mxu0 0
        %2015 = vmatpush1.bf16.msra.mxu0 0
        %2016 = vmatprep.subr.bf16.mxu0 0
        %2017 = vmatpush1.bf16.msra.mxu0 0
        %2018 = vmatprep.subr.bf16.mxu0 0
        %2019 = vmatpush1.bf16.msra.mxu0 0
        %2020 = vmatprep.subr.bf16.mxu0 0
        %2021 = vmatpush1.bf16.msra.mxu0 0
        %2022 = vmatprep.subr.bf16.mxu0 0
        %2023 = vmatpush1.bf16.msra.mxu0 0
        %2024 = vmatprep.subr.bf16.mxu0 0
        %2025 = vmatpush1.bf16.msra.mxu0 0
        %2026 = vmatprep.subr.bf16.mxu0 0
        %2027 = vmatpush1.bf16.msra.mxu0 0
        %2028 = vmatprep.subr.bf16.mxu0 0
        %2029 = vmatpush1.bf16.msra.mxu0 0
        %2030 = vmatprep.subr.bf16.mxu0 0
        %2031 = vmatpush1.bf16.msra.mxu0 0
        %2032 = vmatprep.subr.bf16.mxu0 0
        %2033 = vmatpush1.bf16.msra.mxu0 0
        %2034 = vmatprep.subr.bf16.mxu0 0
        %2035 = vmatpush1.bf16.msra.mxu0 0
        %2036 = vmatprep.mubr.bf16.mxu0 0
        %2037 = vmatmul.mubr.bf16.gmra.mrb[0].mxu0 %v1998
        %v2038 = vpop.f32.mrb[0].mxu0
        %v2039 = vadd.f32 0.0, %v2038
        %v2040 = vpop.f32.mrb[0].mxu0
        %v2041 = vpop.f32.mrb[0].mxu0
        %v2042 = vpop.f32.mrb[0].mxu0
        %2043 = vdwg.mxu0
        %v2044 = vmul.f32 %v1994, %v1994
        %v2045 = vpack.c.bf16 %v2044, %v2044
        %v2046 = vpack.c.bf16 %v1734, %v1734
        %v2048 = vsel %vm1768, %v2045, 0
        %v2051 = vsel %vm2000, %v2046, 0
        %2053 = vmatprep.subr.bf16.mxu0 0
        %2054 = vmatpush1.bf16.msra.mxu0 %v2051
        %2055 = vmatprep.subr.bf16.mxu0 0
        %2056 = vmatpush1.bf16.msra.mxu0 0
        %2057 = vmatprep.subr.bf16.mxu0 0
        %2058 = vmatpush1.bf16.msra.mxu0 0
        %2059 = vmatprep.subr.bf16.mxu0 0
        %2060 = vmatpush1.bf16.msra.mxu0 0
        %2061 = vmatprep.subr.bf16.mxu0 0
        %2062 = vmatpush1.bf16.msra.mxu0 0
        %2063 = vmatprep.subr.bf16.mxu0 0
        %2064 = vmatpush1.bf16.msra.mxu0 0
        %2065 = vmatprep.subr.bf16.mxu0 0
        %2066 = vmatpush1.bf16.msra.mxu0 0
        %2067 = vmatprep.subr.bf16.mxu0 0
        %2068 = vmatpush1.bf16.msra.mxu0 0
        %2069 = vmatprep.subr.bf16.mxu0 0
        %2070 = vmatpush1.bf16.msra.mxu0 0
        %2071 = vmatprep.subr.bf16.mxu0 0
        %2072 = vmatpush1.bf16.msra.mxu0 0
        %2073 = vmatprep.subr.bf16.mxu0 0
        %2074 = vmatpush1.bf16.msra.mxu0 0
        %2075 = vmatprep.subr.bf16.mxu0 0
        %2076 = vmatpush1.bf16.msra.mxu0 0
        %2077 = vmatprep.subr.bf16.mxu0 0
        %2078 = vmatpush1.bf16.msra.mxu0 0
        %2079 = vmatprep.subr.bf16.mxu0 0
        %2080 = vmatpush1.bf16.msra.mxu0 0
        %2081 = vmatprep.subr.bf16.mxu0 0
        %2082 = vmatpush1.bf16.msra.mxu0 0
        %2083 = vmatprep.subr.bf16.mxu0 0
        %2084 = vmatpush1.bf16.msra.mxu0 0
        %2085 = vmatprep.mubr.bf16.mxu0 0
        %2086 = vmatmul.mubr.bf16.gmra.mrb[0].mxu0 %v2048
        %v2087 = vpop.f32.mrb[0].mxu0
        %v2088 = vadd.f32 0.0, %v2087
        %v2089 = vpop.f32.mrb[0].mxu0
        %v2090 = vpop.f32.mrb[0].mxu0
        %v2091 = vpop.f32.mrb[0].mxu0
        %2092 = vdwg.mxu0
        %2094 = vrot.lane.b32.xlu0 %v1767, 120
        %v2095 = vpop.permute.xlu0 %2094
        %v2097 = vsel %vm1768, %v2095, 0.0
        %2098 = vadd.xlane.f32.xlu0 %v2097
        %v2099 = vpop.xlane.xlu0 %2098
        %2101 = vrot.lane.b32.xlu0 %v1773, 120
        %v2102 = vpop.permute.xlu0 %2101
        %v2104 = vsel %vm1768, %v2102, 0.0
        %2105 = vadd.xlane.f32.xlu0 %v2104
        %v2106 = vpop.xlane.xlu0 %2105
        %2108 = vrot.lane.b32.xlu0 %v1777, 120
        %v2109 = vpop.permute.xlu0 %2108
        %v2111 = vsel %vm1768, %v2109, %v1778
        %v2112 = vsel %vm1784, %v2111, %v2099
        %v2113 = vsel %vm1786, %v2112, 1.0
        %2115 = vrot.lane.b32.xlu0 %v1438, 120
        %v2116 = vpop.permute.xlu0 %2115
        %v2118 = vsel %vm1768, %v2116, %v1765
        %v2119 = vsel %vm1784, %v2118, 1.0
        %v2120 = vsel %vm1786, %v2119, %v2106
        %v2122 = vsel %vm1795, %v2113, 0
        %v2125 = vsel %vm1795, %v2120, 0
        %2127 = vmatprep.subr.mxu0 0.0
        %2128 = vmatpush1.xpose.msra.mxu0 %v2125
        %2129 = vmatprep.subr.mxu0 0.0
        %2130 = vmatpush1.xpose.msra.mxu0 0.0
        %2131 = vmatprep.subr.mxu0 0.0
        %2132 = vmatpush1.xpose.msra.mxu0 0.0
        %2133 = vmatprep.subr.mxu0 0.0
        %2134 = vmatpush1.xpose.msra.mxu0 0.0
        %2135 = vmatprep.subr.mxu0 0.0
        %2136 = vmatpush1.xpose.msra.mxu0 0.0
        %2137 = vmatprep.subr.mxu0 0.0
        %2138 = vmatpush1.xpose.msra.mxu0 0.0
        %2139 = vmatprep.subr.mxu0 0.0
        %2140 = vmatpush1.xpose.msra.mxu0 0.0
        %2141 = vmatprep.subr.mxu0 0.0
        %2142 = vmatpush1.xpose.msra.mxu0 0.0
        %2143 = vmatprep.subr.mxu0 0.0
        %2144 = vmatpush1.xpose.msra.mxu0 0.0
        %2145 = vmatprep.subr.mxu0 0.0
        %2146 = vmatpush1.xpose.msra.mxu0 0.0
        %2147 = vmatprep.subr.mxu0 0.0
        %2148 = vmatpush1.xpose.msra.mxu0 0.0
        %2149 = vmatprep.subr.mxu0 0.0
        %2150 = vmatpush1.xpose.msra.mxu0 0.0
        %2151 = vmatprep.subr.mxu0 0.0
        %2152 = vmatpush1.xpose.msra.mxu0 0.0
        %2153 = vmatprep.subr.mxu0 0.0
        %2154 = vmatpush1.xpose.msra.mxu0 0.0
        %2155 = vmatprep.subr.mxu0 0.0
        %2156 = vmatpush1.xpose.msra.mxu0 0.0
        %2157 = vmatprep.subr.mxu0 0.0
        %2158 = vmatpush1.xpose.msra.mxu0 0.0
        %2159 = vmatprep.subr.mxu0 0.0
        %2160 = vmatpush1.xpose.msra.mxu0 0.0
        %2161 = vmatprep.subr.mxu0 0.0
        %2162 = vmatpush1.xpose.msra.mxu0 0.0
        %2163 = vmatprep.subr.mxu0 0.0
        %2164 = vmatpush1.xpose.msra.mxu0 0.0
        %2165 = vmatprep.subr.mxu0 0.0
        %2166 = vmatpush1.xpose.msra.mxu0 0.0
        %2167 = vmatprep.subr.mxu0 0.0
        %2168 = vmatpush1.xpose.msra.mxu0 0.0
        %2169 = vmatprep.subr.mxu0 0.0
        %2170 = vmatpush1.xpose.msra.mxu0 0.0
        %2171 = vmatprep.subr.mxu0 0.0
        %2172 = vmatpush1.xpose.msra.mxu0 0.0
        %2173 = vmatprep.subr.mxu0 0.0
        %2174 = vmatpush1.xpose.msra.mxu0 0.0
        %2175 = vmatprep.subr.mxu0 0.0
        %2176 = vmatpush1.xpose.msra.mxu0 0.0
        %2177 = vmatprep.subr.mxu0 0.0
        %2178 = vmatpush1.xpose.msra.mxu0 0.0
        %2179 = vmatprep.subr.mxu0 0.0
        %2180 = vmatpush1.xpose.msra.mxu0 0.0
        %2181 = vmatprep.subr.mxu0 0.0
        %2182 = vmatpush1.xpose.msra.mxu0 0.0
        %2183 = vmatprep.subr.mxu0 0.0
        %2184 = vmatpush1.xpose.msra.mxu0 0.0
        %2185 = vmatprep.subr.mxu0 0.0
        %2186 = vmatpush1.xpose.msra.mxu0 0.0
        %2187 = vmatprep.subr.mxu0 0.0
        %2188 = vmatpush1.xpose.msra.mxu0 0.0
        %2189 = vmatprep.subr.mxu0 0.0
        %2190 = vmatpush1.xpose.msra.mxu0 0.0
        %2191 = vmatprep.mubr.f32.mxu0 0.0
        %2192 = vmatmul.mubr.f32.gmra.mrb[0].mxu0 %v2122
        %v2193 = vpop.f32.mrb[0].mxu0
        %v2194 = vadd.f32 0.0, %v2193
        %v2195 = vpop.f32.mrb[0].mxu0
        %2196 = vdwg.mxu0
        %v2197 = vsub.f32 0.0, %v2194
        %v2198 = vmul.f32 %v2197, 0.35355338
        %v2199 = vsel %vm1739, %v2198, -1e+32
        %v2200 = vsel %vm1768, %v2199, -inf
        %2201 = vmax.xlane.f32.xlu0 %v2200
        %v2202 = vpop.xlane.xlu0 %2201
        %v2203 = vsub.f32 %v2199, %v2202
        %v2204 = vmul.f32 %v2203, 1.442695
        %v2205 = vpow.pop %v2204
        %v2206 = vsel %vm1768, %v2205, 0.0
        %2207 = vadd.xlane.f32.xlu0 %v2206
        %v2208 = vpop.xlane.xlu0 %2207
        %v2209 = vrcp.pop %v2208
        %v2210 = vmul.f32 %v2205, %v2209
        %v2211 = vmul.f32 %v2210, %v1741
        %v2213 = vsel %vm1768, %v2211, 0
        %2215 = vmatprep.subr.mxu0 0.0
        %2216 = vmatpush1.msra.mxu0 %v1749
        %2217 = vmatprep.subr.mxu0 0.0
        %2218 = vmatpush1.msra.mxu0 0.0
        %2219 = vmatprep.subr.mxu0 0.0
        %2220 = vmatpush1.msra.mxu0 0.0
        %2221 = vmatprep.subr.mxu0 0.0
        %2222 = vmatpush1.msra.mxu0 0.0
        %2223 = vmatprep.subr.mxu0 0.0
        %2224 = vmatpush1.msra.mxu0 0.0
        %2225 = vmatprep.subr.mxu0 0.0
        %2226 = vmatpush1.msra.mxu0 0.0
        %2227 = vmatprep.subr.mxu0 0.0
        %2228 = vmatpush1.msra.mxu0 0.0
        %2229 = vmatprep.subr.mxu0 0.0
        %2230 = vmatpush1.msra.mxu0 0.0
        %2231 = vmatprep.subr.mxu0 0.0
        %2232 = vmatpush1.msra.mxu0 0.0
        %2233 = vmatprep.subr.mxu0 0.0
        %2234 = vmatpush1.msra.mxu0 0.0
        %2235 = vmatprep.subr.mxu0 0.0
        %2236 = vmatpush1.msra.mxu0 0.0
        %2237 = vmatprep.subr.mxu0 0.0
        %2238 = vmatpush1.msra.mxu0 0.0
        %2239 = vmatprep.subr.mxu0 0.0
        %2240 = vmatpush1.msra.mxu0 0.0
        %2241 = vmatprep.subr.mxu0 0.0
        %2242 = vmatpush1.msra.mxu0 0.0
        %2243 = vmatprep.subr.mxu0 0.0
        %2244 = vmatpush1.msra.mxu0 0.0
        %2245 = vmatprep.subr.mxu0 0.0
        %2246 = vmatpush1.msra.mxu0 0.0
        %2247 = vmatprep.subr.mxu0 0.0
        %2248 = vmatpush1.msra.mxu0 0.0
        %2249 = vmatprep.subr.mxu0 0.0
        %2250 = vmatpush1.msra.mxu0 0.0
        %2251 = vmatprep.subr.mxu0 0.0
        %2252 = vmatpush1.msra.mxu0 0.0
        %2253 = vmatprep.subr.mxu0 0.0
        %2254 = vmatpush1.msra.mxu0 0.0
        %2255 = vmatprep.subr.mxu0 0.0
        %2256 = vmatpush1.msra.mxu0 0.0
        %2257 = vmatprep.subr.mxu0 0.0
        %2258 = vmatpush1.msra.mxu0 0.0
        %2259 = vmatprep.subr.mxu0 0.0
        %2260 = vmatpush1.msra.mxu0 0.0
        %2261 = vmatprep.subr.mxu0 0.0
        %2262 = vmatpush1.msra.mxu0 0.0
        %2263 = vmatprep.subr.mxu0 0.0
        %2264 = vmatpush1.msra.mxu0 0.0
        %2265 = vmatprep.subr.mxu0 0.0
        %2266 = vmatpush1.msra.mxu0 0.0
        %2267 = vmatprep.subr.mxu0 0.0
        %2268 = vmatpush1.msra.mxu0 0.0
        %2269 = vmatprep.subr.mxu0 0.0
        %2270 = vmatpush1.msra.mxu0 0.0
        %2271 = vmatprep.subr.mxu0 0.0
        %2272 = vmatpush1.msra.mxu0 0.0
        %2273 = vmatprep.subr.mxu0 0.0
        %2274 = vmatpush1.msra.mxu0 0.0
        %2275 = vmatprep.subr.mxu0 0.0
        %2276 = vmatpush1.msra.mxu0 0.0
        %2277 = vmatprep.subr.mxu0 0.0
        %2278 = vmatpush1.msra.mxu0 0.0
        %2279 = vmatprep.mubr.f32.mxu0 0.0
        %2280 = vmatmul.mubr.f32.gmra.mrb[0].mxu0 %v2213
        %v2281 = vpop.f32.mrb[0].mxu0
        %v2282 = vadd.f32 0.0, %v2281
        %v2283 = vpop.f32.mrb[0].mxu0
        %2284 = vdwg.mxu0
        %v2285 = vsel %vm1768, %v2211, 0.0
        %2286 = vadd.xlane.f32.xlu0 %v2285
        %v2287 = vpop.xlane.xlu0 %2286
        %v2288 = vsub.f32 %v2287, %v2282
        %v2289 = vmul.f32 %v2288, %v1746
        %v2290 = vmax.f32 %v2289, 0.0
        %v2291 = vrsqrt.pop %v2290
        %v2292 = vmul.f32 %v2290, %v2291
        %vm2293 = vcmp.eq.f32.partialorder %v2290, inf
        %v2294 = vsel %vm2293, %v2290, %v2292
        %vm2295 = vcmp.eq.f32.partialorder %v2290, 0.0
        %v2296 = vand.u32 %v2290, 2147483648
        %v2297 = vsel %vm2295, %v2296, %v2294
        %s2298 = sld [smem:[#allocation3 + $0x1]]
        %v2299 = vstv %s2298
        %v2300 = vmul.f32 %v2297, %v2299
        %v2301 = vmul.f32 %v2300, 1.442695
        %v2302 = vpow.pop %v2301
        %v2303 = vmax.f32 %v2302, 1e-05
        %v2304 = vmin.f32 %v2303, 100000.0
        %v2305 = vmul.f32 %v2198, %v2304
        %v2306 = vsel %vm1739, %v2305, -1e+32
        %v2307 = vsel %vm1768, %v2306, -inf
        %2308 = vmax.xlane.f32.xlu0 %v2307
        %v2309 = vpop.xlane.xlu0 %2308
        %v2310 = vsub.f32 %v2306, %v2309
        %v2311 = vmul.f32 %v2310, 1.442695
        %v2312 = vpow.pop %v2311
        %v2313 = vsel %vm1768, %v2312, 0.0
        %2314 = vadd.xlane.f32.xlu0 %v2313
        %v2315 = vpop.xlane.xlu0 %2314
        %v2316 = vrcp.pop %v2315
        %v2317 = vmul.f32 %v2312, %v2316
        %v2318 = vsel %vm1993, 0.0, %v2317
        %v2319 = vpack.c.bf16 %v2318, %v2318
        %2321 = vrot.lane.b32.xlu0 %v1996, 120
        %v2322 = vpop.permute.xlu0 %2321
        %v2324 = vsel %vm1768, %v2319, 0
        %v2327 = vsel %vm2000, %v2322, 0
        %2329 = vmatprep.subr.bf16.mxu0 0
        %2330 = vmatpush1.bf16.msra.mxu0 %v2327
        %2331 = vmatprep.subr.bf16.mxu0 0
        %2332 = vmatpush1.bf16.msra.mxu0 0
        %2333 = vmatprep.subr.bf16.mxu0 0
        %2334 = vmatpush1.bf16.msra.mxu0 0
        %2335 = vmatprep.subr.bf16.mxu0 0
        %2336 = vmatpush1.bf16.msra.mxu0 0
        %2337 = vmatprep.subr.bf16.mxu0 0
        %2338 = vmatpush1.bf16.msra.mxu0 0
        %2339 = vmatprep.subr.bf16.mxu0 0
        %2340 = vmatpush1.bf16.msra.mxu0 0
        %2341 = vmatprep.subr.bf16.mxu0 0
        %2342 = vmatpush1.bf16.msra.mxu0 0
        %2343 = vmatprep.subr.bf16.mxu0 0
        %2344 = vmatpush1.bf16.msra.mxu0 0
        %2345 = vmatprep.subr.bf16.mxu0 0
        %2346 = vmatpush1.bf16.msra.mxu0 0
        %2347 = vmatprep.subr.bf16.mxu0 0
        %2348 = vmatpush1.bf16.msra.mxu0 0
        %2349 = vmatprep.subr.bf16.mxu0 0
        %2350 = vmatpush1.bf16.msra.mxu0 0
        %2351 = vmatprep.subr.bf16.mxu0 0
        %2352 = vmatpush1.bf16.msra.mxu0 0
        %2353 = vmatprep.subr.bf16.mxu0 0
        %2354 = vmatpush1.bf16.msra.mxu0 0
        %2355 = vmatprep.subr.bf16.mxu0 0
        %2356 = vmatpush1.bf16.msra.mxu0 0
        %2357 = vmatprep.subr.bf16.mxu0 0
        %2358 = vmatpush1.bf16.msra.mxu0 0
        %2359 = vmatprep.subr.bf16.mxu0 0
        %2360 = vmatpush1.bf16.msra.mxu0 0
        %2361 = vmatprep.mubr.bf16.mxu0 0
        %2362 = vmatmul.mubr.bf16.gmra.mrb[0].mxu0 %v2324
        %v2363 = vpop.f32.mrb[0].mxu0
        %v2364 = vadd.f32 0.0, %v2363
        %v2365 = vpop.f32.mrb[0].mxu0
        %v2366 = vpop.f32.mrb[0].mxu0
        %v2367 = vpop.f32.mrb[0].mxu0
        %2368 = vdwg.mxu0
        %v2369 = vmul.f32 %v2318, %v2318
        %v2370 = vpack.c.bf16 %v2369, %v2369
        %2372 = vrot.lane.b32.xlu0 %v2046, 120
        %v2373 = vpop.permute.xlu0 %2372
        %v2375 = vsel %vm1768, %v2370, 0
        %v2378 = vsel %vm2000, %v2373, 0
        %2380 = vmatprep.subr.bf16.mxu0 0
        %2381 = vmatpush1.bf16.msra.mxu0 %v2378
        %2382 = vmatprep.subr.bf16.mxu0 0
        %2383 = vmatpush1.bf16.msra.mxu0 0
        %2384 = vmatprep.subr.bf16.mxu0 0
        %2385 = vmatpush1.bf16.msra.mxu0 0
        %2386 = vmatprep.subr.bf16.mxu0 0
        %2387 = vmatpush1.bf16.msra.mxu0 0
        %2388 = vmatprep.subr.bf16.mxu0 0
        %2389 = vmatpush1.bf16.msra.mxu0 0
        %2390 = vmatprep.subr.bf16.mxu0 0
        %2391 = vmatpush1.bf16.msra.mxu0 0
        %2392 = vmatprep.subr.bf16.mxu0 0
        %2393 = vmatpush1.bf16.msra.mxu0 0
        %2394 = vmatprep.subr.bf16.mxu0 0
        %2395 = vmatpush1.bf16.msra.mxu0 0
        %2396 = vmatprep.subr.bf16.mxu0 0
        %2397 = vmatpush1.bf16.msra.mxu0 0
        %2398 = vmatprep.subr.bf16.mxu0 0
        %2399 = vmatpush1.bf16.msra.mxu0 0
        %2400 = vmatprep.subr.bf16.mxu0 0
        %2401 = vmatpush1.bf16.msra.mxu0 0
        %2402 = vmatprep.subr.bf16.mxu0 0
        %2403 = vmatpush1.bf16.msra.mxu0 0
        %2404 = vmatprep.subr.bf16.mxu0 0
        %2405 = vmatpush1.bf16.msra.mxu0 0
        %2406 = vmatprep.subr.bf16.mxu0 0
        %2407 = vmatpush1.bf16.msra.mxu0 0
        %2408 = vmatprep.subr.bf16.mxu0 0
        %2409 = vmatpush1.bf16.msra.mxu0 0
        %2410 = vmatprep.subr.bf16.mxu0 0
        %2411 = vmatpush1.bf16.msra.mxu0 0
        %2412 = vmatprep.mubr.bf16.mxu0 0
        %2413 = vmatmul.mubr.bf16.gmra.mrb[0].mxu0 %v2375
        %v2414 = vpop.f32.mrb[0].mxu0
        %v2415 = vadd.f32 0.0, %v2414
        %v2416 = vpop.f32.mrb[0].mxu0
        %v2417 = vpop.f32.mrb[0].mxu0
        %v2418 = vpop.f32.mrb[0].mxu0
        %2419 = vdwg.mxu0
        %2420 = vrot.lane.b32.xlu0 %v1767, 112
        %v2421 = vpop.permute.xlu0 %2420
        %v2423 = vsel %vm1768, %v2421, 0.0
        %2424 = vadd.xlane.f32.xlu0 %v2423
        %v2425 = vpop.xlane.xlu0 %2424
        %2426 = vrot.lane.b32.xlu0 %v1773, 112
        %v2427 = vpop.permute.xlu0 %2426
        %v2429 = vsel %vm1768, %v2427, 0.0
        %2430 = vadd.xlane.f32.xlu0 %v2429
        %v2431 = vpop.xlane.xlu0 %2430
        %2432 = vrot.lane.b32.xlu0 %v1777, 112
        %v2433 = vpop.permute.xlu0 %2432
        %2435 = vrot.lane.b32.xlu0 %v1778, 120
        %v2436 = vpop.permute.xlu0 %2435
        %v2438 = vsel %vm1768, %v2433, %v2436
        %v2439 = vsel %vm1784, %v2438, %v2425
        %v2440 = vsel %vm1786, %v2439, 1.0
        %2441 = vrot.lane.b32.xlu0 %v1438, 112
        %v2442 = vpop.permute.xlu0 %2441
        %2444 = vrot.lane.b32.xlu0 %v1765, 120
        %v2445 = vpop.permute.xlu0 %2444
        %v2447 = vsel %vm1768, %v2442, %v2445
        %v2448 = vsel %vm1784, %v2447, 1.0
        %v2449 = vsel %vm1786, %v2448, %v2431
        %v2451 = vsel %vm1795, %v2440, 0
        %v2454 = vsel %vm1795, %v2449, 0
        %2456 = vmatprep.subr.mxu0 0.0
        %2457 = vmatpush1.xpose.msra.mxu0 %v2454
        %2458 = vmatprep.subr.mxu0 0.0
        %2459 = vmatpush1.xpose.msra.mxu0 0.0
        %2460 = vmatprep.subr.mxu0 0.0
        %2461 = vmatpush1.xpose.msra.mxu0 0.0
        %2462 = vmatprep.subr.mxu0 0.0
        %2463 = vmatpush1.xpose.msra.mxu0 0.0
        %2464 = vmatprep.subr.mxu0 0.0
        %2465 = vmatpush1.xpose.msra.mxu0 0.0
        %2466 = vmatprep.subr.mxu0 0.0
        %2467 = vmatpush1.xpose.msra.mxu0 0.0
        %2468 = vmatprep.subr.mxu0 0.0
        %2469 = vmatpush1.xpose.msra.mxu0 0.0
        %2470 = vmatprep.subr.mxu0 0.0
        %2471 = vmatpush1.xpose.msra.mxu0 0.0
        %2472 = vmatprep.subr.mxu0 0.0
        %2473 = vmatpush1.xpose.msra.mxu0 0.0
        %2474 = vmatprep.subr.mxu0 0.0
        %2475 = vmatpush1.xpose.msra.mxu0 0.0
        %2476 = vmatprep.subr.mxu0 0.0
        %2477 = vmatpush1.xpose.msra.mxu0 0.0
        %2478 = vmatprep.subr.mxu0 0.0
        %2479 = vmatpush1.xpose.msra.mxu0 0.0
        %2480 = vmatprep.subr.mxu0 0.0
        %2481 = vmatpush1.xpose.msra.mxu0 0.0
        %2482 = vmatprep.subr.mxu0 0.0
        %2483 = vmatpush1.xpose.msra.mxu0 0.0
        %2484 = vmatprep.subr.mxu0 0.0
        %2485 = vmatpush1.xpose.msra.mxu0 0.0
        %2486 = vmatprep.subr.mxu0 0.0
        %2487 = vmatpush1.xpose.msra.mxu0 0.0
        %2488 = vmatprep.subr.mxu0 0.0
        %2489 = vmatpush1.xpose.msra.mxu0 0.0
        %2490 = vmatprep.subr.mxu0 0.0
        %2491 = vmatpush1.xpose.msra.mxu0 0.0
        %2492 = vmatprep.subr.mxu0 0.0
        %2493 = vmatpush1.xpose.msra.mxu0 0.0
        %2494 = vmatprep.subr.mxu0 0.0
        %2495 = vmatpush1.xpose.msra.mxu0 0.0
        %2496 = vmatprep.subr.mxu0 0.0
        %2497 = vmatpush1.xpose.msra.mxu0 0.0
        %2498 = vmatprep.subr.mxu0 0.0
        %2499 = vmatpush1.xpose.msra.mxu0 0.0
        %2500 = vmatprep.subr.mxu0 0.0
        %2501 = vmatpush1.xpose.msra.mxu0 0.0
        %2502 = vmatprep.subr.mxu0 0.0
        %2503 = vmatpush1.xpose.msra.mxu0 0.0
        %2504 = vmatprep.subr.mxu0 0.0
        %2505 = vmatpush1.xpose.msra.mxu0 0.0
        %2506 = vmatprep.subr.mxu0 0.0
        %2507 = vmatpush1.xpose.msra.mxu0 0.0
        %2508 = vmatprep.subr.mxu0 0.0
        %2509 = vmatpush1.xpose.msra.mxu0 0.0
        %2510 = vmatprep.subr.mxu0 0.0
        %2511 = vmatpush1.xpose.msra.mxu0 0.0
        %2512 = vmatprep.subr.mxu0 0.0
        %2513 = vmatpush1.xpose.msra.mxu0 0.0
        %2514 = vmatprep.subr.mxu0 0.0
        %2515 = vmatpush1.xpose.msra.mxu0 0.0
        %2516 = vmatprep.subr.mxu0 0.0
        %2517 = vmatpush1.xpose.msra.mxu0 0.0
        %2518 = vmatprep.subr.mxu0 0.0
        %2519 = vmatpush1.xpose.msra.mxu0 0.0
        %2520 = vmatprep.mubr.f32.mxu0 0.0
        %2521 = vmatmul.mubr.f32.gmra.mrb[0].mxu0 %v2451
        %v2522 = vpop.f32.mrb[0].mxu0
        %v2523 = vadd.f32 0.0, %v2522
        %v2524 = vpop.f32.mrb[0].mxu0
        %2525 = vdwg.mxu0
        %v2526 = vsub.f32 0.0, %v2523
        %v2527 = vmul.f32 %v2526, 0.35355338
        %v2528 = vsel %vm1739, %v2527, -1e+32
        %v2529 = vsel %vm1768, %v2528, -inf
        %2530 = vmax.xlane.f32.xlu0 %v2529
        %v2531 = vpop.xlane.xlu0 %2530
        %v2532 = vsub.f32 %v2528, %v2531
        %v2533 = vmul.f32 %v2532, 1.442695
        %v2534 = vpow.pop %v2533
        %v2535 = vsel %vm1768, %v2534, 0.0
        %2536 = vadd.xlane.f32.xlu0 %v2535
        %v2537 = vpop.xlane.xlu0 %2536
        %v2538 = vrcp.pop %v2537
        %v2539 = vmul.f32 %v2534, %v2538
        %v2540 = vmul.f32 %v2539, %v1741
        %v2542 = vsel %vm1768, %v2540, 0
        %2544 = vmatprep.subr.mxu0 0.0
        %2545 = vmatpush1.msra.mxu0 %v1749
        %2546 = vmatprep.subr.mxu0 0.0
        %2547 = vmatpush1.msra.mxu0 0.0
        %2548 = vmatprep.subr.mxu0 0.0
        %2549 = vmatpush1.msra.mxu0 0.0
        %2550 = vmatprep.subr.mxu0 0.0
        %2551 = vmatpush1.msra.mxu0 0.0
        %2552 = vmatprep.subr.mxu0 0.0
        %2553 = vmatpush1.msra.mxu0 0.0
        %2554 = vmatprep.subr.mxu0 0.0
        %2555 = vmatpush1.msra.mxu0 0.0
        %2556 = vmatprep.subr.mxu0 0.0
        %2557 = vmatpush1.msra.mxu0 0.0
        %2558 = vmatprep.subr.mxu0 0.0
        %2559 = vmatpush1.msra.mxu0 0.0
        %2560 = vmatprep.subr.mxu0 0.0
        %2561 = vmatpush1.msra.mxu0 0.0
        %2562 = vmatprep.subr.mxu0 0.0
        %2563 = vmatpush1.msra.mxu0 0.0
        %2564 = vmatprep.subr.mxu0 0.0
        %2565 = vmatpush1.msra.mxu0 0.0
        %2566 = vmatprep.subr.mxu0 0.0
        %2567 = vmatpush1.msra.mxu0 0.0
        %2568 = vmatprep.subr.mxu0 0.0
        %2569 = vmatpush1.msra.mxu0 0.0
        %2570 = vmatprep.subr.mxu0 0.0
        %2571 = vmatpush1.msra.mxu0 0.0
        %2572 = vmatprep.subr.mxu0 0.0
        %2573 = vmatpush1.msra.mxu0 0.0
        %2574 = vmatprep.subr.mxu0 0.0
        %2575 = vmatpush1.msra.mxu0 0.0
        %2576 = vmatprep.subr.mxu0 0.0
        %2577 = vmatpush1.msra.mxu0 0.0
        %2578 = vmatprep.subr.mxu0 0.0
        %2579 = vmatpush1.msra.mxu0 0.0
        %2580 = vmatprep.subr.mxu0 0.0
        %2581 = vmatpush1.msra.mxu0 0.0
        %2582 = vmatprep.subr.mxu0 0.0
        %2583 = vmatpush1.msra.mxu0 0.0
        %2584 = vmatprep.subr.mxu0 0.0
        %2585 = vmatpush1.msra.mxu0 0.0
        %2586 = vmatprep.subr.mxu0 0.0
        %2587 = vmatpush1.msra.mxu0 0.0
        %2588 = vmatprep.subr.mxu0 0.0
        %2589 = vmatpush1.msra.mxu0 0.0
        %2590 = vmatprep.subr.mxu0 0.0
        %2591 = vmatpush1.msra.mxu0 0.0
        %2592 = vmatprep.subr.mxu0 0.0
        %2593 = vmatpush1.msra.mxu0 0.0
        %2594 = vmatprep.subr.mxu0 0.0
        %2595 = vmatpush1.msra.mxu0 0.0
        %2596 = vmatprep.subr.mxu0 0.0
        %2597 = vmatpush1.msra.mxu0 0.0
        %2598 = vmatprep.subr.mxu0 0.0
        %2599 = vmatpush1.msra.mxu0 0.0
        %2600 = vmatprep.subr.mxu0 0.0
        %2601 = vmatpush1.msra.mxu0 0.0
        %2602 = vmatprep.subr.mxu0 0.0
        %2603 = vmatpush1.msra.mxu0 0.0
        %2604 = vmatprep.subr.mxu0 0.0
        %2605 = vmatpush1.msra.mxu0 0.0
        %2606 = vmatprep.subr.mxu0 0.0
        %2607 = vmatpush1.msra.mxu0 0.0
        %2608 = vmatprep.mubr.f32.mxu0 0.0
        %2609 = vmatmul.mubr.f32.gmra.mrb[0].mxu0 %v2542
        %v2610 = vpop.f32.mrb[0].mxu0
        %v2611 = vadd.f32 0.0, %v2610
        %v2612 = vpop.f32.mrb[0].mxu0
        %2613 = vdwg.mxu0
        %v2614 = vsel %vm1768, %v2540, 0.0
        %2615 = vadd.xlane.f32.xlu0 %v2614
        %v2616 = vpop.xlane.xlu0 %2615
        %v2617 = vsub.f32 %v2616, %v2611
        %v2618 = vmul.f32 %v2617, %v1746
        %v2619 = vmax.f32 %v2618, 0.0
        %v2620 = vrsqrt.pop %v2619
        %v2621 = vmul.f32 %v2619, %v2620
        %vm2622 = vcmp.eq.f32.partialorder %v2619, inf
        %v2623 = vsel %vm2622, %v2619, %v2621
        %vm2624 = vcmp.eq.f32.partialorder %v2619, 0.0
        %v2625 = vand.u32 %v2619, 2147483648
        %v2626 = vsel %vm2624, %v2625, %v2623
        %s2627 = sld [smem:[#allocation3 + $0x2]]
        %v2628 = vstv %s2627
        %v2629 = vmul.f32 %v2626, %v2628
        %v2630 = vmul.f32 %v2629, 1.442695
        %v2631 = vpow.pop %v2630
        %v2632 = vmax.f32 %v2631, 1e-05
        %v2633 = vmin.f32 %v2632, 100000.0
        %v2634 = vmul.f32 %v2527, %v2633
        %v2635 = vsel %vm1739, %v2634, -1e+32
        %v2636 = vsel %vm1768, %v2635, -inf
        %2637 = vmax.xlane.f32.xlu0 %v2636
        %v2638 = vpop.xlane.xlu0 %2637
        %v2639 = vsub.f32 %v2635, %v2638
        %v2640 = vmul.f32 %v2639, 1.442695
        %v2641 = vpow.pop %v2640
        %v2642 = vsel %vm1768, %v2641, 0.0
        %2643 = vadd.xlane.f32.xlu0 %v2642
        %v2644 = vpop.xlane.xlu0 %2643
        %v2645 = vrcp.pop %v2644
        %v2646 = vmul.f32 %v2641, %v2645
        %v2647 = vsel %vm1993, 0.0, %v2646
        %v2648 = vpack.c.bf16 %v2647, %v2647
        %2649 = vrot.lane.b32.xlu0 %v1996, 112
        %v2650 = vpop.permute.xlu0 %2649
        %v2652 = vsel %vm1768, %v2648, 0
        %v2655 = vsel %vm2000, %v2650, 0
        %2657 = vmatprep.subr.bf16.mxu0 0
        %2658 = vmatpush1.bf16.msra.mxu0 %v2655
        %2659 = vmatprep.subr.bf16.mxu0 0
        %2660 = vmatpush1.bf16.msra.mxu0 0
        %2661 = vmatprep.subr.bf16.mxu0 0
        %2662 = vmatpush1.bf16.msra.mxu0 0
        %2663 = vmatprep.subr.bf16.mxu0 0
        %2664 = vmatpush1.bf16.msra.mxu0 0
        %2665 = vmatprep.subr.bf16.mxu0 0
        %2666 = vmatpush1.bf16.msra.mxu0 0
        %2667 = vmatprep.subr.bf16.mxu0 0
        %2668 = vmatpush1.bf16.msra.mxu0 0
        %2669 = vmatprep.subr.bf16.mxu0 0
        %2670 = vmatpush1.bf16.msra.mxu0 0
        %2671 = vmatprep.subr.bf16.mxu0 0
        %2672 = vmatpush1.bf16.msra.mxu0 0
        %2673 = vmatprep.subr.bf16.mxu0 0
        %2674 = vmatpush1.bf16.msra.mxu0 0
        %2675 = vmatprep.subr.bf16.mxu0 0
        %2676 = vmatpush1.bf16.msra.mxu0 0
        %2677 = vmatprep.subr.bf16.mxu0 0
        %2678 = vmatpush1.bf16.msra.mxu0 0
        %2679 = vmatprep.subr.bf16.mxu0 0
        %2680 = vmatpush1.bf16.msra.mxu0 0
        %2681 = vmatprep.subr.bf16.mxu0 0
        %2682 = vmatpush1.bf16.msra.mxu0 0
        %2683 = vmatprep.subr.bf16.mxu0 0
        %2684 = vmatpush1.bf16.msra.mxu0 0
        %2685 = vmatprep.subr.bf16.mxu0 0
        %2686 = vmatpush1.bf16.msra.mxu0 0
        %2687 = vmatprep.subr.bf16.mxu0 0
        %2688 = vmatpush1.bf16.msra.mxu0 0
        %2689 = vmatprep.mubr.bf16.mxu0 0
        %2690 = vmatmul.mubr.bf16.gmra.mrb[0].mxu0 %v2652
        %v2691 = vpop.f32.mrb[0].mxu0
        %v2692 = vadd.f32 0.0, %v2691
        %v2693 = vpop.f32.mrb[0].mxu0
        %v2694 = vpop.f32.mrb[0].mxu0
        %v2695 = vpop.f32.mrb[0].mxu0
        %2696 = vdwg.mxu0
        %v2697 = vmul.f32 %v2647, %v2647
        %v2698 = vpack.c.bf16 %v2697, %v2697
        %2699 = vrot.lane.b32.xlu0 %v2046, 112
        %v2700 = vpop.permute.xlu0 %2699
        %v2702 = vsel %vm1768, %v2698, 0
        %v2705 = vsel %vm2000, %v2700, 0
        %2707 = vmatprep.subr.bf16.mxu0 0
        %2708 = vmatpush1.bf16.msra.mxu0 %v2705
        %2709 = vmatprep.subr.bf16.mxu0 0
        %2710 = vmatpush1.bf16.msra.mxu0 0
        %2711 = vmatprep.subr.bf16.mxu0 0
        %2712 = vmatpush1.bf16.msra.mxu0 0
        %2713 = vmatprep.subr.bf16.mxu0 0
        %2714 = vmatpush1.bf16.msra.mxu0 0
        %2715 = vmatprep.subr.bf16.mxu0 0
        %2716 = vmatpush1.bf16.msra.mxu0 0
        %2717 = vmatprep.subr.bf16.mxu0 0
        %2718 = vmatpush1.bf16.msra.mxu0 0
        %2719 = vmatprep.subr.bf16.mxu0 0
        %2720 = vmatpush1.bf16.msra.mxu0 0
        %2721 = vmatprep.subr.bf16.mxu0 0
        %2722 = vmatpush1.bf16.msra.mxu0 0
        %2723 = vmatprep.subr.bf16.mxu0 0
        %2724 = vmatpush1.bf16.msra.mxu0 0
        %2725 = vmatprep.subr.bf16.mxu0 0
        %2726 = vmatpush1.bf16.msra.mxu0 0
        %2727 = vmatprep.subr.bf16.mxu0 0
        %2728 = vmatpush1.bf16.msra.mxu0 0
        %2729 = vmatprep.subr.bf16.mxu0 0
        %2730 = vmatpush1.bf16.msra.mxu0 0
        %2731 = vmatprep.subr.bf16.mxu0 0
        %2732 = vmatpush1.bf16.msra.mxu0 0
        %2733 = vmatprep.subr.bf16.mxu0 0
        %2734 = vmatpush1.bf16.msra.mxu0 0
        %2735 = vmatprep.subr.bf16.mxu0 0
        %2736 = vmatpush1.bf16.msra.mxu0 0
        %2737 = vmatprep.subr.bf16.mxu0 0
        %2738 = vmatpush1.bf16.msra.mxu0 0
        %2739 = vmatprep.mubr.bf16.mxu0 0
        %2740 = vmatmul.mubr.bf16.gmra.mrb[0].mxu0 %v2702
        %v2741 = vpop.f32.mrb[0].mxu0
        %v2742 = vadd.f32 0.0, %v2741
        %v2743 = vpop.f32.mrb[0].mxu0
        %v2744 = vpop.f32.mrb[0].mxu0
        %v2745 = vpop.f32.mrb[0].mxu0
        %2746 = vdwg.mxu0
        %2747 = vrot.lane.b32.xlu0 %v1767, 104
        %v2748 = vpop.permute.xlu0 %2747
        %v2750 = vsel %vm1768, %v2748, 0.0
        %2751 = vadd.xlane.f32.xlu0 %v2750
        %v2752 = vpop.xlane.xlu0 %2751
        %2753 = vrot.lane.b32.xlu0 %v1773, 104
        %v2754 = vpop.permute.xlu0 %2753
        %v2756 = vsel %vm1768, %v2754, 0.0
        %2757 = vadd.xlane.f32.xlu0 %v2756
        %v2758 = vpop.xlane.xlu0 %2757
        %2759 = vrot.lane.b32.xlu0 %v1777, 104
        %v2760 = vpop.permute.xlu0 %2759
        %2762 = vrot.lane.b32.xlu0 %v1778, 112
        %v2763 = vpop.permute.xlu0 %2762
        %v2765 = vsel %vm1768, %v2760, %v2763
        %v2766 = vsel %vm1784, %v2765, %v2752
        %v2767 = vsel %vm1786, %v2766, 1.0
        %2768 = vrot.lane.b32.xlu0 %v1438, 104
        %v2769 = vpop.permute.xlu0 %2768
        %2771 = vrot.lane.b32.xlu0 %v1765, 112
        %v2772 = vpop.permute.xlu0 %2771
        %v2774 = vsel %vm1768, %v2769, %v2772
        %v2775 = vsel %vm1784, %v2774, 1.0
        %v2776 = vsel %vm1786, %v2775, %v2758
        %v2778 = vsel %vm1795, %v2767, 0
        %v2781 = vsel %vm1795, %v2776, 0
        %2783 = vmatprep.subr.mxu0 0.0
        %2784 = vmatpush1.xpose.msra.mxu0 %v2781
        %2785 = vmatprep.subr.mxu0 0.0
        %2786 = vmatpush1.xpose.msra.mxu0 0.0
        %2787 = vmatprep.subr.mxu0 0.0
        %2788 = vmatpush1.xpose.msra.mxu0 0.0
        %2789 = vmatprep.subr.mxu0 0.0
        %2790 = vmatpush1.xpose.msra.mxu0 0.0
        %2791 = vmatprep.subr.mxu0 0.0
        %2792 = vmatpush1.xpose.msra.mxu0 0.0
        %2793 = vmatprep.subr.mxu0 0.0
        %2794 = vmatpush1.xpose.msra.mxu0 0.0
        %2795 = vmatprep.subr.mxu0 0.0
        %2796 = vmatpush1.xpose.msra.mxu0 0.0
        %2797 = vmatprep.subr.mxu0 0.0
        %2798 = vmatpush1.xpose.msra.mxu0 0.0
        %2799 = vmatprep.subr.mxu0 0.0
        %2800 = vmatpush1.xpose.msra.mxu0 0.0
        %2801 = vmatprep.subr.mxu0 0.0
        %2802 = vmatpush1.xpose.msra.mxu0 0.0
        %2803 = vmatprep.subr.mxu0 0.0
        %2804 = vmatpush1.xpose.msra.mxu0 0.0
        %2805 = vmatprep.subr.mxu0 0.0
        %2806 = vmatpush1.xpose.msra.mxu0 0.0
        %2807 = vmatprep.subr.mxu0 0.0
        %2808 = vmatpush1.xpose.msra.mxu0 0.0
        %2809 = vmatprep.subr.mxu0 0.0
        %2810 = vmatpush1.xpose.msra.mxu0 0.0
        %2811 = vmatprep.subr.mxu0 0.0
        %2812 = vmatpush1.xpose.msra.mxu0 0.0
        %2813 = vmatprep.subr.mxu0 0.0
        %2814 = vmatpush1.xpose.msra.mxu0 0.0
        %2815 = vmatprep.subr.mxu0 0.0
        %2816 = vmatpush1.xpose.msra.mxu0 0.0
        %2817 = vmatprep.subr.mxu0 0.0
        %2818 = vmatpush1.xpose.msra.mxu0 0.0
        %2819 = vmatprep.subr.mxu0 0.0
        %2820 = vmatpush1.xpose.msra.mxu0 0.0
        %2821 = vmatprep.subr.mxu0 0.0
        %2822 = vmatpush1.xpose.msra.mxu0 0.0
        %2823 = vmatprep.subr.mxu0 0.0
        %2824 = vmatpush1.xpose.msra.mxu0 0.0
        %2825 = vmatprep.subr.mxu0 0.0
        %2826 = vmatpush1.xpose.msra.mxu0 0.0
        %2827 = vmatprep.subr.mxu0 0.0
        %2828 = vmatpush1.xpose.msra.mxu0 0.0
        %2829 = vmatprep.subr.mxu0 0.0
        %2830 = vmatpush1.xpose.msra.mxu0 0.0
        %2831 = vmatprep.subr.mxu0 0.0
        %2832 = vmatpush1.xpose.msra.mxu0 0.0
        %2833 = vmatprep.subr.mxu0 0.0
        %2834 = vmatpush1.xpose.msra.mxu0 0.0
        %2835 = vmatprep.subr.mxu0 0.0
        %2836 = vmatpush1.xpose.msra.mxu0 0.0
        %2837 = vmatprep.subr.mxu0 0.0
        %2838 = vmatpush1.xpose.msra.mxu0 0.0
        %2839 = vmatprep.subr.mxu0 0.0
        %2840 = vmatpush1.xpose.msra.mxu0 0.0
        %2841 = vmatprep.subr.mxu0 0.0
        %2842 = vmatpush1.xpose.msra.mxu0 0.0
        %2843 = vmatprep.subr.mxu0 0.0
        %2844 = vmatpush1.xpose.msra.mxu0 0.0
        %2845 = vmatprep.subr.mxu0 0.0
        %2846 = vmatpush1.xpose.msra.mxu0 0.0
        %2847 = vmatprep.mubr.f32.mxu0 0.0
        %2848 = vmatmul.mubr.f32.gmra.mrb[0].mxu0 %v2778
        %v2849 = vpop.f32.mrb[0].mxu0
        %v2850 = vadd.f32 0.0, %v2849
        %v2851 = vpop.f32.mrb[0].mxu0
        %2852 = vdwg.mxu0
        %v2853 = vsub.f32 0.0, %v2850
        %v2854 = vmul.f32 %v2853, 0.35355338
        %v2855 = vsel %vm1739, %v2854, -1e+32
        %v2856 = vsel %vm1768, %v2855, -inf
        %2857 = vmax.xlane.f32.xlu0 %v2856
        %v2858 = vpop.xlane.xlu0 %2857
        %v2859 = vsub.f32 %v2855, %v2858
        %v2860 = vmul.f32 %v2859, 1.442695
        %v2861 = vpow.pop %v2860
        %v2862 = vsel %vm1768, %v2861, 0.0
        %2863 = vadd.xlane.f32.xlu0 %v2862
        %v2864 = vpop.xlane.xlu0 %2863
        %v2865 = vrcp.pop %v2864
        %v2866 = vmul.f32 %v2861, %v2865
        %v2867 = vmul.f32 %v2866, %v1741
        %v2869 = vsel %vm1768, %v2867, 0
        %2871 = vmatprep.subr.mxu0 0.0
        %2872 = vmatpush1.msra.mxu0 %v1749
        %2873 = vmatprep.subr.mxu0 0.0
        %2874 = vmatpush1.msra.mxu0 0.0
        %2875 = vmatprep.subr.mxu0 0.0
        %2876 = vmatpush1.msra.mxu0 0.0
        %2877 = vmatprep.subr.mxu0 0.0
        %2878 = vmatpush1.msra.mxu0 0.0
        %2879 = vmatprep.subr.mxu0 0.0
        %2880 = vmatpush1.msra.mxu0 0.0
        %2881 = vmatprep.subr.mxu0 0.0
        %2882 = vmatpush1.msra.mxu0 0.0
        %2883 = vmatprep.subr.mxu0 0.0
        %2884 = vmatpush1.msra.mxu0 0.0
        %2885 = vmatprep.subr.mxu0 0.0
        %2886 = vmatpush1.msra.mxu0 0.0
        %2887 = vmatprep.subr.mxu0 0.0
        %2888 = vmatpush1.msra.mxu0 0.0
        %2889 = vmatprep.subr.mxu0 0.0
        %2890 = vmatpush1.msra.mxu0 0.0
        %2891 = vmatprep.subr.mxu0 0.0
        %2892 = vmatpush1.msra.mxu0 0.0
        %2893 = vmatprep.subr.mxu0 0.0
        %2894 = vmatpush1.msra.mxu0 0.0
        %2895 = vmatprep.subr.mxu0 0.0
        %2896 = vmatpush1.msra.mxu0 0.0
        %2897 = vmatprep.subr.mxu0 0.0
        %2898 = vmatpush1.msra.mxu0 0.0
        %2899 = vmatprep.subr.mxu0 0.0
        %2900 = vmatpush1.msra.mxu0 0.0
        %2901 = vmatprep.subr.mxu0 0.0
        %2902 = vmatpush1.msra.mxu0 0.0
        %2903 = vmatprep.subr.mxu0 0.0
        %2904 = vmatpush1.msra.mxu0 0.0
        %2905 = vmatprep.subr.mxu0 0.0
        %2906 = vmatpush1.msra.mxu0 0.0
        %2907 = vmatprep.subr.mxu0 0.0
        %2908 = vmatpush1.msra.mxu0 0.0
        %2909 = vmatprep.subr.mxu0 0.0
        %2910 = vmatpush1.msra.mxu0 0.0
        %2911 = vmatprep.subr.mxu0 0.0
        %2912 = vmatpush1.msra.mxu0 0.0
        %2913 = vmatprep.subr.mxu0 0.0
        %2914 = vmatpush1.msra.mxu0 0.0
        %2915 = vmatprep.subr.mxu0 0.0
        %2916 = vmatpush1.msra.mxu0 0.0
        %2917 = vmatprep.subr.mxu0 0.0
        %2918 = vmatpush1.msra.mxu0 0.0
        %2919 = vmatprep.subr.mxu0 0.0
        %2920 = vmatpush1.msra.mxu0 0.0
        %2921 = vmatprep.subr.mxu0 0.0
        %2922 = vmatpush1.msra.mxu0 0.0
        %2923 = vmatprep.subr.mxu0 0.0
        %2924 = vmatpush1.msra.mxu0 0.0
        %2925 = vmatprep.subr.mxu0 0.0
        %2926 = vmatpush1.msra.mxu0 0.0
        %2927 = vmatprep.subr.mxu0 0.0
        %2928 = vmatpush1.msra.mxu0 0.0
        %2929 = vmatprep.subr.mxu0 0.0
        %2930 = vmatpush1.msra.mxu0 0.0
        %2931 = vmatprep.subr.mxu0 0.0
        %2932 = vmatpush1.msra.mxu0 0.0
        %2933 = vmatprep.subr.mxu0 0.0
        %2934 = vmatpush1.msra.mxu0 0.0
        %2935 = vmatprep.mubr.f32.mxu0 0.0
        %2936 = vmatmul.mubr.f32.gmra.mrb[0].mxu0 %v2869
        %v2937 = vpop.f32.mrb[0].mxu0
        %v2938 = vadd.f32 0.0, %v2937
        %v2939 = vpop.f32.mrb[0].mxu0
        %2940 = vdwg.mxu0
        %v2941 = vsel %vm1768, %v2867, 0.0
        %2942 = vadd.xlane.f32.xlu0 %v2941
        %v2943 = vpop.xlane.xlu0 %2942
        %v2944 = vsub.f32 %v2943, %v2938
        %v2945 = vmul.f32 %v2944, %v1746
        %v2946 = vmax.f32 %v2945, 0.0
        %v2947 = vrsqrt.pop %v2946
        %v2948 = vmul.f32 %v2946, %v2947
        %vm2949 = vcmp.eq.f32.partialorder %v2946, inf
        %v2950 = vsel %vm2949, %v2946, %v2948
        %vm2951 = vcmp.eq.f32.partialorder %v2946, 0.0
        %v2952 = vand.u32 %v2946, 2147483648
        %v2953 = vsel %vm2951, %v2952, %v2950
        %s2954 = sld [smem:[#allocation3 + $0x3]]
        %v2955 = vstv %s2954
        %v2956 = vmul.f32 %v2953, %v2955
        %v2957 = vmul.f32 %v2956, 1.442695
        %v2958 = vpow.pop %v2957
        %v2959 = vmax.f32 %v2958, 1e-05
        %v2960 = vmin.f32 %v2959, 100000.0
        %v2961 = vmul.f32 %v2854, %v2960
        %v2962 = vsel %vm1739, %v2961, -1e+32
        %v2963 = vsel %vm1768, %v2962, -inf
        %2964 = vmax.xlane.f32.xlu0 %v2963
        %v2965 = vpop.xlane.xlu0 %2964
        %v2966 = vsub.f32 %v2962, %v2965
        %v2967 = vmul.f32 %v2966, 1.442695
        %v2968 = vpow.pop %v2967
        %v2969 = vsel %vm1768, %v2968, 0.0
        %2970 = vadd.xlane.f32.xlu0 %v2969
        %v2971 = vpop.xlane.xlu0 %2970
        %v2972 = vrcp.pop %v2971
        %v2973 = vmul.f32 %v2968, %v2972
        %v2974 = vsel %vm1993, 0.0, %v2973
        %v2975 = vpack.c.bf16 %v2974, %v2974
        %2976 = vrot.lane.b32.xlu0 %v1996, 104
        %v2977 = vpop.permute.xlu0 %2976
        %v2979 = vsel %vm1768, %v2975, 0
        %v2982 = vsel %vm2000, %v2977, 0
        %2984 = vmatprep.subr.bf16.mxu0 0
        %2985 = vmatpush1.bf16.msra.mxu0 %v2982
        %2986 = vmatprep.subr.bf16.mxu0 0
        %2987 = vmatpush1.bf16.msra.mxu0 0
        %2988 = vmatprep.subr.bf16.mxu0 0
        %2989 = vmatpush1.bf16.msra.mxu0 0
        %2990 = vmatprep.subr.bf16.mxu0 0
        %2991 = vmatpush1.bf16.msra.mxu0 0
        %2992 = vmatprep.subr.bf16.mxu0 0
        %2993 = vmatpush1.bf16.msra.mxu0 0
        %2994 = vmatprep.subr.bf16.mxu0 0
        %2995 = vmatpush1.bf16.msra.mxu0 0
        %2996 = vmatprep.subr.bf16.mxu0 0
        %2997 = vmatpush1.bf16.msra.mxu0 0
        %2998 = vmatprep.subr.bf16.mxu0 0
        %2999 = vmatpush1.bf16.msra.mxu0 0
        %3000 = vmatprep.subr.bf16.mxu0 0
        %3001 = vmatpush1.bf16.msra.mxu0 0
        %3002 = vmatprep.subr.bf16.mxu0 0
        %3003 = vmatpush1.bf16.msra.mxu0 0
        %3004 = vmatprep.subr.bf16.mxu0 0
        %3005 = vmatpush1.bf16.msra.mxu0 0
        %3006 = vmatprep.subr.bf16.mxu0 0
        %3007 = vmatpush1.bf16.msra.mxu0 0
        %3008 = vmatprep.subr.bf16.mxu0 0
        %3009 = vmatpush1.bf16.msra.mxu0 0
        %3010 = vmatprep.subr.bf16.mxu0 0
        %3011 = vmatpush1.bf16.msra.mxu0 0
        %3012 = vmatprep.subr.bf16.mxu0 0
        %3013 = vmatpush1.bf16.msra.mxu0 0
        %3014 = vmatprep.subr.bf16.mxu0 0
        %3015 = vmatpush1.bf16.msra.mxu0 0
        %3016 = vmatprep.mubr.bf16.mxu0 0
        %3017 = vmatmul.mubr.bf16.gmra.mrb[0].mxu0 %v2979
        %v3018 = vpop.f32.mrb[0].mxu0
        %v3019 = vadd.f32 0.0, %v3018
        %v3020 = vpop.f32.mrb[0].mxu0
        %v3021 = vpop.f32.mrb[0].mxu0
        %v3022 = vpop.f32.mrb[0].mxu0
        %3023 = vdwg.mxu0
        %v3024 = vmul.f32 %v2974, %v2974
        %v3025 = vpack.c.bf16 %v3024, %v3024
        %3026 = vrot.lane.b32.xlu0 %v2046, 104
        %v3027 = vpop.permute.xlu0 %3026
        %v3029 = vsel %vm1768, %v3025, 0
        %v3032 = vsel %vm2000, %v3027, 0
        %3034 = vmatprep.subr.bf16.mxu0 0
        %3035 = vmatpush1.bf16.msra.mxu0 %v3032
        %3036 = vmatprep.subr.bf16.mxu0 0
        %3037 = vmatpush1.bf16.msra.mxu0 0
        %3038 = vmatprep.subr.bf16.mxu0 0
        %3039 = vmatpush1.bf16.msra.mxu0 0
        %3040 = vmatprep.subr.bf16.mxu0 0
        %3041 = vmatpush1.bf16.msra.mxu0 0
        %3042 = vmatprep.subr.bf16.mxu0 0
        %3043 = vmatpush1.bf16.msra.mxu0 0
        %3044 = vmatprep.subr.bf16.mxu0 0
        %3045 = vmatpush1.bf16.msra.mxu0 0
        %3046 = vmatprep.subr.bf16.mxu0 0
        %3047 = vmatpush1.bf16.msra.mxu0 0
        %3048 = vmatprep.subr.bf16.mxu0 0
        %3049 = vmatpush1.bf16.msra.mxu0 0
        %3050 = vmatprep.subr.bf16.mxu0 0
        %3051 = vmatpush1.bf16.msra.mxu0 0
        %3052 = vmatprep.subr.bf16.mxu0 0
        %3053 = vmatpush1.bf16.msra.mxu0 0
        %3054 = vmatprep.subr.bf16.mxu0 0
        %3055 = vmatpush1.bf16.msra.mxu0 0
        %3056 = vmatprep.subr.bf16.mxu0 0
        %3057 = vmatpush1.bf16.msra.mxu0 0
        %3058 = vmatprep.subr.bf16.mxu0 0
        %3059 = vmatpush1.bf16.msra.mxu0 0
        %3060 = vmatprep.subr.bf16.mxu0 0
        %3061 = vmatpush1.bf16.msra.mxu0 0
        %3062 = vmatprep.subr.bf16.mxu0 0
        %3063 = vmatpush1.bf16.msra.mxu0 0
        %3064 = vmatprep.subr.bf16.mxu0 0
        %3065 = vmatpush1.bf16.msra.mxu0 0
        %3066 = vmatprep.mubr.bf16.mxu0 0
        %3067 = vmatmul.mubr.bf16.gmra.mrb[0].mxu0 %v3029
        %v3068 = vpop.f32.mrb[0].mxu0
        %v3069 = vadd.f32 0.0, %v3068
        %v3070 = vpop.f32.mrb[0].mxu0
        %v3071 = vpop.f32.mrb[0].mxu0
        %v3072 = vpop.f32.mrb[0].mxu0
        %3073 = vdwg.mxu0
        %3075 = vrot.lane.b32.xlu0 %v2364, 8
        %v3076 = vpop.permute.xlu0 %3075
        %3079 = vrot.lane.b32.xlu0 %v2692, 16
        %v3080 = vpop.permute.xlu0 %3079
        %3083 = vrot.lane.b32.xlu0 %v3019, 24
        %v3084 = vpop.permute.xlu0 %3083
        %v3086 = vsel %vm1768, %v2039, %v3076
        %v3087 = vsel %vm1784, %v3086, %v3080
        %vm3088 = vcmask 195584
        %v3089 = vsel %vm3088, %v3087, %v3084
        %3091 = vrot.lane.b32.xlu0 %v2415, 8
        %v3092 = vpop.permute.xlu0 %3091
        %3095 = vrot.lane.b32.xlu0 %v2742, 16
        %v3096 = vpop.permute.xlu0 %3095
        %3099 = vrot.lane.b32.xlu0 %v3069, 24
        %v3100 = vpop.permute.xlu0 %3099
        %v3102 = vsel %vm1768, %v2088, %v3092
        %v3103 = vsel %vm1784, %v3102, %v3096
        %v3104 = vsel %vm3088, %v3103, %v3100
        %v3105 = vld [vmem:[#allocation27] sm:$0x1]
        %v3106 = vld [vmem:[#allocation28] sm:$0x1]
        %v3107 = vld [vmem:[#allocation21] sm:$0xf]
        %v3108 = vld [vmem:[#allocation21 + $0x4] sm:$0xf]
        %v3109 = vld [vmem:[#allocation21 + $0x8] sm:$0xf]
        %v3110 = vld [vmem:[#allocation21 + $0xc] sm:$0xf]
        %v3111 = vpack.c.bf16 %v3089, %v3089
        %v3112 = vld [vmem:[#allocation22] sm:$0x1]
        %v3114 = vlaneseq
        %v3115 = vshrl.u32 %v3114, 7
        %v3116 = vsub.s32 0, %v3115
        %v3117 = vrot.slane %v3112, %v3116
        %v3123 = vunpack.c.l.b16 %v3107
        %v3124 = vunpack.c.l.b16 %v3108
        %v3125 = vunpack.c.l.b16 %v3109
        %v3126 = vunpack.c.l.b16 %v3110
        %v3127 = vpack.c.b16 %v3124, %v3123
        %v3128 = vpack.c.b16 %v3126, %v3125
        %v3132 = vsel %vm1330, %v3111, 0
        %3134 = vmatprep.subr.bf16.mxu0 0
        %3135 = vmatpush1.bf16.msra.mxu0 %v3127
        %3136 = vmatprep.subr.bf16.mxu0 0
        %3137 = vmatpush1.bf16.msra.mxu0 %v3128
        %3138 = vmatprep.subr.bf16.mxu0 0
        %3139 = vmatpush1.bf16.msra.mxu0 0
        %3140 = vmatprep.subr.bf16.mxu0 0
        %3141 = vmatpush1.bf16.msra.mxu0 0
        %3142 = vmatprep.subr.bf16.mxu0 0
        %3143 = vmatpush1.bf16.msra.mxu0 0
        %3144 = vmatprep.subr.bf16.mxu0 0
        %3145 = vmatpush1.bf16.msra.mxu0 0
        %3146 = vmatprep.subr.bf16.mxu0 0
        %3147 = vmatpush1.bf16.msra.mxu0 0
        %3148 = vmatprep.subr.bf16.mxu0 0
        %3149 = vmatpush1.bf16.msra.mxu0 0
        %3150 = vmatprep.subr.bf16.mxu0 0
        %3151 = vmatpush1.bf16.msra.mxu0 0
        %3152 = vmatprep.subr.bf16.mxu0 0
        %3153 = vmatpush1.bf16.msra.mxu0 0
        %3154 = vmatprep.subr.bf16.mxu0 0
        %3155 = vmatpush1.bf16.msra.mxu0 0
        %3156 = vmatprep.subr.bf16.mxu0 0
        %3157 = vmatpush1.bf16.msra.mxu0 0
        %3158 = vmatprep.subr.bf16.mxu0 0
        %3159 = vmatpush1.bf16.msra.mxu0 0
        %3160 = vmatprep.subr.bf16.mxu0 0
        %3161 = vmatpush1.bf16.msra.mxu0 0
        %3162 = vmatprep.subr.bf16.mxu0 0
        %3163 = vmatpush1.bf16.msra.mxu0 0
        %3164 = vmatprep.subr.bf16.mxu0 0
        %3165 = vmatpush1.bf16.msra.mxu0 0
        %3166 = vmatprep.mubr.bf16.mxu0 0
        %3167 = vmatmul.mubr.bf16.gmra.mrb[0].mxu0 %v3132
        %v3168 = vpop.f32.mrb[0].mxu0
        %v3169 = vadd.f32 %v3117, %v3168
        %v3170 = vpop.f32.mrb[0].mxu0
        %v3171 = vpop.f32.mrb[0].mxu0
        %v3172 = vpop.f32.mrb[0].mxu0
        %3173 = vdwg.mxu0
        %v3174 = vld [vmem:[#allocation24] sm:$0xf]
        %v3175 = vld [vmem:[#allocation24 + $0x4] sm:$0xf]
        %v3176 = vld [vmem:[#allocation24 + $0x8] sm:$0xf]
        %v3177 = vld [vmem:[#allocation24 + $0xc] sm:$0xf]
        %v3178 = vpack.c.bf16 %v3104, %v3104
        %v3179 = vld [vmem:[#allocation25] sm:$0x1]
        %v3181 = vlaneseq
        %v3182 = vshrl.u32 %v3181, 7
        %v3183 = vsub.s32 0, %v3182
        %v3184 = vrot.slane %v3179, %v3183
        %v3190 = vunpack.c.l.b16 %v3174
        %v3191 = vunpack.c.l.b16 %v3175
        %v3192 = vunpack.c.l.b16 %v3176
        %v3193 = vunpack.c.l.b16 %v3177
        %v3194 = vpack.c.b16 %v3191, %v3190
        %v3195 = vpack.c.b16 %v3193, %v3192
        %v3199 = vsel %vm1330, %v3178, 0
        %3201 = vmatprep.subr.bf16.mxu0 0
        %3202 = vmatpush1.bf16.msra.mxu0 %v3194
        %3203 = vmatprep.subr.bf16.mxu0 0
        %3204 = vmatpush1.bf16.msra.mxu0 %v3195
        %3205 = vmatprep.subr.bf16.mxu0 0
        %3206 = vmatpush1.bf16.msra.mxu0 0
        %3207 = vmatprep.subr.bf16.mxu0 0
        %3208 = vmatpush1.bf16.msra.mxu0 0
        %3209 = vmatprep.subr.bf16.mxu0 0
        %3210 = vmatpush1.bf16.msra.mxu0 0
        %3211 = vmatprep.subr.bf16.mxu0 0
        %3212 = vmatpush1.bf16.msra.mxu0 0
        %3213 = vmatprep.subr.bf16.mxu0 0
        %3214 = vmatpush1.bf16.msra.mxu0 0
        %3215 = vmatprep.subr.bf16.mxu0 0
        %3216 = vmatpush1.bf16.msra.mxu0 0
        %3217 = vmatprep.subr.bf16.mxu0 0
        %3218 = vmatpush1.bf16.msra.mxu0 0
        %3219 = vmatprep.subr.bf16.mxu0 0
        %3220 = vmatpush1.bf16.msra.mxu0 0
        %3221 = vmatprep.subr.bf16.mxu0 0
        %3222 = vmatpush1.bf16.msra.mxu0 0
        %3223 = vmatprep.subr.bf16.mxu0 0
        %3224 = vmatpush1.bf16.msra.mxu0 0
        %3225 = vmatprep.subr.bf16.mxu0 0
        %3226 = vmatpush1.bf16.msra.mxu0 0
        %3227 = vmatprep.subr.bf16.mxu0 0
        %3228 = vmatpush1.bf16.msra.mxu0 0
        %3229 = vmatprep.subr.bf16.mxu0 0
        %3230 = vmatpush1.bf16.msra.mxu0 0
        %3231 = vmatprep.subr.bf16.mxu0 0
        %3232 = vmatpush1.bf16.msra.mxu0 0
        %3233 = vmatprep.mubr.bf16.mxu0 0
        %3234 = vmatmul.mubr.bf16.gmra.mrb[0].mxu0 %v3199
        %v3235 = vpop.f32.mrb[0].mxu0
        %v3236 = vadd.f32 %v3184, %v3235
        %v3237 = vpop.f32.mrb[0].mxu0
        %v3238 = vpop.f32.mrb[0].mxu0
        %v3239 = vpop.f32.mrb[0].mxu0
        %3240 = vdwg.mxu0
        %v3241 = vadd.f32 %v1300, %v3169
        %v3242 = vsel %vm1330, %v3241, 0.0
        %3243 = vadd.xlane.f32.xlu0 %v3242
        %v3244 = vpop.xlane.xlu0 %3243
        %v3245 = vrcp.pop 32.0
        %v3246 = vmul.f32 %v3244, %v3245
        %v3247 = vsub.f32 %v3241, %v3246
        %v3248 = vmul.f32 %v3247, %v3247
        %v3249 = vsel %vm1330, %v3248, 0.0
        %3250 = vadd.xlane.f32.xlu0 %v3249
        %v3251 = vpop.xlane.xlu0 %3250
        %v3252 = vmul.f32 %v3251, %v3245
        %v3253 = vadd.f32 %v3252, 1e-05
        %v3254 = vrsqrt.pop %v3253
        %v3255 = vmul.f32 %v3247, %v3254
        %v3257 = vlaneseq
        %v3258 = vshrl.u32 %v3257, 7
        %v3259 = vsub.s32 0, %v3258
        %v3260 = vrot.slane %v3105, %v3259
        %v3262 = vmul.f32 %v3255, %v3260
        %v3264 = vlaneseq
        %v3265 = vshrl.u32 %v3264, 7
        %v3266 = vsub.s32 0, %v3265
        %v3267 = vrot.slane %v3106, %v3266
        %v3269 = vadd.f32 %v3262, %v3267
        %v3270 = vadd.f32 %v1301, %v3236
        %vm3271 = vcmp.gt.f32.partialorder %v3270, 0.0
        %v3272 = vmul.f32 %v3270, 1.442695
        %v3273 = vpow.pop %v3272
        %v3274 = vsub.f32 %v3273, 1.0
        %v3275 = vsel %vm3271, %v3270, %v3274
        %v3276 = vadd.f32 %v3275, 1.0
        %v3277 = vsel %vm1330, %v3276, 0.0
        %3278 = vadd.xlane.f32.xlu0 %v3277
        %v3279 = vpop.xlane.xlu0 %3278
        %v3280 = vmul.f32 %v3279, %v3245
        %v3281 = vsub.f32 %v3276, %v3280
        %v3282 = vmul.f32 %v3281, %v3281
        %v3283 = vsel %vm1330, %v3282, 0.0
        %3284 = vadd.xlane.f32.xlu0 %v3283
        %v3285 = vpop.xlane.xlu0 %3284
        %v3286 = vmul.f32 %v3285, %v3245
        %v3287 = vadd.f32 %v3286, 1e-05
        %v3288 = vrsqrt.pop %v3287
        %v3289 = vmul.f32 %v3281, %v3288
        %v3290 = vmul.f32 %v3289, %v3260
        %v3291 = vadd.f32 %v3290, %v3267
        %v3292 = vld [vmem:[#allocation42] sm:$0x1]
        %v3293 = vld [vmem:[#allocation43] sm:$0x1]
        %v3294 = vld [vmem:[#allocation30] sm:$0xf]
        %v3295 = vld [vmem:[#allocation30 + $0x4] sm:$0xf]
        %v3296 = vld [vmem:[#allocation30 + $0x8] sm:$0xf]
        %v3297 = vld [vmem:[#allocation30 + $0xc] sm:$0xf]
        %v3298 = vpack.c.bf16 %v3269, %v3269
        %v3299 = vld [vmem:[#allocation31] sm:$0x1]
        %v3301 = vlaneseq
        %v3302 = vshrl.u32 %v3301, 7
        %v3303 = vsub.s32 0, %v3302
        %v3304 = vrot.slane %v3299, %v3303
        %v3310 = vunpack.c.l.b16 %v3294
        %v3311 = vunpack.c.l.b16 %v3295
        %v3312 = vunpack.c.l.b16 %v3296
        %v3313 = vunpack.c.l.b16 %v3297
        %v3314 = vpack.c.b16 %v3311, %v3310
        %v3315 = vpack.c.b16 %v3313, %v3312
        %v3319 = vsel %vm1330, %v3298, 0
        %3321 = vmatprep.subr.bf16.mxu0 0
        %3322 = vmatpush1.bf16.msra.mxu0 %v3314
        %3323 = vmatprep.subr.bf16.mxu0 0
        %3324 = vmatpush1.bf16.msra.mxu0 %v3315
        %3325 = vmatprep.subr.bf16.mxu0 0
        %3326 = vmatpush1.bf16.msra.mxu0 0
        %3327 = vmatprep.subr.bf16.mxu0 0
        %3328 = vmatpush1.bf16.msra.mxu0 0
        %3329 = vmatprep.subr.bf16.mxu0 0
        %3330 = vmatpush1.bf16.msra.mxu0 0
        %3331 = vmatprep.subr.bf16.mxu0 0
        %3332 = vmatpush1.bf16.msra.mxu0 0
        %3333 = vmatprep.subr.bf16.mxu0 0
        %3334 = vmatpush1.bf16.msra.mxu0 0
        %3335 = vmatprep.subr.bf16.mxu0 0
        %3336 = vmatpush1.bf16.msra.mxu0 0
        %3337 = vmatprep.subr.bf16.mxu0 0
        %3338 = vmatpush1.bf16.msra.mxu0 0
        %3339 = vmatprep.subr.bf16.mxu0 0
        %3340 = vmatpush1.bf16.msra.mxu0 0
        %3341 = vmatprep.subr.bf16.mxu0 0
        %3342 = vmatpush1.bf16.msra.mxu0 0
        %3343 = vmatprep.subr.bf16.mxu0 0
        %3344 = vmatpush1.bf16.msra.mxu0 0
        %3345 = vmatprep.subr.bf16.mxu0 0
        %3346 = vmatpush1.bf16.msra.mxu0 0
        %3347 = vmatprep.subr.bf16.mxu0 0
        %3348 = vmatpush1.bf16.msra.mxu0 0
        %3349 = vmatprep.subr.bf16.mxu0 0
        %3350 = vmatpush1.bf16.msra.mxu0 0
        %3351 = vmatprep.subr.bf16.mxu0 0
        %3352 = vmatpush1.bf16.msra.mxu0 0
        %3353 = vmatprep.mubr.bf16.mxu0 0
        %3354 = vmatmul.mubr.bf16.gmra.mrb[0].mxu0 %v3319
        %v3355 = vpop.f32.mrb[0].mxu0
        %v3356 = vadd.f32 %v3304, %v3355
        %v3357 = vpop.f32.mrb[0].mxu0
        %v3358 = vpop.f32.mrb[0].mxu0
        %v3359 = vpop.f32.mrb[0].mxu0
        %3360 = vdwg.mxu0
        %v3361 = vmax.f32 %v3356, 0.0
        %v3362 = vld [vmem:[#allocation33] sm:$0xf]
        %v3363 = vld [vmem:[#allocation33 + $0x4] sm:$0xf]
        %v3364 = vld [vmem:[#allocation33 + $0x8] sm:$0xf]
        %v3365 = vld [vmem:[#allocation33 + $0xc] sm:$0xf]
        %v3366 = vld [vmem:[#allocation33 + $0x10] sm:$0xf]
        %v3367 = vld [vmem:[#allocation33 + $0x14] sm:$0xf]
        %v3368 = vld [vmem:[#allocation33 + $0x18] sm:$0xf]
        %v3369 = vld [vmem:[#allocation33 + $0x1c] sm:$0xf]
        %v3370 = vpack.c.bf16 %v3361, %v3361
        %v3371 = vld [vmem:[#allocation34] sm:$0x1]
        %v3373 = vlaneseq
        %v3374 = vshrl.u32 %v3373, 7
        %v3375 = vsub.s32 0, %v3374
        %v3376 = vrot.slane %v3371, %v3375
        %v3386 = vunpack.c.l.b16 %v3362
        %v3387 = vunpack.c.l.b16 %v3363
        %v3388 = vunpack.c.l.b16 %v3364
        %v3389 = vunpack.c.l.b16 %v3365
        %v3390 = vunpack.c.l.b16 %v3366
        %v3391 = vunpack.c.l.b16 %v3367
        %v3392 = vunpack.c.l.b16 %v3368
        %v3393 = vunpack.c.l.b16 %v3369
        %v3394 = vpack.c.b16 %v3387, %v3386
        %v3395 = vpack.c.b16 %v3389, %v3388
        %v3396 = vpack.c.b16 %v3391, %v3390
        %v3397 = vpack.c.b16 %v3393, %v3392
        %vm3402 = vcmask 523264
        %v3404 = vsel %vm3402, %v3370, 0
        %3406 = vmatprep.subr.bf16.mxu0 0
        %3407 = vmatpush1.bf16.msra.mxu0 %v3394
        %3408 = vmatprep.subr.bf16.mxu0 0
        %3409 = vmatpush1.bf16.msra.mxu0 %v3395
        %3410 = vmatprep.subr.bf16.mxu0 0
        %3411 = vmatpush1.bf16.msra.mxu0 %v3396
        %3412 = vmatprep.subr.bf16.mxu0 0
        %3413 = vmatpush1.bf16.msra.mxu0 %v3397
        %3414 = vmatprep.subr.bf16.mxu0 0
        %3415 = vmatpush1.bf16.msra.mxu0 0
        %3416 = vmatprep.subr.bf16.mxu0 0
        %3417 = vmatpush1.bf16.msra.mxu0 0
        %3418 = vmatprep.subr.bf16.mxu0 0
        %3419 = vmatpush1.bf16.msra.mxu0 0
        %3420 = vmatprep.subr.bf16.mxu0 0
        %3421 = vmatpush1.bf16.msra.mxu0 0
        %3422 = vmatprep.subr.bf16.mxu0 0
        %3423 = vmatpush1.bf16.msra.mxu0 0
        %3424 = vmatprep.subr.bf16.mxu0 0
        %3425 = vmatpush1.bf16.msra.mxu0 0
        %3426 = vmatprep.subr.bf16.mxu0 0
        %3427 = vmatpush1.bf16.msra.mxu0 0
        %3428 = vmatprep.subr.bf16.mxu0 0
        %3429 = vmatpush1.bf16.msra.mxu0 0
        %3430 = vmatprep.subr.bf16.mxu0 0
        %3431 = vmatpush1.bf16.msra.mxu0 0
        %3432 = vmatprep.subr.bf16.mxu0 0
        %3433 = vmatpush1.bf16.msra.mxu0 0
        %3434 = vmatprep.subr.bf16.mxu0 0
        %3435 = vmatpush1.bf16.msra.mxu0 0
        %3436 = vmatprep.subr.bf16.mxu0 0
        %3437 = vmatpush1.bf16.msra.mxu0 0
        %3438 = vmatprep.mubr.bf16.mxu0 0
        %3439 = vmatmul.mubr.bf16.gmra.mrb[0].mxu0 %v3404
        %v3440 = vpop.f32.mrb[0].mxu0
        %v3441 = vadd.f32 %v3376, %v3440
        %v3442 = vpop.f32.mrb[0].mxu0
        %v3443 = vpop.f32.mrb[0].mxu0
        %v3444 = vpop.f32.mrb[0].mxu0
        %3445 = vdwg.mxu0
        %v3446 = vld [vmem:[#allocation36] sm:$0xf]
        %v3447 = vld [vmem:[#allocation36 + $0x4] sm:$0xf]
        %v3448 = vld [vmem:[#allocation36 + $0x8] sm:$0xf]
        %v3449 = vld [vmem:[#allocation36 + $0xc] sm:$0xf]
        %v3450 = vpack.c.bf16 %v3291, %v3291
        %v3451 = vld [vmem:[#allocation37] sm:$0x1]
        %v3453 = vlaneseq
        %v3454 = vshrl.u32 %v3453, 7
        %v3455 = vsub.s32 0, %v3454
        %v3456 = vrot.slane %v3451, %v3455
        %v3462 = vunpack.c.l.b16 %v3446
        %v3463 = vunpack.c.l.b16 %v3447
        %v3464 = vunpack.c.l.b16 %v3448
        %v3465 = vunpack.c.l.b16 %v3449
        %v3466 = vpack.c.b16 %v3463, %v3462
        %v3467 = vpack.c.b16 %v3465, %v3464
        %v3471 = vsel %vm1330, %v3450, 0
        %3473 = vmatprep.subr.bf16.mxu0 0
        %3474 = vmatpush1.bf16.msra.mxu0 %v3466
        %3475 = vmatprep.subr.bf16.mxu0 0
        %3476 = vmatpush1.bf16.msra.mxu0 %v3467
        %3477 = vmatprep.subr.bf16.mxu0 0
        %3478 = vmatpush1.bf16.msra.mxu0 0
        %3479 = vmatprep.subr.bf16.mxu0 0
        %3480 = vmatpush1.bf16.msra.mxu0 0
        %3481 = vmatprep.subr.bf16.mxu0 0
        %3482 = vmatpush1.bf16.msra.mxu0 0
        %3483 = vmatprep.subr.bf16.mxu0 0
        %3484 = vmatpush1.bf16.msra.mxu0 0
        %3485 = vmatprep.subr.bf16.mxu0 0
        %3486 = vmatpush1.bf16.msra.mxu0 0
        %3487 = vmatprep.subr.bf16.mxu0 0
        %3488 = vmatpush1.bf16.msra.mxu0 0
        %3489 = vmatprep.subr.bf16.mxu0 0
        %3490 = vmatpush1.bf16.msra.mxu0 0
        %3491 = vmatprep.subr.bf16.mxu0 0
        %3492 = vmatpush1.bf16.msra.mxu0 0
        %3493 = vmatprep.subr.bf16.mxu0 0
        %3494 = vmatpush1.bf16.msra.mxu0 0
        %3495 = vmatprep.subr.bf16.mxu0 0
        %3496 = vmatpush1.bf16.msra.mxu0 0
        %3497 = vmatprep.subr.bf16.mxu0 0
        %3498 = vmatpush1.bf16.msra.mxu0 0
        %3499 = vmatprep.subr.bf16.mxu0 0
        %3500 = vmatpush1.bf16.msra.mxu0 0
        %3501 = vmatprep.subr.bf16.mxu0 0
        %3502 = vmatpush1.bf16.msra.mxu0 0
        %3503 = vmatprep.subr.bf16.mxu0 0
        %3504 = vmatpush1.bf16.msra.mxu0 0
        %3505 = vmatprep.mubr.bf16.mxu0 0
        %3506 = vmatmul.mubr.bf16.gmra.mrb[0].mxu0 %v3471
        %v3507 = vpop.f32.mrb[0].mxu0
        %v3508 = vadd.f32 %v3456, %v3507
        %v3509 = vpop.f32.mrb[0].mxu0
        %v3510 = vpop.f32.mrb[0].mxu0
        %v3511 = vpop.f32.mrb[0].mxu0
        %3512 = vdwg.mxu0
        %v3513 = vmax.f32 %v3508, 0.0
        %v3514 = vld [vmem:[#allocation39] sm:$0xf]
        %v3515 = vld [vmem:[#allocation39 + $0x4] sm:$0xf]
        %v3516 = vld [vmem:[#allocation39 + $0x8] sm:$0xf]
        %v3517 = vld [vmem:[#allocation39 + $0xc] sm:$0xf]
        %v3518 = vld [vmem:[#allocation39 + $0x10] sm:$0xf]
        %v3519 = vld [vmem:[#allocation39 + $0x14] sm:$0xf]
        %v3520 = vld [vmem:[#allocation39 + $0x18] sm:$0xf]
        %v3521 = vld [vmem:[#allocation39 + $0x1c] sm:$0xf]
        %v3522 = vpack.c.bf16 %v3513, %v3513
        %v3523 = vld [vmem:[#allocation40] sm:$0x1]
        %v3525 = vlaneseq
        %v3526 = vshrl.u32 %v3525, 7
        %v3527 = vsub.s32 0, %v3526
        %v3528 = vrot.slane %v3523, %v3527
        %v3538 = vunpack.c.l.b16 %v3514
        %v3539 = vunpack.c.l.b16 %v3515
        %v3540 = vunpack.c.l.b16 %v3516
        %v3541 = vunpack.c.l.b16 %v3517
        %v3542 = vunpack.c.l.b16 %v3518
        %v3543 = vunpack.c.l.b16 %v3519
        %v3544 = vunpack.c.l.b16 %v3520
        %v3545 = vunpack.c.l.b16 %v3521
        %v3546 = vpack.c.b16 %v3539, %v3538
        %v3547 = vpack.c.b16 %v3541, %v3540
        %v3548 = vpack.c.b16 %v3543, %v3542
        %v3549 = vpack.c.b16 %v3545, %v3544
        %v3555 = vsel %vm3402, %v3522, 0
        %3557 = vmatprep.subr.bf16.mxu0 0
        %3558 = vmatpush1.bf16.msra.mxu0 %v3546
        %3559 = vmatprep.subr.bf16.mxu0 0
        %3560 = vmatpush1.bf16.msra.mxu0 %v3547
        %3561 = vmatprep.subr.bf16.mxu0 0
        %3562 = vmatpush1.bf16.msra.mxu0 %v3548
        %3563 = vmatprep.subr.bf16.mxu0 0
        %3564 = vmatpush1.bf16.msra.mxu0 %v3549
        %3565 = vmatprep.subr.bf16.mxu0 0
        %3566 = vmatpush1.bf16.msra.mxu0 0
        %3567 = vmatprep.subr.bf16.mxu0 0
        %3568 = vmatpush1.bf16.msra.mxu0 0
        %3569 = vmatprep.subr.bf16.mxu0 0
        %3570 = vmatpush1.bf16.msra.mxu0 0
        %3571 = vmatprep.subr.bf16.mxu0 0
        %3572 = vmatpush1.bf16.msra.mxu0 0
        %3573 = vmatprep.subr.bf16.mxu0 0
        %3574 = vmatpush1.bf16.msra.mxu0 0
        %3575 = vmatprep.subr.bf16.mxu0 0
        %3576 = vmatpush1.bf16.msra.mxu0 0
        %3577 = vmatprep.subr.bf16.mxu0 0
        %3578 = vmatpush1.bf16.msra.mxu0 0
        %3579 = vmatprep.subr.bf16.mxu0 0
        %3580 = vmatpush1.bf16.msra.mxu0 0
        %3581 = vmatprep.subr.bf16.mxu0 0
        %3582 = vmatpush1.bf16.msra.mxu0 0
        %3583 = vmatprep.subr.bf16.mxu0 0
        %3584 = vmatpush1.bf16.msra.mxu0 0
        %3585 = vmatprep.subr.bf16.mxu0 0
        %3586 = vmatpush1.bf16.msra.mxu0 0
        %3587 = vmatprep.subr.bf16.mxu0 0
        %3588 = vmatpush1.bf16.msra.mxu0 0
        %3589 = vmatprep.mubr.bf16.mxu0 0
        %3590 = vmatmul.mubr.bf16.gmra.mrb[0].mxu0 %v3555
        %v3591 = vpop.f32.mrb[0].mxu0
        %v3592 = vadd.f32 %v3528, %v3591
        %v3593 = vpop.f32.mrb[0].mxu0
        %v3594 = vpop.f32.mrb[0].mxu0
        %v3595 = vpop.f32.mrb[0].mxu0
        %3596 = vdwg.mxu0
        %v3597 = vsel %vm1330, %v3441, 0.0
        %3598 = vadd.xlane.f32.xlu0 %v3597
        %v3599 = vpop.xlane.xlu0 %3598
        %v3600 = vmul.f32 %v3599, %v3245
        %v3601 = vsub.f32 %v3441, %v3600
        %v3602 = vmul.f32 %v3601, %v3601
        %v3603 = vsel %vm1330, %v3602, 0.0
        %3604 = vadd.xlane.f32.xlu0 %v3603
        %v3605 = vpop.xlane.xlu0 %3604
        %v3606 = vmul.f32 %v3605, %v3245
        %v3607 = vadd.f32 %v3606, 1e-05
        %v3608 = vrsqrt.pop %v3607
        %v3609 = vmul.f32 %v3601, %v3608
        %v3611 = vlaneseq
        %v3612 = vshrl.u32 %v3611, 7
        %v3613 = vsub.s32 0, %v3612
        %v3614 = vrot.slane %v3292, %v3613
        %v3616 = vmul.f32 %v3609, %v3614
        %v3618 = vlaneseq
        %v3619 = vshrl.u32 %v3618, 7
        %v3620 = vsub.s32 0, %v3619
        %v3621 = vrot.slane %v3293, %v3620
        %v3623 = vadd.f32 %v3616, %v3621
        %vm3624 = vcmp.gt.f32.partialorder %v3592, 0.0
        %v3625 = vmul.f32 %v3592, 1.442695
        %v3626 = vpow.pop %v3625
        %v3627 = vsub.f32 %v3626, 1.0
        %v3628 = vsel %vm3624, %v3592, %v3627
        %v3629 = vadd.f32 %v3628, 1.0
        %v3630 = vsel %vm1330, %v3629, 0.0
        %3631 = vadd.xlane.f32.xlu0 %v3630
        %v3632 = vpop.xlane.xlu0 %3631
        %v3633 = vmul.f32 %v3632, %v3245
        %v3634 = vsub.f32 %v3629, %v3633
        %v3635 = vmul.f32 %v3634, %v3634
        %v3636 = vsel %vm1330, %v3635, 0.0
        %3637 = vadd.xlane.f32.xlu0 %v3636
        %v3638 = vpop.xlane.xlu0 %3637
        %v3639 = vmul.f32 %v3638, %v3245
        %v3640 = vadd.f32 %v3639, 1e-05
        %v3641 = vrsqrt.pop %v3640
        %v3642 = vmul.f32 %v3634, %v3641
        %v3643 = vmul.f32 %v3642, %v3614
        %v3644 = vadd.f32 %v3643, %v3621
        %3645 = vst.msk [vmem:[%s1291] sm:$0xff] %vm1330, %v3623
        %3646 = vst.msk [vmem:[%s1298] sm:$0xff] %vm1330, %v3644
        %s3647 = sand.u32 %s656, 1
        %s3648 = scalar_lea.sflag [#allocation6], %s3647
        %s3649 = sand.u32 %s656, 1
        %s3650 = smul.addr %s3649, 8
        %s3651 = scalar_lea.vmem [#allocation45], %s3650
        %s3652 = sand.u32 %s682, 1
        %s3653 = scalar_lea.sflag [#allocation47], %s3652
        %s3654 = sand.u32 %s682, 1
        %s3655 = smul.addr %s3654, 8
        %s3656 = scalar_lea.vmem [#allocation46], %s3655
        // Predicated region
        $region229: #{tpu_custom_call.1} parent=123 // pred_check
          %p3657 = pneg %p666
        $region230: #{tpu_custom_call.1} parent=123 // pred_check_branch
          %3659 = sbr.rel (%p3657) target = $region232
        $region231: #{tpu_custom_call.1} parent=123 // pred_region
          %s3661 = ssub.s32 128, 128
          %3662 = vsyncadd %s3648, %s3661
          %s3663 = smul.addr %s72, 128
          %s3664 = scalar_lea.hbm %s27, %s3663
          %s3666 = sshll.u32 %s3651, 4
          %s3667 = int_to_ptr.vmem [resolvable:$true] %s3666
          %3669 = dma.vmem_to_hbm [thread:$0]  %s3667, 128, %s3664, %s3648
        $region232: #{tpu_custom_call.1} parent=123 // pred_fallthru
          _
        // Predicated region
        $region233: #{tpu_custom_call.1} parent=123 // pred_check
          %p3670 = pneg %p692
        $region234: #{tpu_custom_call.1} parent=123 // pred_check_branch
          %3672 = sbr.rel (%p3670) target = $region236
        $region235: #{tpu_custom_call.1} parent=123 // pred_region
          %s3674 = ssub.s32 128, 128
          %3675 = vsyncadd %s3653, %s3674
          %s3676 = smul.addr %s72, 128
          %s3677 = scalar_lea.hbm %s28, %s3676
          %s3679 = sshll.u32 %s3656, 4
          %s3680 = int_to_ptr.vmem [resolvable:$true] %s3679
          %3682 = dma.vmem_to_hbm [thread:$0]  %s3680, 128, %s3677, %s3653
        $region236: #{tpu_custom_call.1} parent=123 // pred_fallthru
          _
      $region124: #{tpu_custom_call.1} parent=5 // pred_fallthru
        _
      %p3683 = scmp.le.s32.totalorder 2, %s67
      // Predicated region
      $region237: #{tpu_custom_call.1} parent=5 // pred_check
        %p3684 = pneg %p3683
      $region238: #{tpu_custom_call.1} parent=5 // pred_check_branch
        %3686 = sbr.rel (%p3684) target = $region240
      $region239: #{tpu_custom_call.1} parent=5 // pred_region
        %s3687 = ssub.s32 %s67, 2
        // Predicated region
        $region241: #{tpu_custom_call.1} parent=239 // pred_check
          %p3688 = pneg %p672
        $region242: #{tpu_custom_call.1} parent=239 // pred_check_branch
          %3690 = sbr.rel (%p3688) target = $region244
        $region243: #{tpu_custom_call.1} parent=239 // pred_region
          %s3691 = sand.u32 %s657, 1
          %s3692 = scalar_lea.sflag [#allocation6], %s3691
          %s3693 = sand.u32 %s657, 1
          %s3694 = smul.addr %s3693, 8
          %s3695 = scalar_lea.vmem [#allocation45], %s3694
          %3696 = dma.done %s3692, 128
        $region244: #{tpu_custom_call.1} parent=239 // pred_fallthru
          _
        // Predicated region
        $region245: #{tpu_custom_call.1} parent=239 // pred_check
          %p3697 = pneg %p698
        $region246: #{tpu_custom_call.1} parent=239 // pred_check_branch
          %3699 = sbr.rel (%p3697) target = $region248
        $region247: #{tpu_custom_call.1} parent=239 // pred_region
          %s3700 = sand.u32 %s683, 1
          %s3701 = scalar_lea.sflag [#allocation47], %s3700
          %s3702 = sand.u32 %s683, 1
          %s3703 = smul.addr %s3702, 8
          %s3704 = scalar_lea.vmem [#allocation46], %s3703
          %3705 = dma.done %s3701, 128
        $region248: #{tpu_custom_call.1} parent=239 // pred_fallthru
          _
      $region240: #{tpu_custom_call.1} parent=5 // pred_fallthru
        _
    $region6: #{tpu_custom_call.1} parent=1 // loop_footer
      %s71 = sadd.s32 1, %s67
    $region7: #{tpu_custom_call.1} parent=1 // loop_footer_branch
      %66 = sbr.rel target = $region3
    $region8: #{tpu_custom_call.1} parent=1 // loop_exit
      _
    %3706 = vsyncpa [#allocation5], 1
    %s3707 = scalar_lea.sflag [#allocation5], 1
    %3708 = vsyncpa %s3707, 1
    %3709 = vsyncpa [#allocation8], 1
    %s3710 = scalar_lea.sflag [#allocation8], 1
    %3711 = vsyncpa %s3710, 1
    %3712 = vsyncpa [#allocation11], 1
    %s3713 = scalar_lea.sflag [#allocation11], 1
    %3714 = vsyncpa %s3713, 1
    %3715 = vsyncpa [#allocation14], 1
    %s3716 = scalar_lea.sflag [#allocation14], 1
    %3717 = vsyncpa %s3716, 1
    %3718 = vsyncpa [#allocation17], 1
    %3719 = vsyncpa [#allocation20], 1
    %3720 = vsyncpa [#allocation23], 1
    %3721 = vsyncpa [#allocation26], 1
    %3722 = vsyncpa [#allocation29], 1
    %3723 = vsyncpa [#allocation32], 1
    %3724 = vsyncpa [#allocation35], 1
    %3725 = vsyncpa [#allocation38], 1
    %3726 = vsyncpa [#allocation41], 1
    %3727 = vsyncpa [#allocation44], 1
    %3728 = vsyncpa [#allocation6], 1
    %s3729 = scalar_lea.sflag [#allocation6], 1
    %3730 = vsyncpa %s3729, 1
    %3731 = vsyncpa [#allocation47], 1
    %s3732 = scalar_lea.sflag [#allocation47], 1
    %3733 = vsyncpa %s3732, 1

</llo_original>
